<compile_context>
chip_gen: v7x
topology: tpu7x:2x2x1
jax: 0.10.0
libtpu: 0.0.40
codegen_flags: <defaults>
</compile_context>

<pallas_src>
import functools

import jax
import jax.numpy as jnp
from jax.experimental import pallas as pl
from jax.experimental.pallas import tpu as pltpu

BN_EPS = 1e-5
LANE = 128  # lane width: output-channel dims are padded to multiples of this


# ---------------------------------------------------------------------------
# Pallas kernels (hot path)
# ---------------------------------------------------------------------------
def _conv3x3_taps(x_ref, w_ref, *, stride, th, Wo, Ci, fuse_k):
    """Fused-im2col 3x3 conv on the resident polyphase input block.

    fuse_k=True : taps concatenated along lanes -> ONE (Mt, 9*Ci)@(9*Ci, Co)
                  MXU matmul (K accumulation stays inside the MXU).
    fuse_k=False: 9 per-tap (Mt, Ci)@(Ci, Co) matmuls with f32 accumulation
                  (used when Ci is not lane-aligned, e.g. tiny stems).
    """
    s = stride
    nb = x_ref.shape[0]
    mt = nb * th * Wo
    row0 = pl.program_id(1) * th
    if th % 8 == 0:
        row0 = pl.multiple_of(row0, 8)

    taps = []
    for dh in range(3):
        for dw in range(3):
            p, a = dh % s, dh // s
            q, b = dw % s, dw // s
            patch = x_ref[:, p * s + q, pl.ds(row0 + a, th), pl.ds(b, Wo), :]
            taps.append(patch.reshape(mt, Ci))

    if fuse_k:
        lhs = jnp.concatenate(taps, axis=-1)          # (Mt, 9*Ci), lane-aligned
        return jnp.dot(lhs, w_ref[...], preferred_element_type=jnp.float32)

    acc = None
    for t, tap in enumerate(taps):
        part = jnp.dot(tap, w_ref[t], preferred_element_type=jnp.float32)
        acc = part if acc is None else acc + part
    return acc


def _conv_bn_kernel(x_ref, w_ref, s_ref, b_ref, o_ref,
                    *, stride, th, Wo, Ci, fuse_k, relu):
    # conv (fused im2col) + folded BN affine + optional ReLU
    acc = _conv3x3_taps(x_ref, w_ref, stride=stride, th=th, Wo=Wo, Ci=Ci,
                        fuse_k=fuse_k)
    acc = acc * s_ref[...] + b_ref[...]
    if relu:
        acc = jnp.maximum(acc, 0.0)
    o_ref[...] = acc.reshape(o_ref.shape).astype(o_ref.dtype)


def _conv_bn_add_kernel(x_ref, w_ref, s_ref, b_ref, r_ref, o_ref,
                        *, stride, th, Wo, Ci, fuse_k):
    # conv2 + bn2 + identity residual + ReLU, fully fused
    acc = _conv3x3_taps(x_ref, w_ref, stride=stride, th=th, Wo=Wo, Ci=Ci,
                        fuse_k=fuse_k)
    acc = acc * s_ref[...] + b_ref[...]
    acc = acc.reshape(o_ref.shape) + r_ref[...].astype(jnp.float32)
    o_ref[...] = jnp.maximum(acc, 0.0).astype(o_ref.dtype)


def _conv_bn_proj_add_kernel(x_ref, w_ref, s_ref, b_ref,
                             xsc_ref, wsc_ref, ssc_ref, bsc_ref, o_ref,
                             *, stride, th, Wo, Ci, fuse_k, sc_off, Csc):
    # conv2 + bn2 + (1x1/stride shortcut conv + BN) + add + ReLU, fully fused.
    # The shortcut samples are read straight from the original input's
    # polyphase component selected by the BlockSpec (no strided-slice copy).
    acc = _conv3x3_taps(x_ref, w_ref, stride=stride, th=th, Wo=Wo, Ci=Ci,
                        fuse_k=fuse_k)
    acc = acc * s_ref[...] + b_ref[...]

    nb = x_ref.shape[0]
    row0 = pl.program_id(1) * th
    if th % 8 == 0:
        row0 = pl.multiple_of(row0, 8)
    xsc = xsc_ref[:, 0, pl.ds(row0 + sc_off, th), pl.ds(sc_off, Wo), :]
    res = jnp.dot(xsc.reshape(nb * th * Wo, Csc), wsc_ref[...],
                  preferred_element_type=jnp.float32)
    acc = acc + (res * ssc_ref[...] + bsc_ref[...])
    o_ref[...] = jnp.maximum(acc, 0.0).reshape(o_ref.shape).astype(o_ref.dtype)


# ---------------------------------------------------------------------------
# Tiling / budget helpers
# ---------------------------------------------------------------------------
@functools.lru_cache(maxsize=1)
def _tpu_budget():
    """(vmem_limit_bytes, target_rows) derived from the local chip's VMEM."""
    cap = 64 * 1024 * 1024
    try:
        cap = int(getattr(pltpu.get_tpu_info(), "vmem_capacity_bytes", cap))
    except Exception:  # pragma: no cover - query can fail on exotic setups
        pass
    vmem_limit = min(cap * 3 // 4, 100 * 1024 * 1024)
    target_rows = 2048 if cap >= 96 * 1024 * 1024 else 1024
    return vmem_limit, target_rows


def _pick_tiles(N, Ho, Wo, target_rows):
    """Return (NB images per tile, th output rows per tile, HB row blocks).

    Small spatial stages batch whole images per grid step (Mt = NB*Ho*Wo,
    full-extent block -> always legal).  Larger stages tile rows within one
    image with th*Wo forced to a multiple of 8 (unmasked sublane stores)."""
    img_rows = Ho * Wo
    if img_rows <= target_rows:
        nb = max(d for d in range(1, N + 1)
                 if N % d == 0 and d * img_rows <= target_rows)
        return nb, Ho, 1
    cand = [d for d in range(1, Ho + 1) if Ho % d == 0 and (d * Wo) % 8 == 0]
    fit = [d for d in cand if d * Wo <= target_rows]
    if fit:
        th = max(fit)
        return 1, th, Ho // th
    if cand:                       # no aligned tile fits: take the smallest
        th = min(cand)
        return 1, th, Ho // th
    return 1, Ho, 1                # unalignable: whole image (full-extent block)


# ---------------------------------------------------------------------------
# pallas_call wrapper
# ---------------------------------------------------------------------------
def _fused_conv_bn(x_poly, w9, scale, bias, *, stride, N, Ho, Wo, relu=True,
                   residual=None, sc_poly=None, sc_stride=None,
                   sc_w=None, sc_scale=None, sc_bias=None):
    """Fused 3x3 conv + BN (+ identity / projection shortcut) (+ ReLU).

    x_poly : (N, stride^2, comp_h, comp_w, Ci)   bf16 polyphase input
    w9     : (9, Ci, Co) bf16                    scale/bias : (1, Co) f32
    residual : (N, Ho*Wo, Co) bf16 identity residual (optional)
    sc_poly  : original input's polyphase tensor (projection shortcut source)
    Returns (N, Ho*Wo, Co) bf16.
    """
    _, SS, comp_h, comp_w, Ci = x_poly.shape
    Co = w9.shape[-1]
    fuse_k = (Ci % LANE == 0)
    w_in = w9.reshape(9 * Ci, Co) if fuse_k else w9

    vmem_limit, target_rows = _tpu_budget()
    NB, th, HB = _pick_tiles(N, Ho, Wo, target_rows)
    TW = th * Wo

    # Input block: NB whole (polyphase) images, constant index along the
    # row-block axis -> stays resident, DMA'd once per image group.
    x_spec = pl.BlockSpec((NB, SS, comp_h, comp_w, Ci),
                          lambda g, hb: (g, 0, 0, 0, 0))
    w_spec = pl.BlockSpec(w_in.shape, lambda g, hb: (0,) * w_in.ndim)
    vec_spec = pl.BlockSpec((1, Co), lambda g, hb: (0, 0))
    out_spec = pl.BlockSpec((NB, TW, Co), lambda g, hb: (g, hb, 0))

    args = [x_poly, w_in, scale, bias]
    in_specs = [x_spec, w_spec, vec_spec, vec_spec]
    common = dict(stride=stride, th=th, Wo=Wo, Ci=Ci, fuse_k=fuse_k)

    if residual is None and sc_poly is None:
        kernel = functools.partial(_conv_bn_kernel, relu=relu, **common)
    elif sc_poly is None:
        args.append(residual)
        in_specs.append(pl.BlockSpec((NB, TW, residual.shape[-1]),
                                     lambda g, hb: (g, hb, 0)))
        kernel = functools.partial(_conv_bn_add_kernel, **common)
    else:
        _, _, chx, cwx, Csc = sc_poly.shape
        s = sc_stride
        comp_idx = (1 % s) * s + (1 % s)   # polyphase component holding x[s*i, s*j]
        sc_off = 1 // s                    # row/col offset inside that component
        args += [sc_poly, sc_w, sc_scale, sc_bias]
        in_specs += [
            pl.BlockSpec((NB, 1, chx, cwx, Csc),
                         lambda g, hb: (g, comp_idx, 0, 0, 0)),
            pl.BlockSpec(sc_w.shape, lambda g, hb: (0, 0)),
            vec_spec, vec_spec]
        kernel = functools.partial(_conv_bn_proj_add_kernel,
                                   sc_off=sc_off, Csc=Csc, **common)

    return pl.pallas_call(
        kernel,
        out_shape=jax.ShapeDtypeStruct((N, Ho * Wo, Co), jnp.bfloat16),
        grid=(N // NB, HB),
        in_specs=in_specs,
        out_specs=out_spec,
        compiler_params=pltpu.CompilerParams(
            dimension_semantics=("parallel", "parallel"),
            vmem_limit_bytes=vmem_limit),
    )(*args)


# ---------------------------------------------------------------------------
# Glue: polyphase rearrangement, BN folding, weight prep (plain JAX)
# ---------------------------------------------------------------------------
def _polyphase(x_nhwc, ksize, stride, padding):
    """Rearrange (N,H,W,C) into stride^2 polyphase components so every conv tap
    (dh, dw) becomes a *contiguous* window of component (dh%s)*s + (dw%s) at
    offset (dh//s, dw//s).  Output: (N, s*s, comp_h, comp_w, C)."""
    N, H, W, C = x_nhwc.shape
    s = stride
    Ho = (H + 2 * padding - ksize) // s + 1
    Wo = (W + 2 * padding - ksize) // s + 1
    comp_h = Ho + (ksize - 1) // s
    comp_w = Wo + (ksize - 1) // s
    pad_b = comp_h * s - H - padding
    pad_r = comp_w * s - W - padding
    xp = jnp.pad(x_nhwc, ((0, 0), (padding, pad_b), (padding, pad_r), (0, 0)))
    xp = xp.reshape(N, comp_h, s, comp_w, s, C).transpose(0, 2, 4, 1, 3, 5)
    return xp.reshape(N, s * s, comp_h, comp_w, C)


def _round_up(v, m):
    return (v + m - 1) // m * m


def _prep_w3x3(w_oihw, co_pad, ci_pad=None):
    # (Cout, Cin, 3, 3) -> (9, Ci_pad, Co_pad), tap index = dh*3 + dw, bf16
    co, ci, kh, kw = w_oihw.shape
    ci_pad = ci if ci_pad is None else ci_pad
    w = jnp.transpose(w_oihw, (2, 3, 1, 0)).reshape(kh * kw, ci, co)
    w = jnp.pad(w, ((0, 0), (0, ci_pad - ci), (0, co_pad - co)))
    return w.astype(jnp.bfloat16)


def _fold_bn(gamma, beta, mean, var, co_pad):
    scale = gamma / jnp.sqrt(var + BN_EPS)
    bias = beta - mean * scale
    scale = jnp.pad(scale, (0, co_pad - scale.shape[0]))  # padded channels -> 0
    bias = jnp.pad(bias, (0, co_pad - bias.shape[0]))
    return (scale.reshape(1, -1).astype(jnp.float32),
            bias.reshape(1, -1).astype(jnp.float32))


def basic_block_forward(x_nchw, params, stride):
    N, Cin, H, W = x_nchw.shape
    planes = params["conv1_w"].shape[0]
    co_p = _round_up(planes, LANE)

    Ho = (H + 2 - 3) // stride + 1
    Wo = (W + 2 - 3) // stride + 1

    # Native (unpadded) input channels; only output channels are lane-padded.
    x_bf = jnp.transpose(x_nchw, (0, 2, 3, 1)).astype(jnp.bfloat16)

    # ---- conv1 (3x3, stride, pad 1) + bn1 + relu : one fused kernel ----
    x_poly = _polyphase(x_bf, 3, stride, 1)
    w1 = _prep_w3x3(params["conv1_w"], co_p)
    s1, b1 = _fold_bn(params["bn1_gamma"], params["bn1_beta"],
                      params["bn1_mean"], params["bn1_var"], co_p)
    out1 = _fused_conv_bn(x_poly, w1, s1, b1, stride=stride,
                          N=N, Ho=Ho, Wo=Wo, relu=True)   # (N, Ho*Wo, co_p) bf16

    # ---- conv2 (3x3, 1, pad 1) + bn2 + shortcut + add + relu : one fused kernel ----
    # stride-1 polyphase is just zero padding of the NHWC activation.
    o_poly = _polyphase(out1.reshape(N, Ho, Wo, co_p), 3, 1, 1)
    w2 = _prep_w3x3(params["conv2_w"], co_p, ci_pad=co_p)
    s2, b2 = _fold_bn(params["bn2_gamma"], params["bn2_beta"],
                      params["bn2_mean"], params["bn2_var"], co_p)

    if stride != 1 or Cin != planes:
        # projection shortcut: 1x1/stride conv + BN, computed inside the conv2
        # kernel, reading the stride-s samples from x_poly's (1,1) component.
        wsc = jnp.pad(params["sc_w"][:, :, 0, 0].T,
                      ((0, 0), (0, co_p - planes))).astype(jnp.bfloat16)
        ssc, bsc = _fold_bn(params["sc_gamma"], params["sc_beta"],
                            params["sc_mean"], params["sc_var"], co_p)
        out2 = _fused_conv_bn(o_poly, w2, s2, b2, stride=1, N=N, Ho=Ho, Wo=Wo,
                              sc_poly=x_poly, sc_stride=stride,
                              sc_w=wsc, sc_scale=ssc, sc_bias=bsc)
    else:
        # identity shortcut (stride 1, Cin == planes): fused residual add
        assert Cin == planes and H == Ho and W == Wo
        res = jnp.pad(x_bf, ((0, 0), (0, 0), (0, 0), (0, co_p - planes)))
        out2 = _fused_conv_bn(o_poly, w2, s2, b2, stride=1, N=N, Ho=Ho, Wo=Wo,
                              residual=res.reshape(N, Ho * Wo, co_p))

    out = out2.reshape(N, Ho, Wo, co_p)[..., :planes].astype(jnp.float32)
    return jnp.transpose(out, (0, 3, 1, 2))


# ---------------------------------------------------------------------------
# Deterministic parameter init (shapes per nn.Module __init__)
# ---------------------------------------------------------------------------
def init_params(key, in_planes, planes, stride):
    ks = jax.random.split(key, 16)
    p = {
        "conv1_w": 0.1 * jax.random.normal(ks[0], (planes, in_planes, 3, 3), jnp.float32),
        "bn1_gamma": jax.random.uniform(ks[1], (planes,), jnp.float32, 0.5, 1.5),
        "bn1_beta": 0.1 * jax.random.normal(ks[2], (planes,), jnp.float32),
        "bn1_mean": 0.1 * jax.random.normal(ks[3], (planes,), jnp.float32),
        "bn1_var": jax.random.uniform(ks[4], (planes,), jnp.float32, 0.5, 1.5),
        "conv2_w": 0.1 * jax.random.normal(ks[5], (planes, planes, 3, 3), jnp.float32),
        "bn2_gamma": jax.random.uniform(ks[6], (planes,), jnp.float32, 0.5, 1.5),
        "bn2_beta": 0.1 * jax.random.normal(ks[7], (planes,), jnp.float32),
        "bn2_mean": 0.1 * jax.random.normal(ks[8], (planes,), jnp.float32),
        "bn2_var": jax.random.uniform(ks[9], (planes,), jnp.float32, 0.5, 1.5),
    }
    if stride != 1 or in_planes != planes:
        p["sc_w"] = 0.1 * jax.random.normal(ks[10], (planes, in_planes, 1, 1), jnp.float32)
        p["sc_gamma"] = jax.random.uniform(ks[11], (planes,), jnp.float32, 0.5, 1.5)
        p["sc_beta"] = 0.1 * jax.random.normal(ks[12], (planes,), jnp.float32)
        p["sc_mean"] = 0.1 * jax.random.normal(ks[13], (planes,), jnp.float32)
        p["sc_var"] = jax.random.uniform(ks[14], (planes,), jnp.float32, 0.5, 1.5)
    return p


# ---------------------------------------------------------------------------
# Pure-JAX reference mirroring the kernel's bf16 quantization points
# ---------------------------------------------------------------------------
def ref_forward(x_nchw, params, stride):
    q = lambda a: a.astype(jnp.bfloat16).astype(jnp.float32)  # mirror bf16 datapath

    def conv(x, w_oihw, s, pad):
        w = jnp.transpose(q(w_oihw), (2, 3, 1, 0))
        return jax.lax.conv_general_dilated(
            x, w, (s, s), [(pad, pad), (pad, pad)],
            dimension_numbers=("NHWC", "HWIO", "NHWC"))

    def bn(x, pfx):
        g, b = params[pfx + "_gamma"], params[pfx + "_beta"]
        m, v = params[pfx + "_mean"], params[pfx + "_var"]
        return (x - m) * (g / jnp.sqrt(v + BN_EPS)) + b

    x = q(jnp.transpose(x_nchw, (0, 2, 3, 1)).astype(jnp.float32))
    out = q(jax.nn.relu(bn(conv(x, params["conv1_w"], stride, 1), "bn1")))
    out = bn(conv(out, params["conv2_w"], 1, 1), "bn2")
    if "sc_w" in params:
        sc = bn(conv(x, params["sc_w"], stride, 0), "sc")
    else:
        sc = x
    return jnp.transpose(jax.nn.relu(out + sc), (0, 3, 1, 2))


if __name__ == "__main__":
    key = jax.random.PRNGKey(0)
    k_x1, k_p1, k_x2, k_p2 = jax.random.split(key, 4)

    # --- config 1: downsampling block (projection shortcut), stride 2 ---
    N, in_planes, planes, H, W, stride = 2, 4, 8, 16, 16, 2
    x1 = jax.random.normal(k_x1, (N, in_planes, H, W), jnp.float32)
    p1 = init_params(k_p1, in_planes, planes, stride)
    fwd1 = jax.jit(functools.partial(basic_block_forward, stride=stride))
    out1 = jax.block_until_ready(fwd1(x1, p1))
    ref1 = ref_forward(x1, p1, stride)
    assert out1.shape == (N, planes, H // stride, W // stride), out1.shape
    if not jnp.allclose(out1, ref1, rtol=2e-2, atol=2e-2):
        err = float(jnp.max(jnp.abs(out1 - ref1)))
        raise AssertionError(f"projection BasicBlock mismatch (max abs err {err})")

    # --- config 2: identity-shortcut block, stride 1 ---
    x2 = jax.random.normal(k_x2, (N, planes, H, W), jnp.float32)
    p2 = init_params(k_p2, planes, planes, 1)
    fwd2 = jax.jit(functools.partial(basic_block_forward, stride=1))
    out2 = jax.block_until_ready(fwd2(x2, p2))
    ref2 = ref_forward(x2, p2, 1)
    assert out2.shape == (N, planes, H, W), out2.shape
    if not jnp.allclose(out2, ref2, rtol=2e-2, atol=2e-2):
        err = float(jnp.max(jnp.abs(out2 - ref2)))
        raise AssertionError(f"identity BasicBlock mismatch (max abs err {err})")

    print("KERNEL_OK")
</pallas_src>

<mosaic_0001>
module attributes {stable_mosaic.version = 11 : i64} {
  func.func @_conv_bn_kernel(%arg0: i32, %arg1: i32, %arg2: memref<2x4x9x9x4xbf16, #tpu.memory_space<vmem>>, %arg3: memref<9x4x128xbf16, #tpu.memory_space<vmem>>, %arg4: memref<1x128xf32, #tpu.memory_space<vmem>>, %arg5: memref<1x128xf32, #tpu.memory_space<vmem>>, %arg6: memref<2x64x128xbf16, #tpu.memory_space<vmem>>) attributes {dimension_semantics = [#tpu.dimension_semantics<parallel>, #tpu.dimension_semantics<parallel>], iteration_bounds = array<i64: 1, 1>, scalar_prefetch = 0 : i64, scratch_operands = 0 : i64, tpu.core_type = #tpu.core_type<tc>, window_params = [{transform_indices = @transform_0, window_bounds = array<i64: 2, 4, 9, 9, 4>}, {pipeline_mode = #tpu.pipeline_mode<synchronous>, transform_indices = @transform_1, window_bounds = array<i64: 9, 4, 128>}, {pipeline_mode = #tpu.pipeline_mode<synchronous>, transform_indices = @transform_2, window_bounds = array<i64: 1, 128>}, {pipeline_mode = #tpu.pipeline_mode<synchronous>, transform_indices = @transform_3, window_bounds = array<i64: 1, 128>}, {transform_indices = @transform_4, window_bounds = array<i64: 2, 64, 128>}]} {
    %c8_i32 = arith.constant 8 : i32
    %0 = arith.muli %arg1, %c8_i32 : i32
    %1 = tpu.assume_multiple %0, 8 : i32
    %c0_i32 = arith.constant 0 : i32
    %2 = arith.addi %1, %c0_i32 : i32
    %c0 = arith.constant 0 : index
    %c0_0 = arith.constant 0 : index
    %3 = arith.index_cast %2 : i32 to index
    %c0_1 = arith.constant 0 : index
    %c0_2 = arith.constant 0 : index
    %4 = vector.load %arg2[%c0, %c0_0, %3, %c0_1, %c0_2] : memref<2x4x9x9x4xbf16, #tpu.memory_space<vmem>>, vector<2x1x8x8x4xbf16>
    %5 = vector.shape_cast %4 : vector<2x1x8x8x4xbf16> to vector<2x8x8x4xbf16>
    %6 = vector.shape_cast %5 : vector<2x8x8x4xbf16> to vector<128x4xbf16>
    %c0_i32_3 = arith.constant 0 : i32
    %7 = arith.addi %1, %c0_i32_3 : i32
    %c0_4 = arith.constant 0 : index
    %c1 = arith.constant 1 : index
    %8 = arith.index_cast %7 : i32 to index
    %c0_5 = arith.constant 0 : index
    %c0_6 = arith.constant 0 : index
    %9 = vector.load %arg2[%c0_4, %c1, %8, %c0_5, %c0_6] : memref<2x4x9x9x4xbf16, #tpu.memory_space<vmem>>, vector<2x1x8x8x4xbf16>
    %10 = vector.shape_cast %9 : vector<2x1x8x8x4xbf16> to vector<2x8x8x4xbf16>
    %11 = vector.shape_cast %10 : vector<2x8x8x4xbf16> to vector<128x4xbf16>
    %c0_i32_7 = arith.constant 0 : i32
    %12 = arith.addi %1, %c0_i32_7 : i32
    %c0_8 = arith.constant 0 : index
    %c0_9 = arith.constant 0 : index
    %13 = arith.index_cast %12 : i32 to index
    %c1_10 = arith.constant 1 : index
    %c0_11 = arith.constant 0 : index
    %14 = vector.load %arg2[%c0_8, %c0_9, %13, %c1_10, %c0_11] : memref<2x4x9x9x4xbf16, #tpu.memory_space<vmem>>, vector<2x1x8x8x4xbf16>
    %15 = vector.shape_cast %14 : vector<2x1x8x8x4xbf16> to vector<2x8x8x4xbf16>
    %16 = vector.shape_cast %15 : vector<2x8x8x4xbf16> to vector<128x4xbf16>
    %c0_i32_12 = arith.constant 0 : i32
    %17 = arith.addi %1, %c0_i32_12 : i32
    %c0_13 = arith.constant 0 : index
    %c2 = arith.constant 2 : index
    %18 = arith.index_cast %17 : i32 to index
    %c0_14 = arith.constant 0 : index
    %c0_15 = arith.constant 0 : index
    %19 = vector.load %arg2[%c0_13, %c2, %18, %c0_14, %c0_15] : memref<2x4x9x9x4xbf16, #tpu.memory_space<vmem>>, vector<2x1x8x8x4xbf16>
    %20 = vector.shape_cast %19 : vector<2x1x8x8x4xbf16> to vector<2x8x8x4xbf16>
    %21 = vector.shape_cast %20 : vector<2x8x8x4xbf16> to vector<128x4xbf16>
    %c0_i32_16 = arith.constant 0 : i32
    %22 = arith.addi %1, %c0_i32_16 : i32
    %c0_17 = arith.constant 0 : index
    %c3 = arith.constant 3 : index
    %23 = arith.index_cast %22 : i32 to index
    %c0_18 = arith.constant 0 : index
    %c0_19 = arith.constant 0 : index
    %24 = vector.load %arg2[%c0_17, %c3, %23, %c0_18, %c0_19] : memref<2x4x9x9x4xbf16, #tpu.memory_space<vmem>>, vector<2x1x8x8x4xbf16>
    %25 = vector.shape_cast %24 : vector<2x1x8x8x4xbf16> to vector<2x8x8x4xbf16>
    %26 = vector.shape_cast %25 : vector<2x8x8x4xbf16> to vector<128x4xbf16>
    %c0_i32_20 = arith.constant 0 : i32
    %27 = arith.addi %1, %c0_i32_20 : i32
    %c0_21 = arith.constant 0 : index
    %c2_22 = arith.constant 2 : index
    %28 = arith.index_cast %27 : i32 to index
    %c1_23 = arith.constant 1 : index
    %c0_24 = arith.constant 0 : index
    %29 = vector.load %arg2[%c0_21, %c2_22, %28, %c1_23, %c0_24] : memref<2x4x9x9x4xbf16, #tpu.memory_space<vmem>>, vector<2x1x8x8x4xbf16>
    %30 = vector.shape_cast %29 : vector<2x1x8x8x4xbf16> to vector<2x8x8x4xbf16>
    %31 = vector.shape_cast %30 : vector<2x8x8x4xbf16> to vector<128x4xbf16>
    %c1_i32 = arith.constant 1 : i32
    %32 = arith.addi %1, %c1_i32 : i32
    %c0_25 = arith.constant 0 : index
    %c0_26 = arith.constant 0 : index
    %33 = arith.index_cast %32 : i32 to index
    %c0_27 = arith.constant 0 : index
    %c0_28 = arith.constant 0 : index
    %34 = vector.load %arg2[%c0_25, %c0_26, %33, %c0_27, %c0_28] : memref<2x4x9x9x4xbf16, #tpu.memory_space<vmem>>, vector<2x1x8x8x4xbf16>
    %35 = vector.shape_cast %34 : vector<2x1x8x8x4xbf16> to vector<2x8x8x4xbf16>
    %36 = vector.shape_cast %35 : vector<2x8x8x4xbf16> to vector<128x4xbf16>
    %c1_i32_29 = arith.constant 1 : i32
    %37 = arith.addi %1, %c1_i32_29 : i32
    %c0_30 = arith.constant 0 : index
    %c1_31 = arith.constant 1 : index
    %38 = arith.index_cast %37 : i32 to index
    %c0_32 = arith.constant 0 : index
    %c0_33 = arith.constant 0 : index
    %39 = vector.load %arg2[%c0_30, %c1_31, %38, %c0_32, %c0_33] : memref<2x4x9x9x4xbf16, #tpu.memory_space<vmem>>, vector<2x1x8x8x4xbf16>
    %40 = vector.shape_cast %39 : vector<2x1x8x8x4xbf16> to vector<2x8x8x4xbf16>
    %41 = vector.shape_cast %40 : vector<2x8x8x4xbf16> to vector<128x4xbf16>
    %c1_i32_34 = arith.constant 1 : i32
    %42 = arith.addi %1, %c1_i32_34 : i32
    %c0_35 = arith.constant 0 : index
    %c0_36 = arith.constant 0 : index
    %43 = arith.index_cast %42 : i32 to index
    %c1_37 = arith.constant 1 : index
    %c0_38 = arith.constant 0 : index
    %44 = vector.load %arg2[%c0_35, %c0_36, %43, %c1_37, %c0_38] : memref<2x4x9x9x4xbf16, #tpu.memory_space<vmem>>, vector<2x1x8x8x4xbf16>
    %45 = vector.shape_cast %44 : vector<2x1x8x8x4xbf16> to vector<2x8x8x4xbf16>
    %46 = vector.shape_cast %45 : vector<2x8x8x4xbf16> to vector<128x4xbf16>
    %c0_39 = arith.constant 0 : index
    %c0_40 = arith.constant 0 : index
    %c0_41 = arith.constant 0 : index
    %47 = vector.load %arg3[%c0_39, %c0_40, %c0_41] : memref<9x4x128xbf16, #tpu.memory_space<vmem>>, vector<1x4x128xbf16>
    %48 = vector.shape_cast %47 : vector<1x4x128xbf16> to vector<4x128xbf16>
    %cst = arith.constant dense<0.000000e+00> : vector<128x128xf32>
    %49 = tpu.matmul %6, %48, %cst {dimension_numbers = #tpu.dot_dimension_numbers<[1], [0], [0], [1], [0, 0, 1, 1], [], []>} : vector<128x4xbf16>, vector<4x128xbf16>, vector<128x128xf32> -> vector<128x128xf32>
    %c1_42 = arith.constant 1 : index
    %c0_43 = arith.constant 0 : index
    %c0_44 = arith.constant 0 : index
    %50 = vector.load %arg3[%c1_42, %c0_43, %c0_44] : memref<9x4x128xbf16, #tpu.memory_space<vmem>>, vector<1x4x128xbf16>
    %51 = vector.shape_cast %50 : vector<1x4x128xbf16> to vector<4x128xbf16>
    %cst_45 = arith.constant dense<0.000000e+00> : vector<128x128xf32>
    %52 = tpu.matmul %11, %51, %cst_45 {dimension_numbers = #tpu.dot_dimension_numbers<[1], [0], [0], [1], [0, 0, 1, 1], [], []>} : vector<128x4xbf16>, vector<4x128xbf16>, vector<128x128xf32> -> vector<128x128xf32>
    %53 = arith.addf %49, %52 : vector<128x128xf32>
    %c2_46 = arith.constant 2 : index
    %c0_47 = arith.constant 0 : index
    %c0_48 = arith.constant 0 : index
    %54 = vector.load %arg3[%c2_46, %c0_47, %c0_48] : memref<9x4x128xbf16, #tpu.memory_space<vmem>>, vector<1x4x128xbf16>
    %55 = vector.shape_cast %54 : vector<1x4x128xbf16> to vector<4x128xbf16>
    %cst_49 = arith.constant dense<0.000000e+00> : vector<128x128xf32>
    %56 = tpu.matmul %16, %55, %cst_49 {dimension_numbers = #tpu.dot_dimension_numbers<[1], [0], [0], [1], [0, 0, 1, 1], [], []>} : vector<128x4xbf16>, vector<4x128xbf16>, vector<128x128xf32> -> vector<128x128xf32>
    %57 = arith.addf %53, %56 : vector<128x128xf32>
    %c3_50 = arith.constant 3 : index
    %c0_51 = arith.constant 0 : index
    %c0_52 = arith.constant 0 : index
    %58 = vector.load %arg3[%c3_50, %c0_51, %c0_52] : memref<9x4x128xbf16, #tpu.memory_space<vmem>>, vector<1x4x128xbf16>
    %59 = vector.shape_cast %58 : vector<1x4x128xbf16> to vector<4x128xbf16>
    %cst_53 = arith.constant dense<0.000000e+00> : vector<128x128xf32>
    %60 = tpu.matmul %21, %59, %cst_53 {dimension_numbers = #tpu.dot_dimension_numbers<[1], [0], [0], [1], [0, 0, 1, 1], [], []>} : vector<128x4xbf16>, vector<4x128xbf16>, vector<128x128xf32> -> vector<128x128xf32>
    %61 = arith.addf %57, %60 : vector<128x128xf32>
    %c4 = arith.constant 4 : index
    %c0_54 = arith.constant 0 : index
    %c0_55 = arith.constant 0 : index
    %62 = vector.load %arg3[%c4, %c0_54, %c0_55] : memref<9x4x128xbf16, #tpu.memory_space<vmem>>, vector<1x4x128xbf16>
    %63 = vector.shape_cast %62 : vector<1x4x128xbf16> to vector<4x128xbf16>
    %cst_56 = arith.constant dense<0.000000e+00> : vector<128x128xf32>
    %64 = tpu.matmul %26, %63, %cst_56 {dimension_numbers = #tpu.dot_dimension_numbers<[1], [0], [0], [1], [0, 0, 1, 1], [], []>} : vector<128x4xbf16>, vector<4x128xbf16>, vector<128x128xf32> -> vector<128x128xf32>
    %65 = arith.addf %61, %64 : vector<128x128xf32>
    %c5 = arith.constant 5 : index
    %c0_57 = arith.constant 0 : index
    %c0_58 = arith.constant 0 : index
    %66 = vector.load %arg3[%c5, %c0_57, %c0_58] : memref<9x4x128xbf16, #tpu.memory_space<vmem>>, vector<1x4x128xbf16>
    %67 = vector.shape_cast %66 : vector<1x4x128xbf16> to vector<4x128xbf16>
    %cst_59 = arith.constant dense<0.000000e+00> : vector<128x128xf32>
    %68 = tpu.matmul %31, %67, %cst_59 {dimension_numbers = #tpu.dot_dimension_numbers<[1], [0], [0], [1], [0, 0, 1, 1], [], []>} : vector<128x4xbf16>, vector<4x128xbf16>, vector<128x128xf32> -> vector<128x128xf32>
    %69 = arith.addf %65, %68 : vector<128x128xf32>
    %c6 = arith.constant 6 : index
    %c0_60 = arith.constant 0 : index
    %c0_61 = arith.constant 0 : index
    %70 = vector.load %arg3[%c6, %c0_60, %c0_61] : memref<9x4x128xbf16, #tpu.memory_space<vmem>>, vector<1x4x128xbf16>
    %71 = vector.shape_cast %70 : vector<1x4x128xbf16> to vector<4x128xbf16>
    %cst_62 = arith.constant dense<0.000000e+00> : vector<128x128xf32>
    %72 = tpu.matmul %36, %71, %cst_62 {dimension_numbers = #tpu.dot_dimension_numbers<[1], [0], [0], [1], [0, 0, 1, 1], [], []>} : vector<128x4xbf16>, vector<4x128xbf16>, vector<128x128xf32> -> vector<128x128xf32>
    %73 = arith.addf %69, %72 : vector<128x128xf32>
    %c7 = arith.constant 7 : index
    %c0_63 = arith.constant 0 : index
    %c0_64 = arith.constant 0 : index
    %74 = vector.load %arg3[%c7, %c0_63, %c0_64] : memref<9x4x128xbf16, #tpu.memory_space<vmem>>, vector<1x4x128xbf16>
    %75 = vector.shape_cast %74 : vector<1x4x128xbf16> to vector<4x128xbf16>
    %cst_65 = arith.constant dense<0.000000e+00> : vector<128x128xf32>
    %76 = tpu.matmul %41, %75, %cst_65 {dimension_numbers = #tpu.dot_dimension_numbers<[1], [0], [0], [1], [0, 0, 1, 1], [], []>} : vector<128x4xbf16>, vector<4x128xbf16>, vector<128x128xf32> -> vector<128x128xf32>
    %77 = arith.addf %73, %76 : vector<128x128xf32>
    %c8 = arith.constant 8 : index
    %c0_66 = arith.constant 0 : index
    %c0_67 = arith.constant 0 : index
    %78 = vector.load %arg3[%c8, %c0_66, %c0_67] : memref<9x4x128xbf16, #tpu.memory_space<vmem>>, vector<1x4x128xbf16>
    %79 = vector.shape_cast %78 : vector<1x4x128xbf16> to vector<4x128xbf16>
    %cst_68 = arith.constant dense<0.000000e+00> : vector<128x128xf32>
    %80 = tpu.matmul %46, %79, %cst_68 {dimension_numbers = #tpu.dot_dimension_numbers<[1], [0], [0], [1], [0, 0, 1, 1], [], []>} : vector<128x4xbf16>, vector<4x128xbf16>, vector<128x128xf32> -> vector<128x128xf32>
    %81 = arith.addf %77, %80 : vector<128x128xf32>
    %c0_69 = arith.constant 0 : index
    %c0_70 = arith.constant 0 : index
    %82 = vector.load %arg4[%c0_69, %c0_70] : memref<1x128xf32, #tpu.memory_space<vmem>>, vector<1x128xf32>
    %83 = vector.broadcast %82 : vector<1x128xf32> to vector<128x128xf32>
    %84 = arith.mulf %81, %83 : vector<128x128xf32>
    %c0_71 = arith.constant 0 : index
    %c0_72 = arith.constant 0 : index
    %85 = vector.load %arg5[%c0_71, %c0_72] : memref<1x128xf32, #tpu.memory_space<vmem>>, vector<1x128xf32>
    %86 = vector.broadcast %85 : vector<1x128xf32> to vector<128x128xf32>
    %87 = arith.addf %84, %86 : vector<128x128xf32>
    %cst_73 = arith.constant 0.000000e+00 : f32
    %88 = vector.broadcast %cst_73 : f32 to vector<128x128xf32>
    %89 = arith.maximumf %87, %88 : vector<128x128xf32>
    %90 = vector.shape_cast %89 : vector<128x128xf32> to vector<2x64x128xf32>
    %91 = arith.truncf %90 : vector<2x64x128xf32> to vector<2x64x128xbf16>
    %c0_74 = arith.constant 0 : index
    %c0_75 = arith.constant 0 : index
    %c0_76 = arith.constant 0 : index
    %92 = vector.load %arg6[%c0_74, %c0_75, %c0_76] : memref<2x64x128xbf16, #tpu.memory_space<vmem>>, vector<2x64x128xbf16>
    tpu.vector_store %arg6[%c0_74, %c0_75, %c0_76], %91 {strides = array<i32>} : memref<2x64x128xbf16, #tpu.memory_space<vmem>>, vector<2x64x128xbf16>,
    return
  }
  func.func @transform_0(%arg0: i32, %arg1: i32) -> (i32, i32, i32, i32, i32) {
    %c0_i32 = arith.constant 0 : i32
    %c0_i32_0 = arith.constant 0 : i32
    %c0_i32_1 = arith.constant 0 : i32
    %c0_i32_2 = arith.constant 0 : i32
    %c0_i32_3 = arith.constant 0 : i32
    return %arg0, %c0_i32, %c0_i32_0, %c0_i32_1, %c0_i32_2 : i32, i32, i32, i32, i32
  }
  func.func @transform_1(%arg0: i32, %arg1: i32) -> (i32, i32, i32) {
    %c0_i32 = arith.constant 0 : i32
    %c0_i32_0 = arith.constant 0 : i32
    %c0_i32_1 = arith.constant 0 : i32
    %c0_i32_2 = arith.constant 0 : i32
    return %c0_i32, %c0_i32_0, %c0_i32_1 : i32, i32, i32
  }
  func.func @transform_2(%arg0: i32, %arg1: i32) -> (i32, i32) {
    %c0_i32 = arith.constant 0 : i32
    %c0_i32_0 = arith.constant 0 : i32
    %c0_i32_1 = arith.constant 0 : i32
    return %c0_i32, %c0_i32_0 : i32, i32
  }
  func.func @transform_3(%arg0: i32, %arg1: i32) -> (i32, i32) {
    %c0_i32 = arith.constant 0 : i32
    %c0_i32_0 = arith.constant 0 : i32
    %c0_i32_1 = arith.constant 0 : i32
    return %c0_i32, %c0_i32_0 : i32, i32
  }
  func.func @transform_4(%arg0: i32, %arg1: i32) -> (i32, i32, i32) {
    %c0_i32 = arith.constant 0 : i32
    %c0_i32_0 = arith.constant 0 : i32
    return %arg0, %arg1, %c0_i32 : i32, i32, i32
  }
}

module attributes {stable_mosaic.version = 11 : i64} {
  func.func @_conv_bn_proj_add_kernel(%arg0: i32, %arg1: i32, %arg2: memref<2x1x10x10x128xbf16, #tpu.memory_space<vmem>>, %arg3: memref<1152x128xbf16, #tpu.memory_space<vmem>>, %arg4: memref<1x128xf32, #tpu.memory_space<vmem>>, %arg5: memref<1x128xf32, #tpu.memory_space<vmem>>, %arg6: memref<2x1x9x9x4xbf16, #tpu.memory_space<vmem>>, %arg7: memref<4x128xbf16, #tpu.memory_space<vmem>>, %arg8: memref<1x128xf32, #tpu.memory_space<vmem>>, %arg9: memref<1x128xf32, #tpu.memory_space<vmem>>, %arg10: memref<2x64x128xbf16, #tpu.memory_space<vmem>>) attributes {dimension_semantics = [#tpu.dimension_semantics<parallel>, #tpu.dimension_semantics<parallel>], iteration_bounds = array<i64: 1, 1>, scalar_prefetch = 0 : i64, scratch_operands = 0 : i64, tpu.core_type = #tpu.core_type<tc>, window_params = [{transform_indices = @transform_0, window_bounds = array<i64: 2, 1, 10, 10, 128>}, {pipeline_mode = #tpu.pipeline_mode<synchronous>, transform_indices = @transform_1, window_bounds = array<i64: 1152, 128>}, {pipeline_mode = #tpu.pipeline_mode<synchronous>, transform_indices = @transform_2, window_bounds = array<i64: 1, 128>}, {pipeline_mode = #tpu.pipeline_mode<synchronous>, transform_indices = @transform_3, window_bounds = array<i64: 1, 128>}, {transform_indices = @transform_4, window_bounds = array<i64: 2, 1, 9, 9, 4>}, {pipeline_mode = #tpu.pipeline_mode<synchronous>, transform_indices = @transform_5, window_bounds = array<i64: 4, 128>}, {pipeline_mode = #tpu.pipeline_mode<synchronous>, transform_indices = @transform_6, window_bounds = array<i64: 1, 128>}, {pipeline_mode = #tpu.pipeline_mode<synchronous>, transform_indices = @transform_7, window_bounds = array<i64: 1, 128>}, {transform_indices = @transform_8, window_bounds = array<i64: 2, 64, 128>}]} {
    %c8_i32 = arith.constant 8 : i32
    %0 = arith.muli %arg1, %c8_i32 : i32
    %1 = tpu.assume_multiple %0, 8 : i32
    %c0_i32 = arith.constant 0 : i32
    %2 = arith.addi %1, %c0_i32 : i32
    %c0 = arith.constant 0 : index
    %c0_0 = arith.constant 0 : index
    %3 = arith.index_cast %2 : i32 to index
    %c0_1 = arith.constant 0 : index
    %c0_2 = arith.constant 0 : index
    %4 = vector.load %arg2[%c0, %c0_0, %3, %c0_1, %c0_2] : memref<2x1x10x10x128xbf16, #tpu.memory_space<vmem>>, vector<2x1x8x8x128xbf16>
    %5 = vector.shape_cast %4 : vector<2x1x8x8x128xbf16> to vector<2x8x8x128xbf16>
    %6 = vector.shape_cast %5 : vector<2x8x8x128xbf16> to vector<128x128xbf16>
    %c0_i32_3 = arith.constant 0 : i32
    %7 = arith.addi %1, %c0_i32_3 : i32
    %c0_4 = arith.constant 0 : index
    %c0_5 = arith.constant 0 : index
    %8 = arith.index_cast %7 : i32 to index
    %c1 = arith.constant 1 : index
    %c0_6 = arith.constant 0 : index
    %9 = vector.load %arg2[%c0_4, %c0_5, %8, %c1, %c0_6] : memref<2x1x10x10x128xbf16, #tpu.memory_space<vmem>>, vector<2x1x8x8x128xbf16>
    %10 = vector.shape_cast %9 : vector<2x1x8x8x128xbf16> to vector<2x8x8x128xbf16>
    %11 = vector.shape_cast %10 : vector<2x8x8x128xbf16> to vector<128x128xbf16>
    %c0_i32_7 = arith.constant 0 : i32
    %12 = arith.addi %1, %c0_i32_7 : i32
    %c0_8 = arith.constant 0 : index
    %c0_9 = arith.constant 0 : index
    %13 = arith.index_cast %12 : i32 to index
    %c2 = arith.constant 2 : index
    %c0_10 = arith.constant 0 : index
    %14 = vector.load %arg2[%c0_8, %c0_9, %13, %c2, %c0_10] : memref<2x1x10x10x128xbf16, #tpu.memory_space<vmem>>, vector<2x1x8x8x128xbf16>
    %15 = vector.shape_cast %14 : vector<2x1x8x8x128xbf16> to vector<2x8x8x128xbf16>
    %16 = vector.shape_cast %15 : vector<2x8x8x128xbf16> to vector<128x128xbf16>
    %c1_i32 = arith.constant 1 : i32
    %17 = arith.addi %1, %c1_i32 : i32
    %c0_11 = arith.constant 0 : index
    %c0_12 = arith.constant 0 : index
    %18 = arith.index_cast %17 : i32 to index
    %c0_13 = arith.constant 0 : index
    %c0_14 = arith.constant 0 : index
    %19 = vector.load %arg2[%c0_11, %c0_12, %18, %c0_13, %c0_14] : memref<2x1x10x10x128xbf16, #tpu.memory_space<vmem>>, vector<2x1x8x8x128xbf16>
    %20 = vector.shape_cast %19 : vector<2x1x8x8x128xbf16> to vector<2x8x8x128xbf16>
    %21 = vector.shape_cast %20 : vector<2x8x8x128xbf16> to vector<128x128xbf16>
    %c1_i32_15 = arith.constant 1 : i32
    %22 = arith.addi %1, %c1_i32_15 : i32
    %c0_16 = arith.constant 0 : index
    %c0_17 = arith.constant 0 : index
    %23 = arith.index_cast %22 : i32 to index
    %c1_18 = arith.constant 1 : index
    %c0_19 = arith.constant 0 : index
    %24 = vector.load %arg2[%c0_16, %c0_17, %23, %c1_18, %c0_19] : memref<2x1x10x10x128xbf16, #tpu.memory_space<vmem>>, vector<2x1x8x8x128xbf16>
    %25 = vector.shape_cast %24 : vector<2x1x8x8x128xbf16> to vector<2x8x8x128xbf16>
    %26 = vector.shape_cast %25 : vector<2x8x8x128xbf16> to vector<128x128xbf16>
    %c1_i32_20 = arith.constant 1 : i32
    %27 = arith.addi %1, %c1_i32_20 : i32
    %c0_21 = arith.constant 0 : index
    %c0_22 = arith.constant 0 : index
    %28 = arith.index_cast %27 : i32 to index
    %c2_23 = arith.constant 2 : index
    %c0_24 = arith.constant 0 : index
    %29 = vector.load %arg2[%c0_21, %c0_22, %28, %c2_23, %c0_24] : memref<2x1x10x10x128xbf16, #tpu.memory_space<vmem>>, vector<2x1x8x8x128xbf16>
    %30 = vector.shape_cast %29 : vector<2x1x8x8x128xbf16> to vector<2x8x8x128xbf16>
    %31 = vector.shape_cast %30 : vector<2x8x8x128xbf16> to vector<128x128xbf16>
    %c2_i32 = arith.constant 2 : i32
    %32 = arith.addi %1, %c2_i32 : i32
    %c0_25 = arith.constant 0 : index
    %c0_26 = arith.constant 0 : index
    %33 = arith.index_cast %32 : i32 to index
    %c0_27 = arith.constant 0 : index
    %c0_28 = arith.constant 0 : index
    %34 = vector.load %arg2[%c0_25, %c0_26, %33, %c0_27, %c0_28] : memref<2x1x10x10x128xbf16, #tpu.memory_space<vmem>>, vector<2x1x8x8x128xbf16>
    %35 = vector.shape_cast %34 : vector<2x1x8x8x128xbf16> to vector<2x8x8x128xbf16>
    %36 = vector.shape_cast %35 : vector<2x8x8x128xbf16> to vector<128x128xbf16>
    %c2_i32_29 = arith.constant 2 : i32
    %37 = arith.addi %1, %c2_i32_29 : i32
    %c0_30 = arith.constant 0 : index
    %c0_31 = arith.constant 0 : index
    %38 = arith.index_cast %37 : i32 to index
    %c1_32 = arith.constant 1 : index
    %c0_33 = arith.constant 0 : index
    %39 = vector.load %arg2[%c0_30, %c0_31, %38, %c1_32, %c0_33] : memref<2x1x10x10x128xbf16, #tpu.memory_space<vmem>>, vector<2x1x8x8x128xbf16>
    %40 = vector.shape_cast %39 : vector<2x1x8x8x128xbf16> to vector<2x8x8x128xbf16>
    %41 = vector.shape_cast %40 : vector<2x8x8x128xbf16> to vector<128x128xbf16>
    %c2_i32_34 = arith.constant 2 : i32
    %42 = arith.addi %1, %c2_i32_34 : i32
    %c0_35 = arith.constant 0 : index
    %c0_36 = arith.constant 0 : index
    %43 = arith.index_cast %42 : i32 to index
    %c2_37 = arith.constant 2 : index
    %c0_38 = arith.constant 0 : index
    %44 = vector.load %arg2[%c0_35, %c0_36, %43, %c2_37, %c0_38] : memref<2x1x10x10x128xbf16, #tpu.memory_space<vmem>>, vector<2x1x8x8x128xbf16>
    %45 = vector.shape_cast %44 : vector<2x1x8x8x128xbf16> to vector<2x8x8x128xbf16>
    %46 = vector.shape_cast %45 : vector<2x8x8x128xbf16> to vector<128x128xbf16>
    %47 = tpu.concatenate %6, %11, %16, %21, %26, %31, %36, %41, %46 in 1 : vector<128x128xbf16>, vector<128x128xbf16>, vector<128x128xbf16>, vector<128x128xbf16>, vector<128x128xbf16>, vector<128x128xbf16>, vector<128x128xbf16>, vector<128x128xbf16>, vector<128x128xbf16> -> vector<128x1152xbf16>
    %c0_39 = arith.constant 0 : index
    %c0_40 = arith.constant 0 : index
    %48 = vector.load %arg3[%c0_39, %c0_40] : memref<1152x128xbf16, #tpu.memory_space<vmem>>, vector<1152x128xbf16>
    %cst = arith.constant dense<0.000000e+00> : vector<128x128xf32>
    %49 = tpu.matmul %47, %48, %cst {dimension_numbers = #tpu.dot_dimension_numbers<[1], [0], [0], [1], [0, 0, 1, 1], [], []>} : vector<128x1152xbf16>, vector<1152x128xbf16>, vector<128x128xf32> -> vector<128x128xf32>
    %c0_41 = arith.constant 0 : index
    %c0_42 = arith.constant 0 : index
    %50 = vector.load %arg4[%c0_41, %c0_42] : memref<1x128xf32, #tpu.memory_space<vmem>>, vector<1x128xf32>
    %51 = vector.broadcast %50 : vector<1x128xf32> to vector<128x128xf32>
    %52 = arith.mulf %49, %51 : vector<128x128xf32>
    %c0_43 = arith.constant 0 : index
    %c0_44 = arith.constant 0 : index
    %53 = vector.load %arg5[%c0_43, %c0_44] : memref<1x128xf32, #tpu.memory_space<vmem>>, vector<1x128xf32>
    %54 = vector.broadcast %53 : vector<1x128xf32> to vector<128x128xf32>
    %55 = arith.addf %52, %54 : vector<128x128xf32>
    %c8_i32_45 = arith.constant 8 : i32
    %56 = arith.muli %arg1, %c8_i32_45 : i32
    %57 = tpu.assume_multiple %56, 8 : i32
    %c0_i32_46 = arith.constant 0 : i32
    %58 = arith.addi %57, %c0_i32_46 : i32
    %c0_47 = arith.constant 0 : index
    %c0_48 = arith.constant 0 : index
    %59 = arith.index_cast %58 : i32 to index
    %c0_49 = arith.constant 0 : index
    %c0_50 = arith.constant 0 : index
    %60 = vector.load %arg6[%c0_47, %c0_48, %59, %c0_49, %c0_50] : memref<2x1x9x9x4xbf16, #tpu.memory_space<vmem>>, vector<2x1x8x8x4xbf16>
    %61 = vector.shape_cast %60 : vector<2x1x8x8x4xbf16> to vector<2x8x8x4xbf16>
    %62 = vector.shape_cast %61 : vector<2x8x8x4xbf16> to vector<128x4xbf16>
    %c0_51 = arith.constant 0 : index
    %c0_52 = arith.constant 0 : index
    %63 = vector.load %arg7[%c0_51, %c0_52] : memref<4x128xbf16, #tpu.memory_space<vmem>>, vector<4x128xbf16>
    %cst_53 = arith.constant dense<0.000000e+00> : vector<128x128xf32>
    %64 = tpu.matmul %62, %63, %cst_53 {dimension_numbers = #tpu.dot_dimension_numbers<[1], [0], [0], [1], [0, 0, 1, 1], [], []>} : vector<128x4xbf16>, vector<4x128xbf16>, vector<128x128xf32> -> vector<128x128xf32>
    %c0_54 = arith.constant 0 : index
    %c0_55 = arith.constant 0 : index
    %65 = vector.load %arg8[%c0_54, %c0_55] : memref<1x128xf32, #tpu.memory_space<vmem>>, vector<1x128xf32>
    %66 = vector.broadcast %65 : vector<1x128xf32> to vector<128x128xf32>
    %67 = arith.mulf %64, %66 : vector<128x128xf32>
    %c0_56 = arith.constant 0 : index
    %c0_57 = arith.constant 0 : index
    %68 = vector.load %arg9[%c0_56, %c0_57] : memref<1x128xf32, #tpu.memory_space<vmem>>, vector<1x128xf32>
    %69 = vector.broadcast %68 : vector<1x128xf32> to vector<128x128xf32>
    %70 = arith.addf %67, %69 : vector<128x128xf32>
    %71 = arith.addf %55, %70 : vector<128x128xf32>
    %cst_58 = arith.constant 0.000000e+00 : f32
    %72 = vector.broadcast %cst_58 : f32 to vector<128x128xf32>
    %73 = arith.maximumf %71, %72 : vector<128x128xf32>
    %74 = vector.shape_cast %73 : vector<128x128xf32> to vector<2x64x128xf32>
    %75 = arith.truncf %74 : vector<2x64x128xf32> to vector<2x64x128xbf16>
    %c0_59 = arith.constant 0 : index
    %c0_60 = arith.constant 0 : index
    %c0_61 = arith.constant 0 : index
    %76 = vector.load %arg10[%c0_59, %c0_60, %c0_61] : memref<2x64x128xbf16, #tpu.memory_space<vmem>>, vector<2x64x128xbf16>
    tpu.vector_store %arg10[%c0_59, %c0_60, %c0_61], %75 {strides = array<i32>} : memref<2x64x128xbf16, #tpu.memory_space<vmem>>, vector<2x64x128xbf16>,
    return
  }
  func.func @transform_0(%arg0: i32, %arg1: i32) -> (i32, i32, i32, i32, i32) {
    %c0_i32 = arith.constant 0 : i32
    %c0_i32_0 = arith.constant 0 : i32
    %c0_i32_1 = arith.constant 0 : i32
    %c0_i32_2 = arith.constant 0 : i32
    %c0_i32_3 = arith.constant 0 : i32
    return %arg0, %c0_i32, %c0_i32_0, %c0_i32_1, %c0_i32_2 : i32, i32, i32, i32, i32
  }
  func.func @transform_1(%arg0: i32, %arg1: i32) -> (i32, i32) {
    %c0_i32 = arith.constant 0 : i32
    %c0_i32_0 = arith.constant 0 : i32
    %c0_i32_1 = arith.constant 0 : i32
    return %c0_i32, %c0_i32_0 : i32, i32
  }
  func.func @transform_2(%arg0: i32, %arg1: i32) -> (i32, i32) {
    %c0_i32 = arith.constant 0 : i32
    %c0_i32_0 = arith.constant 0 : i32
    %c0_i32_1 = arith.constant 0 : i32
    return %c0_i32, %c0_i32_0 : i32, i32
  }
  func.func @transform_3(%arg0: i32, %arg1: i32) -> (i32, i32) {
    %c0_i32 = arith.constant 0 : i32
    %c0_i32_0 = arith.constant 0 : i32
    %c0_i32_1 = arith.constant 0 : i32
    return %c0_i32, %c0_i32_0 : i32, i32
  }
  func.func @transform_4(%arg0: i32, %arg1: i32) -> (i32, i32, i32, i32, i32) {
    %c3_i32 = arith.constant 3 : i32
    %c0_i32 = arith.constant 0 : i32
    %c0_i32_0 = arith.constant 0 : i32
    %c0_i32_1 = arith.constant 0 : i32
    %c0_i32_2 = arith.constant 0 : i32
    return %arg0, %c3_i32, %c0_i32, %c0_i32_0, %c0_i32_1 : i32, i32, i32, i32, i32
  }
  func.func @transform_5(%arg0: i32, %arg1: i32) -> (i32, i32) {
    %c0_i32 = arith.constant 0 : i32
    %c0_i32_0 = arith.constant 0 : i32
    %c0_i32_1 = arith.constant 0 : i32
    return %c0_i32, %c0_i32_0 : i32, i32
  }
  func.func @transform_6(%arg0: i32, %arg1: i32) -> (i32, i32) {
    %c0_i32 = arith.constant 0 : i32
    %c0_i32_0 = arith.constant 0 : i32
    %c0_i32_1 = arith.constant 0 : i32
    return %c0_i32, %c0_i32_0 : i32, i32
  }
  func.func @transform_7(%arg0: i32, %arg1: i32) -> (i32, i32) {
    %c0_i32 = arith.constant 0 : i32
    %c0_i32_0 = arith.constant 0 : i32
    %c0_i32_1 = arith.constant 0 : i32
    return %c0_i32, %c0_i32_0 : i32, i32
  }
  func.func @transform_8(%arg0: i32, %arg1: i32) -> (i32, i32, i32) {
    %c0_i32 = arith.constant 0 : i32
    %c0_i32_0 = arith.constant 0 : i32
    return %arg0, %arg1, %c0_i32 : i32, i32, i32
  }
}

</mosaic_0001>

<llo_original>
// kernel: basic_block_forward.2
$region0: #{basic_block_forward.2}
  #allocation0 [shape = 'u32[]', space=smem, size = 0x4, offset = 0x4, fixed_abs, tag = 'smem constant byte address 0x4 - core index']
  #allocation1 [shape = 'u32[144,128]{1,0:T(1,128)}', space=vmem, size = 0x12000, scoped, tag = 'internal scratch']
  %s0 = inlined_call_operand.vmem [shape: bf16[2,4,9,9,4], index: 0, kind: input, shape index: {}]
  %s1 = inlined_call_operand.vmem [shape: bf16[9,4,128], index: 1, kind: input, shape index: {}]
  %s2 = inlined_call_operand.vmem [shape: f32[1,128], index: 2, kind: input, shape index: {}]
  %s3 = inlined_call_operand.vmem [shape: f32[1,128], index: 3, kind: input, shape index: {}]
  %s4 = inlined_call_operand.vmem [shape: bf16[2,64,128], index: 4, kind: output, shape index: {}]
  %s5 = sld [smem:[#allocation0]]
  $region26: #{basic_block_forward.2} parent=0
    _
  %s7 = ssub.s32 1, %s5
  %s8 = scalar_select 0, %s7, %s5
  // Predicated region
  $region2: #{basic_block_forward.2} parent=0 // pred_check
    _
  $region3: #{basic_block_forward.2} parent=0 // pred_check_branch
    %10 = sbr.rel (0) target = $region5
  $region4: #{basic_block_forward.2} parent=0 // pred_region
    _
  $region5: #{basic_block_forward.2} parent=0 // pred_fallthru
    _
  // Predicated region
  $region6: #{basic_block_forward.2} parent=0 // pred_check
    _
  $region7: #{basic_block_forward.2} parent=0 // pred_check_branch
    %12 = sbr.rel (0) target = $region9
  $region8: #{basic_block_forward.2} parent=0 // pred_region
    _
  $region9: #{basic_block_forward.2} parent=0 // pred_fallthru
    _
  // Predicated region
  $region10: #{basic_block_forward.2} parent=0 // pred_check
    _
  $region11: #{basic_block_forward.2} parent=0 // pred_check_branch
    %14 = sbr.rel (0) target = $region13
  $region12: #{basic_block_forward.2} parent=0 // pred_region
    _
  $region13: #{basic_block_forward.2} parent=0 // pred_fallthru
    _
  // Predicated region
  $region14: #{basic_block_forward.2} parent=0 // pred_check
    _
  $region15: #{basic_block_forward.2} parent=0 // pred_check_branch
    %16 = sbr.rel (0) target = $region17
  $region16: #{basic_block_forward.2} parent=0 // pred_region
    _
  $region17: #{basic_block_forward.2} parent=0 // pred_fallthru
    _
  %s18 = smul.u32 0, 8
  %s19 = smul.u32 %s18, 2
  %s20 = smul.addr %s19, 4
  %s21 = scalar_lea.vmem %s0, %s20
  %v22 = vld [vmem:[%s21] sm:$0xf]
  %v23 = vld [vmem:[%s21 + $0x8] sm:$0xf]
  %v24 = vld [vmem:[%s21 + $0x10] sm:$0xf]
  %v25 = vld [vmem:[%s21 + $0x18] sm:$0xf]
  %v26 = vld [vmem:[%s21 + $0x20] sm:$0xf]
  %v27 = vld [vmem:[%s21 + $0x28] sm:$0xf]
  %v28 = vld [vmem:[%s21 + $0x30] sm:$0xf]
  %v29 = vld [vmem:[%s21 + $0x38] sm:$0xf]
  %v30 = vld [vmem:[%s21 + $0x120] sm:$0xf]
  %v31 = vld [vmem:[%s21 + $0x128] sm:$0xf]
  %v32 = vld [vmem:[%s21 + $0x130] sm:$0xf]
  %v33 = vld [vmem:[%s21 + $0x138] sm:$0xf]
  %v34 = vld [vmem:[%s21 + $0x140] sm:$0xf]
  %v35 = vld [vmem:[%s21 + $0x148] sm:$0xf]
  %v36 = vld [vmem:[%s21 + $0x150] sm:$0xf]
  %v37 = vld [vmem:[%s21 + $0x158] sm:$0xf]
  %s38 = sadd.s32 %s19, 18
  %s39 = smul.addr %s38, 4
  %s40 = scalar_lea.vmem %s0, %s39
  %v41 = vld [vmem:[%s40] sm:$0xf]
  %v42 = vld [vmem:[%s40 + $0x8] sm:$0xf]
  %v43 = vld [vmem:[%s40 + $0x10] sm:$0xf]
  %v44 = vld [vmem:[%s40 + $0x18] sm:$0xf]
  %v45 = vld [vmem:[%s40 + $0x20] sm:$0xf]
  %v46 = vld [vmem:[%s40 + $0x28] sm:$0xf]
  %v47 = vld [vmem:[%s40 + $0x30] sm:$0xf]
  %v48 = vld [vmem:[%s40 + $0x38] sm:$0xf]
  %v49 = vld [vmem:[%s40 + $0x120] sm:$0xf]
  %v50 = vld [vmem:[%s40 + $0x128] sm:$0xf]
  %v51 = vld [vmem:[%s40 + $0x130] sm:$0xf]
  %v52 = vld [vmem:[%s40 + $0x138] sm:$0xf]
  %v53 = vld [vmem:[%s40 + $0x140] sm:$0xf]
  %v54 = vld [vmem:[%s40 + $0x148] sm:$0xf]
  %v55 = vld [vmem:[%s40 + $0x150] sm:$0xf]
  %v56 = vld [vmem:[%s40 + $0x158] sm:$0xf]
  %v57 = vld [vmem:[%s21 + $0x4] sm:$0x1]
  %v58 = vld [vmem:[%s21 + $0xc] sm:$0x1]
  %v59 = vld [vmem:[%s21 + $0x14] sm:$0x1]
  %v60 = vld [vmem:[%s21 + $0x1c] sm:$0x1]
  %v61 = vld [vmem:[%s21 + $0x24] sm:$0x1]
  %v62 = vld [vmem:[%s21 + $0x2c] sm:$0x1]
  %v63 = vld [vmem:[%s21 + $0x34] sm:$0x1]
  %v64 = vld [vmem:[%s21 + $0x3c] sm:$0x1]
  %v65 = vld [vmem:[%s21 + $0x124] sm:$0x1]
  %v66 = vld [vmem:[%s21 + $0x12c] sm:$0x1]
  %v67 = vld [vmem:[%s21 + $0x134] sm:$0x1]
  %v68 = vld [vmem:[%s21 + $0x13c] sm:$0x1]
  %v69 = vld [vmem:[%s21 + $0x144] sm:$0x1]
  %v70 = vld [vmem:[%s21 + $0x14c] sm:$0x1]
  %v71 = vld [vmem:[%s21 + $0x154] sm:$0x1]
  %v72 = vld [vmem:[%s21 + $0x15c] sm:$0x1]
  %vm73 = vsmask.f32 3328
  %vm74 = vsmask.f32 7440
  %vm75 = vmor %vm73, %vm74
  %v77 = vshrl.u32 %v22, 16
  %v79 = vrot.slane %v77, 4
  %v80 = vshll.u32 %v22, 16
  %v82 = vrot.slane %v80, 5
  %v83 = vor.u32 %v79, %v82
  %v84 = vrot.slane %v83, 4
  %v86 = vshll.u32 %v57, 16
  %v88 = vrot.slane %v86, 5
  %v89 = vsel %vm75, %v84, %v88
  %v91 = vshrl.u32 %v23, 16
  %v93 = vrot.slane %v91, 4
  %v94 = vshll.u32 %v23, 16
  %v96 = vrot.slane %v94, 5
  %v97 = vor.u32 %v93, %v96
  %v98 = vrot.slane %v97, 4
  %v100 = vshll.u32 %v58, 16
  %v102 = vrot.slane %v100, 5
  %v103 = vsel %vm75, %v98, %v102
  %v105 = vshrl.u32 %v24, 16
  %v107 = vrot.slane %v105, 4
  %v108 = vshll.u32 %v24, 16
  %v110 = vrot.slane %v108, 5
  %v111 = vor.u32 %v107, %v110
  %v112 = vrot.slane %v111, 4
  %v114 = vshll.u32 %v59, 16
  %v116 = vrot.slane %v114, 5
  %v117 = vsel %vm75, %v112, %v116
  %v119 = vshrl.u32 %v25, 16
  %v121 = vrot.slane %v119, 4
  %v122 = vshll.u32 %v25, 16
  %v124 = vrot.slane %v122, 5
  %v125 = vor.u32 %v121, %v124
  %v126 = vrot.slane %v125, 4
  %v128 = vshll.u32 %v60, 16
  %v130 = vrot.slane %v128, 5
  %v131 = vsel %vm75, %v126, %v130
  %v133 = vshrl.u32 %v26, 16
  %v135 = vrot.slane %v133, 4
  %v136 = vshll.u32 %v26, 16
  %v138 = vrot.slane %v136, 5
  %v139 = vor.u32 %v135, %v138
  %v140 = vrot.slane %v139, 4
  %v142 = vshll.u32 %v61, 16
  %v144 = vrot.slane %v142, 5
  %v145 = vsel %vm75, %v140, %v144
  %v147 = vshrl.u32 %v27, 16
  %v149 = vrot.slane %v147, 4
  %v150 = vshll.u32 %v27, 16
  %v152 = vrot.slane %v150, 5
  %v153 = vor.u32 %v149, %v152
  %v154 = vrot.slane %v153, 4
  %v156 = vshll.u32 %v62, 16
  %v158 = vrot.slane %v156, 5
  %v159 = vsel %vm75, %v154, %v158
  %v161 = vshrl.u32 %v28, 16
  %v163 = vrot.slane %v161, 4
  %v164 = vshll.u32 %v28, 16
  %v166 = vrot.slane %v164, 5
  %v167 = vor.u32 %v163, %v166
  %v168 = vrot.slane %v167, 4
  %v170 = vshll.u32 %v63, 16
  %v172 = vrot.slane %v170, 5
  %v173 = vsel %vm75, %v168, %v172
  %v175 = vshrl.u32 %v29, 16
  %v177 = vrot.slane %v175, 4
  %v178 = vshll.u32 %v29, 16
  %v180 = vrot.slane %v178, 5
  %v181 = vor.u32 %v177, %v180
  %v182 = vrot.slane %v181, 4
  %v184 = vshll.u32 %v64, 16
  %v186 = vrot.slane %v184, 5
  %v187 = vsel %vm75, %v182, %v186
  %v189 = vshrl.u32 %v30, 16
  %v191 = vrot.slane %v189, 4
  %v192 = vshll.u32 %v30, 16
  %v194 = vrot.slane %v192, 5
  %v195 = vor.u32 %v191, %v194
  %v196 = vrot.slane %v195, 4
  %v198 = vshll.u32 %v65, 16
  %v200 = vrot.slane %v198, 5
  %v201 = vsel %vm75, %v196, %v200
  %v203 = vshrl.u32 %v31, 16
  %v205 = vrot.slane %v203, 4
  %v206 = vshll.u32 %v31, 16
  %v208 = vrot.slane %v206, 5
  %v209 = vor.u32 %v205, %v208
  %v210 = vrot.slane %v209, 4
  %v212 = vshll.u32 %v66, 16
  %v214 = vrot.slane %v212, 5
  %v215 = vsel %vm75, %v210, %v214
  %v217 = vshrl.u32 %v32, 16
  %v219 = vrot.slane %v217, 4
  %v220 = vshll.u32 %v32, 16
  %v222 = vrot.slane %v220, 5
  %v223 = vor.u32 %v219, %v222
  %v224 = vrot.slane %v223, 4
  %v226 = vshll.u32 %v67, 16
  %v228 = vrot.slane %v226, 5
  %v229 = vsel %vm75, %v224, %v228
  %v231 = vshrl.u32 %v33, 16
  %v233 = vrot.slane %v231, 4
  %v234 = vshll.u32 %v33, 16
  %v236 = vrot.slane %v234, 5
  %v237 = vor.u32 %v233, %v236
  %v238 = vrot.slane %v237, 4
  %v240 = vshll.u32 %v68, 16
  %v242 = vrot.slane %v240, 5
  %v243 = vsel %vm75, %v238, %v242
  %v245 = vshrl.u32 %v34, 16
  %v247 = vrot.slane %v245, 4
  %v248 = vshll.u32 %v34, 16
  %v250 = vrot.slane %v248, 5
  %v251 = vor.u32 %v247, %v250
  %v252 = vrot.slane %v251, 4
  %v254 = vshll.u32 %v69, 16
  %v256 = vrot.slane %v254, 5
  %v257 = vsel %vm75, %v252, %v256
  %v259 = vshrl.u32 %v35, 16
  %v261 = vrot.slane %v259, 4
  %v262 = vshll.u32 %v35, 16
  %v264 = vrot.slane %v262, 5
  %v265 = vor.u32 %v261, %v264
  %v266 = vrot.slane %v265, 4
  %v268 = vshll.u32 %v70, 16
  %v270 = vrot.slane %v268, 5
  %v271 = vsel %vm75, %v266, %v270
  %v273 = vshrl.u32 %v36, 16
  %v275 = vrot.slane %v273, 4
  %v276 = vshll.u32 %v36, 16
  %v278 = vrot.slane %v276, 5
  %v279 = vor.u32 %v275, %v278
  %v280 = vrot.slane %v279, 4
  %v282 = vshll.u32 %v71, 16
  %v284 = vrot.slane %v282, 5
  %v285 = vsel %vm75, %v280, %v284
  %v287 = vshrl.u32 %v37, 16
  %v289 = vrot.slane %v287, 4
  %v290 = vshll.u32 %v37, 16
  %v292 = vrot.slane %v290, 5
  %v293 = vor.u32 %v289, %v292
  %v294 = vrot.slane %v293, 4
  %v296 = vshll.u32 %v72, 16
  %v298 = vrot.slane %v296, 5
  %v299 = vsel %vm75, %v294, %v298
  %s300 = sadd.s32 %s19, 36
  %s301 = smul.addr %s300, 4
  %s302 = scalar_lea.vmem %s0, %s301
  %v303 = vld [vmem:[%s302] sm:$0xf]
  %v304 = vld [vmem:[%s302 + $0x8] sm:$0xf]
  %v305 = vld [vmem:[%s302 + $0x10] sm:$0xf]
  %v306 = vld [vmem:[%s302 + $0x18] sm:$0xf]
  %v307 = vld [vmem:[%s302 + $0x20] sm:$0xf]
  %v308 = vld [vmem:[%s302 + $0x28] sm:$0xf]
  %v309 = vld [vmem:[%s302 + $0x30] sm:$0xf]
  %v310 = vld [vmem:[%s302 + $0x38] sm:$0xf]
  %v311 = vld [vmem:[%s302 + $0x120] sm:$0xf]
  %v312 = vld [vmem:[%s302 + $0x128] sm:$0xf]
  %v313 = vld [vmem:[%s302 + $0x130] sm:$0xf]
  %v314 = vld [vmem:[%s302 + $0x138] sm:$0xf]
  %v315 = vld [vmem:[%s302 + $0x140] sm:$0xf]
  %v316 = vld [vmem:[%s302 + $0x148] sm:$0xf]
  %v317 = vld [vmem:[%s302 + $0x150] sm:$0xf]
  %v318 = vld [vmem:[%s302 + $0x158] sm:$0xf]
  %s319 = sadd.s32 %s19, 54
  %s320 = smul.addr %s319, 4
  %s321 = scalar_lea.vmem %s0, %s320
  %v322 = vld [vmem:[%s321] sm:$0xf]
  %v323 = vld [vmem:[%s321 + $0x8] sm:$0xf]
  %v324 = vld [vmem:[%s321 + $0x10] sm:$0xf]
  %v325 = vld [vmem:[%s321 + $0x18] sm:$0xf]
  %v326 = vld [vmem:[%s321 + $0x20] sm:$0xf]
  %v327 = vld [vmem:[%s321 + $0x28] sm:$0xf]
  %v328 = vld [vmem:[%s321 + $0x30] sm:$0xf]
  %v329 = vld [vmem:[%s321 + $0x38] sm:$0xf]
  %v330 = vld [vmem:[%s321 + $0x120] sm:$0xf]
  %v331 = vld [vmem:[%s321 + $0x128] sm:$0xf]
  %v332 = vld [vmem:[%s321 + $0x130] sm:$0xf]
  %v333 = vld [vmem:[%s321 + $0x138] sm:$0xf]
  %v334 = vld [vmem:[%s321 + $0x140] sm:$0xf]
  %v335 = vld [vmem:[%s321 + $0x148] sm:$0xf]
  %v336 = vld [vmem:[%s321 + $0x150] sm:$0xf]
  %v337 = vld [vmem:[%s321 + $0x158] sm:$0xf]
  %v338 = vld [vmem:[%s302 + $0x4] sm:$0x1]
  %v339 = vld [vmem:[%s302 + $0xc] sm:$0x1]
  %v340 = vld [vmem:[%s302 + $0x14] sm:$0x1]
  %v341 = vld [vmem:[%s302 + $0x1c] sm:$0x1]
  %v342 = vld [vmem:[%s302 + $0x24] sm:$0x1]
  %v343 = vld [vmem:[%s302 + $0x2c] sm:$0x1]
  %v344 = vld [vmem:[%s302 + $0x34] sm:$0x1]
  %v345 = vld [vmem:[%s302 + $0x3c] sm:$0x1]
  %v346 = vld [vmem:[%s302 + $0x124] sm:$0x1]
  %v347 = vld [vmem:[%s302 + $0x12c] sm:$0x1]
  %v348 = vld [vmem:[%s302 + $0x134] sm:$0x1]
  %v349 = vld [vmem:[%s302 + $0x13c] sm:$0x1]
  %v350 = vld [vmem:[%s302 + $0x144] sm:$0x1]
  %v351 = vld [vmem:[%s302 + $0x14c] sm:$0x1]
  %v352 = vld [vmem:[%s302 + $0x154] sm:$0x1]
  %v353 = vld [vmem:[%s302 + $0x15c] sm:$0x1]
  %v355 = vshrl.u32 %v303, 16
  %v357 = vrot.slane %v355, 4
  %v358 = vshll.u32 %v303, 16
  %v360 = vrot.slane %v358, 5
  %v361 = vor.u32 %v357, %v360
  %v362 = vrot.slane %v361, 4
  %v364 = vshll.u32 %v338, 16
  %v366 = vrot.slane %v364, 5
  %v367 = vsel %vm75, %v362, %v366
  %v369 = vshrl.u32 %v304, 16
  %v371 = vrot.slane %v369, 4
  %v372 = vshll.u32 %v304, 16
  %v374 = vrot.slane %v372, 5
  %v375 = vor.u32 %v371, %v374
  %v376 = vrot.slane %v375, 4
  %v378 = vshll.u32 %v339, 16
  %v380 = vrot.slane %v378, 5
  %v381 = vsel %vm75, %v376, %v380
  %v383 = vshrl.u32 %v305, 16
  %v385 = vrot.slane %v383, 4
  %v386 = vshll.u32 %v305, 16
  %v388 = vrot.slane %v386, 5
  %v389 = vor.u32 %v385, %v388
  %v390 = vrot.slane %v389, 4
  %v392 = vshll.u32 %v340, 16
  %v394 = vrot.slane %v392, 5
  %v395 = vsel %vm75, %v390, %v394
  %v397 = vshrl.u32 %v306, 16
  %v399 = vrot.slane %v397, 4
  %v400 = vshll.u32 %v306, 16
  %v402 = vrot.slane %v400, 5
  %v403 = vor.u32 %v399, %v402
  %v404 = vrot.slane %v403, 4
  %v406 = vshll.u32 %v341, 16
  %v408 = vrot.slane %v406, 5
  %v409 = vsel %vm75, %v404, %v408
  %v411 = vshrl.u32 %v307, 16
  %v413 = vrot.slane %v411, 4
  %v414 = vshll.u32 %v307, 16
  %v416 = vrot.slane %v414, 5
  %v417 = vor.u32 %v413, %v416
  %v418 = vrot.slane %v417, 4
  %v420 = vshll.u32 %v342, 16
  %v422 = vrot.slane %v420, 5
  %v423 = vsel %vm75, %v418, %v422
  %v425 = vshrl.u32 %v308, 16
  %v427 = vrot.slane %v425, 4
  %v428 = vshll.u32 %v308, 16
  %v430 = vrot.slane %v428, 5
  %v431 = vor.u32 %v427, %v430
  %v432 = vrot.slane %v431, 4
  %v434 = vshll.u32 %v343, 16
  %v436 = vrot.slane %v434, 5
  %v437 = vsel %vm75, %v432, %v436
  %v439 = vshrl.u32 %v309, 16
  %v441 = vrot.slane %v439, 4
  %v442 = vshll.u32 %v309, 16
  %v444 = vrot.slane %v442, 5
  %v445 = vor.u32 %v441, %v444
  %v446 = vrot.slane %v445, 4
  %v448 = vshll.u32 %v344, 16
  %v450 = vrot.slane %v448, 5
  %v451 = vsel %vm75, %v446, %v450
  %v453 = vshrl.u32 %v310, 16
  %v455 = vrot.slane %v453, 4
  %v456 = vshll.u32 %v310, 16
  %v458 = vrot.slane %v456, 5
  %v459 = vor.u32 %v455, %v458
  %v460 = vrot.slane %v459, 4
  %v462 = vshll.u32 %v345, 16
  %v464 = vrot.slane %v462, 5
  %v465 = vsel %vm75, %v460, %v464
  %v467 = vshrl.u32 %v311, 16
  %v469 = vrot.slane %v467, 4
  %v470 = vshll.u32 %v311, 16
  %v472 = vrot.slane %v470, 5
  %v473 = vor.u32 %v469, %v472
  %v474 = vrot.slane %v473, 4
  %v476 = vshll.u32 %v346, 16
  %v478 = vrot.slane %v476, 5
  %v479 = vsel %vm75, %v474, %v478
  %v481 = vshrl.u32 %v312, 16
  %v483 = vrot.slane %v481, 4
  %v484 = vshll.u32 %v312, 16
  %v486 = vrot.slane %v484, 5
  %v487 = vor.u32 %v483, %v486
  %v488 = vrot.slane %v487, 4
  %v490 = vshll.u32 %v347, 16
  %v492 = vrot.slane %v490, 5
  %v493 = vsel %vm75, %v488, %v492
  %v495 = vshrl.u32 %v313, 16
  %v497 = vrot.slane %v495, 4
  %v498 = vshll.u32 %v313, 16
  %v500 = vrot.slane %v498, 5
  %v501 = vor.u32 %v497, %v500
  %v502 = vrot.slane %v501, 4
  %v504 = vshll.u32 %v348, 16
  %v506 = vrot.slane %v504, 5
  %v507 = vsel %vm75, %v502, %v506
  %v509 = vshrl.u32 %v314, 16
  %v511 = vrot.slane %v509, 4
  %v512 = vshll.u32 %v314, 16
  %v514 = vrot.slane %v512, 5
  %v515 = vor.u32 %v511, %v514
  %v516 = vrot.slane %v515, 4
  %v518 = vshll.u32 %v349, 16
  %v520 = vrot.slane %v518, 5
  %v521 = vsel %vm75, %v516, %v520
  %v523 = vshrl.u32 %v315, 16
  %v525 = vrot.slane %v523, 4
  %v526 = vshll.u32 %v315, 16
  %v528 = vrot.slane %v526, 5
  %v529 = vor.u32 %v525, %v528
  %v530 = vrot.slane %v529, 4
  %v532 = vshll.u32 %v350, 16
  %v534 = vrot.slane %v532, 5
  %v535 = vsel %vm75, %v530, %v534
  %v537 = vshrl.u32 %v316, 16
  %v539 = vrot.slane %v537, 4
  %v540 = vshll.u32 %v316, 16
  %v542 = vrot.slane %v540, 5
  %v543 = vor.u32 %v539, %v542
  %v544 = vrot.slane %v543, 4
  %v546 = vshll.u32 %v351, 16
  %v548 = vrot.slane %v546, 5
  %v549 = vsel %vm75, %v544, %v548
  %v551 = vshrl.u32 %v317, 16
  %v553 = vrot.slane %v551, 4
  %v554 = vshll.u32 %v317, 16
  %v556 = vrot.slane %v554, 5
  %v557 = vor.u32 %v553, %v556
  %v558 = vrot.slane %v557, 4
  %v560 = vshll.u32 %v352, 16
  %v562 = vrot.slane %v560, 5
  %v563 = vsel %vm75, %v558, %v562
  %v565 = vshrl.u32 %v318, 16
  %v567 = vrot.slane %v565, 4
  %v568 = vshll.u32 %v318, 16
  %v570 = vrot.slane %v568, 5
  %v571 = vor.u32 %v567, %v570
  %v572 = vrot.slane %v571, 4
  %v574 = vshll.u32 %v353, 16
  %v576 = vrot.slane %v574, 5
  %v577 = vsel %vm75, %v572, %v576
  %s578 = sadd.s32 %s18, 1
  %s579 = smul.u32 %s578, 2
  %s580 = smul.addr %s579, 4
  %s581 = scalar_lea.vmem %s0, %s580
  %v582 = vld [vmem:[%s581] sm:$0xf]
  %v583 = vld [vmem:[%s581 + $0x8] sm:$0xf]
  %v584 = vld [vmem:[%s581 + $0x10] sm:$0xf]
  %v585 = vld [vmem:[%s581 + $0x18] sm:$0xf]
  %v586 = vld [vmem:[%s581 + $0x20] sm:$0xf]
  %v587 = vld [vmem:[%s581 + $0x28] sm:$0xf]
  %v588 = vld [vmem:[%s581 + $0x30] sm:$0xf]
  %v589 = vld [vmem:[%s581 + $0x38] sm:$0xf]
  %v590 = vld [vmem:[%s581 + $0x120] sm:$0xf]
  %v591 = vld [vmem:[%s581 + $0x128] sm:$0xf]
  %v592 = vld [vmem:[%s581 + $0x130] sm:$0xf]
  %v593 = vld [vmem:[%s581 + $0x138] sm:$0xf]
  %v594 = vld [vmem:[%s581 + $0x140] sm:$0xf]
  %v595 = vld [vmem:[%s581 + $0x148] sm:$0xf]
  %v596 = vld [vmem:[%s581 + $0x150] sm:$0xf]
  %v597 = vld [vmem:[%s581 + $0x158] sm:$0xf]
  %s598 = sadd.s32 %s579, 18
  %s599 = smul.addr %s598, 4
  %s600 = scalar_lea.vmem %s0, %s599
  %v601 = vld [vmem:[%s600] sm:$0xf]
  %v602 = vld [vmem:[%s600 + $0x8] sm:$0xf]
  %v603 = vld [vmem:[%s600 + $0x10] sm:$0xf]
  %v604 = vld [vmem:[%s600 + $0x18] sm:$0xf]
  %v605 = vld [vmem:[%s600 + $0x20] sm:$0xf]
  %v606 = vld [vmem:[%s600 + $0x28] sm:$0xf]
  %v607 = vld [vmem:[%s600 + $0x30] sm:$0xf]
  %v608 = vld [vmem:[%s600 + $0x38] sm:$0xf]
  %v609 = vld [vmem:[%s600 + $0x120] sm:$0xf]
  %v610 = vld [vmem:[%s600 + $0x128] sm:$0xf]
  %v611 = vld [vmem:[%s600 + $0x130] sm:$0xf]
  %v612 = vld [vmem:[%s600 + $0x138] sm:$0xf]
  %v613 = vld [vmem:[%s600 + $0x140] sm:$0xf]
  %v614 = vld [vmem:[%s600 + $0x148] sm:$0xf]
  %v615 = vld [vmem:[%s600 + $0x150] sm:$0xf]
  %v616 = vld [vmem:[%s600 + $0x158] sm:$0xf]
  %v617 = vld [vmem:[%s581 + $0x4] sm:$0x1]
  %v618 = vld [vmem:[%s581 + $0xc] sm:$0x1]
  %v619 = vld [vmem:[%s581 + $0x14] sm:$0x1]
  %v620 = vld [vmem:[%s581 + $0x1c] sm:$0x1]
  %v621 = vld [vmem:[%s581 + $0x24] sm:$0x1]
  %v622 = vld [vmem:[%s581 + $0x2c] sm:$0x1]
  %v623 = vld [vmem:[%s581 + $0x34] sm:$0x1]
  %v624 = vld [vmem:[%s581 + $0x3c] sm:$0x1]
  %v625 = vld [vmem:[%s581 + $0x124] sm:$0x1]
  %v626 = vld [vmem:[%s581 + $0x12c] sm:$0x1]
  %v627 = vld [vmem:[%s581 + $0x134] sm:$0x1]
  %v628 = vld [vmem:[%s581 + $0x13c] sm:$0x1]
  %v629 = vld [vmem:[%s581 + $0x144] sm:$0x1]
  %v630 = vld [vmem:[%s581 + $0x14c] sm:$0x1]
  %v631 = vld [vmem:[%s581 + $0x154] sm:$0x1]
  %v632 = vld [vmem:[%s581 + $0x15c] sm:$0x1]
  %v634 = vshrl.u32 %v582, 16
  %v636 = vrot.slane %v634, 4
  %v637 = vshll.u32 %v582, 16
  %v639 = vrot.slane %v637, 5
  %v640 = vor.u32 %v636, %v639
  %v641 = vrot.slane %v640, 4
  %v643 = vshll.u32 %v617, 16
  %v645 = vrot.slane %v643, 5
  %v646 = vsel %vm75, %v641, %v645
  %v648 = vshrl.u32 %v583, 16
  %v650 = vrot.slane %v648, 4
  %v651 = vshll.u32 %v583, 16
  %v653 = vrot.slane %v651, 5
  %v654 = vor.u32 %v650, %v653
  %v655 = vrot.slane %v654, 4
  %v657 = vshll.u32 %v618, 16
  %v659 = vrot.slane %v657, 5
  %v660 = vsel %vm75, %v655, %v659
  %v662 = vshrl.u32 %v584, 16
  %v664 = vrot.slane %v662, 4
  %v665 = vshll.u32 %v584, 16
  %v667 = vrot.slane %v665, 5
  %v668 = vor.u32 %v664, %v667
  %v669 = vrot.slane %v668, 4
  %v671 = vshll.u32 %v619, 16
  %v673 = vrot.slane %v671, 5
  %v674 = vsel %vm75, %v669, %v673
  %v676 = vshrl.u32 %v585, 16
  %v678 = vrot.slane %v676, 4
  %v679 = vshll.u32 %v585, 16
  %v681 = vrot.slane %v679, 5
  %v682 = vor.u32 %v678, %v681
  %v683 = vrot.slane %v682, 4
  %v685 = vshll.u32 %v620, 16
  %v687 = vrot.slane %v685, 5
  %v688 = vsel %vm75, %v683, %v687
  %v690 = vshrl.u32 %v586, 16
  %v692 = vrot.slane %v690, 4
  %v693 = vshll.u32 %v586, 16
  %v695 = vrot.slane %v693, 5
  %v696 = vor.u32 %v692, %v695
  %v697 = vrot.slane %v696, 4
  %v699 = vshll.u32 %v621, 16
  %v701 = vrot.slane %v699, 5
  %v702 = vsel %vm75, %v697, %v701
  %v704 = vshrl.u32 %v587, 16
  %v706 = vrot.slane %v704, 4
  %v707 = vshll.u32 %v587, 16
  %v709 = vrot.slane %v707, 5
  %v710 = vor.u32 %v706, %v709
  %v711 = vrot.slane %v710, 4
  %v713 = vshll.u32 %v622, 16
  %v715 = vrot.slane %v713, 5
  %v716 = vsel %vm75, %v711, %v715
  %v718 = vshrl.u32 %v588, 16
  %v720 = vrot.slane %v718, 4
  %v721 = vshll.u32 %v588, 16
  %v723 = vrot.slane %v721, 5
  %v724 = vor.u32 %v720, %v723
  %v725 = vrot.slane %v724, 4
  %v727 = vshll.u32 %v623, 16
  %v729 = vrot.slane %v727, 5
  %v730 = vsel %vm75, %v725, %v729
  %v732 = vshrl.u32 %v589, 16
  %v734 = vrot.slane %v732, 4
  %v735 = vshll.u32 %v589, 16
  %v737 = vrot.slane %v735, 5
  %v738 = vor.u32 %v734, %v737
  %v739 = vrot.slane %v738, 4
  %v741 = vshll.u32 %v624, 16
  %v743 = vrot.slane %v741, 5
  %v744 = vsel %vm75, %v739, %v743
  %v746 = vshrl.u32 %v590, 16
  %v748 = vrot.slane %v746, 4
  %v749 = vshll.u32 %v590, 16
  %v751 = vrot.slane %v749, 5
  %v752 = vor.u32 %v748, %v751
  %v753 = vrot.slane %v752, 4
  %v755 = vshll.u32 %v625, 16
  %v757 = vrot.slane %v755, 5
  %v758 = vsel %vm75, %v753, %v757
  %v760 = vshrl.u32 %v591, 16
  %v762 = vrot.slane %v760, 4
  %v763 = vshll.u32 %v591, 16
  %v765 = vrot.slane %v763, 5
  %v766 = vor.u32 %v762, %v765
  %v767 = vrot.slane %v766, 4
  %v769 = vshll.u32 %v626, 16
  %v771 = vrot.slane %v769, 5
  %v772 = vsel %vm75, %v767, %v771
  %v774 = vshrl.u32 %v592, 16
  %v776 = vrot.slane %v774, 4
  %v777 = vshll.u32 %v592, 16
  %v779 = vrot.slane %v777, 5
  %v780 = vor.u32 %v776, %v779
  %v781 = vrot.slane %v780, 4
  %v783 = vshll.u32 %v627, 16
  %v785 = vrot.slane %v783, 5
  %v786 = vsel %vm75, %v781, %v785
  %v788 = vshrl.u32 %v593, 16
  %v790 = vrot.slane %v788, 4
  %v791 = vshll.u32 %v593, 16
  %v793 = vrot.slane %v791, 5
  %v794 = vor.u32 %v790, %v793
  %v795 = vrot.slane %v794, 4
  %v797 = vshll.u32 %v628, 16
  %v799 = vrot.slane %v797, 5
  %v800 = vsel %vm75, %v795, %v799
  %v802 = vshrl.u32 %v594, 16
  %v804 = vrot.slane %v802, 4
  %v805 = vshll.u32 %v594, 16
  %v807 = vrot.slane %v805, 5
  %v808 = vor.u32 %v804, %v807
  %v809 = vrot.slane %v808, 4
  %v811 = vshll.u32 %v629, 16
  %v813 = vrot.slane %v811, 5
  %v814 = vsel %vm75, %v809, %v813
  %v816 = vshrl.u32 %v595, 16
  %v818 = vrot.slane %v816, 4
  %v819 = vshll.u32 %v595, 16
  %v821 = vrot.slane %v819, 5
  %v822 = vor.u32 %v818, %v821
  %v823 = vrot.slane %v822, 4
  %v825 = vshll.u32 %v630, 16
  %v827 = vrot.slane %v825, 5
  %v828 = vsel %vm75, %v823, %v827
  %v830 = vshrl.u32 %v596, 16
  %v832 = vrot.slane %v830, 4
  %v833 = vshll.u32 %v596, 16
  %v835 = vrot.slane %v833, 5
  %v836 = vor.u32 %v832, %v835
  %v837 = vrot.slane %v836, 4
  %v839 = vshll.u32 %v631, 16
  %v841 = vrot.slane %v839, 5
  %v842 = vsel %vm75, %v837, %v841
  %v844 = vshrl.u32 %v597, 16
  %v846 = vrot.slane %v844, 4
  %v847 = vshll.u32 %v597, 16
  %v849 = vrot.slane %v847, 5
  %v850 = vor.u32 %v846, %v849
  %v851 = vrot.slane %v850, 4
  %v853 = vshll.u32 %v632, 16
  %v855 = vrot.slane %v853, 5
  %v856 = vsel %vm75, %v851, %v855
  %v857 = vld [vmem:[%s1] sm:$0x3]
  %s858 = scalar_lea.vmem %s1, 2
  %v859 = vld [vmem:[%s858] sm:$0x3]
  %v876 = vunpack.c.l.b16 %v41
  %v877 = vunpack.c.l.b16 %v42
  %v878 = vunpack.c.l.b16 %v43
  %v879 = vunpack.c.l.b16 %v44
  %v880 = vunpack.c.l.b16 %v45
  %v881 = vunpack.c.l.b16 %v46
  %v882 = vunpack.c.l.b16 %v47
  %v883 = vunpack.c.l.b16 %v48
  %v884 = vunpack.c.l.b16 %v49
  %v885 = vunpack.c.l.b16 %v50
  %v886 = vunpack.c.l.b16 %v51
  %v887 = vunpack.c.l.b16 %v52
  %v888 = vunpack.c.l.b16 %v53
  %v889 = vunpack.c.l.b16 %v54
  %v890 = vunpack.c.l.b16 %v55
  %v891 = vunpack.c.l.b16 %v56
  %v892 = vpack.c.b16 %v877, %v876
  %v893 = vpack.c.b16 %v879, %v878
  %v894 = vpack.c.b16 %v881, %v880
  %v895 = vpack.c.b16 %v883, %v882
  %v896 = vpack.c.b16 %v885, %v884
  %v897 = vpack.c.b16 %v887, %v886
  %v898 = vpack.c.b16 %v889, %v888
  %v899 = vpack.c.b16 %v891, %v890
  %vm900 = vcmask 31744
  %v902 = vsel %vm900, %v892, 0
  %v905 = vsel %vm900, %v893, 0
  %v908 = vsel %vm900, %v894, 0
  %v911 = vsel %vm900, %v895, 0
  %v914 = vsel %vm900, %v896, 0
  %v917 = vsel %vm900, %v897, 0
  %v920 = vsel %vm900, %v898, 0
  %v923 = vsel %vm900, %v899, 0
  %vm925 = vcmask 1041408
  %v927 = vsel %vm925, %v859, 0
  %929 = vmatprep.subr.bf16.mxu0 0
  %930 = vmatpush1.bf16.msra.mxu0 %v927
  %931 = vmatprep.subr.bf16.mxu0 0
  %932 = vmatpush1.bf16.msra.mxu0 0
  %933 = vmatprep.subr.bf16.mxu0 0
  %934 = vmatpush1.bf16.msra.mxu0 0
  %935 = vmatprep.subr.bf16.mxu0 0
  %936 = vmatpush1.bf16.msra.mxu0 0
  %937 = vmatprep.subr.bf16.mxu0 0
  %938 = vmatpush1.bf16.msra.mxu0 0
  %939 = vmatprep.subr.bf16.mxu0 0
  %940 = vmatpush1.bf16.msra.mxu0 0
  %941 = vmatprep.subr.bf16.mxu0 0
  %942 = vmatpush1.bf16.msra.mxu0 0
  %943 = vmatprep.subr.bf16.mxu0 0
  %944 = vmatpush1.bf16.msra.mxu0 0
  %945 = vmatprep.subr.bf16.mxu0 0
  %946 = vmatpush1.bf16.msra.mxu0 0
  %947 = vmatprep.subr.bf16.mxu0 0
  %948 = vmatpush1.bf16.msra.mxu0 0
  %949 = vmatprep.subr.bf16.mxu0 0
  %950 = vmatpush1.bf16.msra.mxu0 0
  %951 = vmatprep.subr.bf16.mxu0 0
  %952 = vmatpush1.bf16.msra.mxu0 0
  %953 = vmatprep.subr.bf16.mxu0 0
  %954 = vmatpush1.bf16.msra.mxu0 0
  %955 = vmatprep.subr.bf16.mxu0 0
  %956 = vmatpush1.bf16.msra.mxu0 0
  %957 = vmatprep.subr.bf16.mxu0 0
  %958 = vmatpush1.bf16.msra.mxu0 0
  %959 = vmatprep.subr.bf16.mxu0 0
  %960 = vmatpush1.bf16.msra.mxu0 0
  %961 = vmatprep.mubr.bf16.mxu0 0
  %962 = vmatmul.mubr.bf16.gmra.mrb[0].mxu0 %v902
  %v963 = vpop.f32.mrb[0].mxu0
  %v964 = vadd.f32 0.0, %v963
  %v965 = vpop.f32.mrb[0].mxu0
  %v966 = vpop.f32.mrb[0].mxu0
  %v967 = vadd.f32 0.0, %v966
  %v968 = vpop.f32.mrb[0].mxu0
  %969 = vmatprep.mubr.bf16.mxu0 0
  %970 = vmatmul.mubr.bf16.gmra.mrb[0].mxu0 %v905
  %v971 = vpop.f32.mrb[0].mxu0
  %v972 = vadd.f32 0.0, %v971
  %v973 = vpop.f32.mrb[0].mxu0
  %v974 = vpop.f32.mrb[0].mxu0
  %v975 = vadd.f32 0.0, %v974
  %v976 = vpop.f32.mrb[0].mxu0
  %977 = vmatprep.mubr.bf16.mxu0 0
  %978 = vmatmul.mubr.bf16.gmra.mrb[0].mxu0 %v908
  %v979 = vpop.f32.mrb[0].mxu0
  %v980 = vadd.f32 0.0, %v979
  %v981 = vpop.f32.mrb[0].mxu0
  %v982 = vpop.f32.mrb[0].mxu0
  %v983 = vadd.f32 0.0, %v982
  %v984 = vpop.f32.mrb[0].mxu0
  %985 = vmatprep.mubr.bf16.mxu0 0
  %986 = vmatmul.mubr.bf16.gmra.mrb[0].mxu0 %v911
  %v987 = vpop.f32.mrb[0].mxu0
  %v988 = vadd.f32 0.0, %v987
  %v989 = vpop.f32.mrb[0].mxu0
  %v990 = vpop.f32.mrb[0].mxu0
  %v991 = vadd.f32 0.0, %v990
  %v992 = vpop.f32.mrb[0].mxu0
  %993 = vmatprep.mubr.bf16.mxu0 0
  %994 = vmatmul.mubr.bf16.gmra.mrb[0].mxu0 %v914
  %v995 = vpop.f32.mrb[0].mxu0
  %v996 = vadd.f32 0.0, %v995
  %v997 = vpop.f32.mrb[0].mxu0
  %v998 = vpop.f32.mrb[0].mxu0
  %v999 = vadd.f32 0.0, %v998
  %v1000 = vpop.f32.mrb[0].mxu0
  %1001 = vmatprep.mubr.bf16.mxu0 0
  %1002 = vmatmul.mubr.bf16.gmra.mrb[0].mxu0 %v917
  %v1003 = vpop.f32.mrb[0].mxu0
  %v1004 = vadd.f32 0.0, %v1003
  %v1005 = vpop.f32.mrb[0].mxu0
  %v1006 = vpop.f32.mrb[0].mxu0
  %v1007 = vadd.f32 0.0, %v1006
  %v1008 = vpop.f32.mrb[0].mxu0
  %1009 = vmatprep.mubr.bf16.mxu0 0
  %1010 = vmatmul.mubr.bf16.gmra.mrb[0].mxu0 %v920
  %v1011 = vpop.f32.mrb[0].mxu0
  %v1012 = vadd.f32 0.0, %v1011
  %v1013 = vpop.f32.mrb[0].mxu0
  %v1014 = vpop.f32.mrb[0].mxu0
  %v1015 = vadd.f32 0.0, %v1014
  %v1016 = vpop.f32.mrb[0].mxu0
  %1017 = vmatprep.mubr.bf16.mxu0 0
  %1018 = vmatmul.mubr.bf16.gmra.mrb[0].mxu0 %v923
  %v1019 = vpop.f32.mrb[0].mxu0
  %v1020 = vadd.f32 0.0, %v1019
  %v1021 = vpop.f32.mrb[0].mxu0
  %v1022 = vpop.f32.mrb[0].mxu0
  %v1023 = vadd.f32 0.0, %v1022
  %v1024 = vpop.f32.mrb[0].mxu0
  %1025 = vdwg.mxu0
  %v1042 = vunpack.c.l.b16 %v22
  %v1043 = vunpack.c.l.b16 %v23
  %v1044 = vunpack.c.l.b16 %v24
  %v1045 = vunpack.c.l.b16 %v25
  %v1046 = vunpack.c.l.b16 %v26
  %v1047 = vunpack.c.l.b16 %v27
  %v1048 = vunpack.c.l.b16 %v28
  %v1049 = vunpack.c.l.b16 %v29
  %v1050 = vunpack.c.l.b16 %v30
  %v1051 = vunpack.c.l.b16 %v31
  %v1052 = vunpack.c.l.b16 %v32
  %v1053 = vunpack.c.l.b16 %v33
  %v1054 = vunpack.c.l.b16 %v34
  %v1055 = vunpack.c.l.b16 %v35
  %v1056 = vunpack.c.l.b16 %v36
  %v1057 = vunpack.c.l.b16 %v37
  %v1058 = vpack.c.b16 %v1043, %v1042
  %v1059 = vpack.c.b16 %v1045, %v1044
  %v1060 = vpack.c.b16 %v1047, %v1046
  %v1061 = vpack.c.b16 %v1049, %v1048
  %v1062 = vpack.c.b16 %v1051, %v1050
  %v1063 = vpack.c.b16 %v1053, %v1052
  %v1064 = vpack.c.b16 %v1055, %v1054
  %v1065 = vpack.c.b16 %v1057, %v1056
  %v1067 = vsel %vm900, %v1058, 0
  %v1070 = vsel %vm900, %v1059, 0
  %v1073 = vsel %vm900, %v1060, 0
  %v1076 = vsel %vm900, %v1061, 0
  %v1079 = vsel %vm900, %v1062, 0
  %v1082 = vsel %vm900, %v1063, 0
  %v1085 = vsel %vm900, %v1064, 0
  %v1088 = vsel %vm900, %v1065, 0
  %v1091 = vsel %vm925, %v857, 0
  %1093 = vmatprep.subr.bf16.mxu0 0
  %1094 = vmatpush1.bf16.msra.mxu0 %v1091
  %1095 = vmatprep.subr.bf16.mxu0 0
  %1096 = vmatpush1.bf16.msra.mxu0 0
  %1097 = vmatprep.subr.bf16.mxu0 0
  %1098 = vmatpush1.bf16.msra.mxu0 0
  %1099 = vmatprep.subr.bf16.mxu0 0
  %1100 = vmatpush1.bf16.msra.mxu0 0
  %1101 = vmatprep.subr.bf16.mxu0 0
  %1102 = vmatpush1.bf16.msra.mxu0 0
  %1103 = vmatprep.subr.bf16.mxu0 0
  %1104 = vmatpush1.bf16.msra.mxu0 0
  %1105 = vmatprep.subr.bf16.mxu0 0
  %1106 = vmatpush1.bf16.msra.mxu0 0
  %1107 = vmatprep.subr.bf16.mxu0 0
  %1108 = vmatpush1.bf16.msra.mxu0 0
  %1109 = vmatprep.subr.bf16.mxu0 0
  %1110 = vmatpush1.bf16.msra.mxu0 0
  %1111 = vmatprep.subr.bf16.mxu0 0
  %1112 = vmatpush1.bf16.msra.mxu0 0
  %1113 = vmatprep.subr.bf16.mxu0 0
  %1114 = vmatpush1.bf16.msra.mxu0 0
  %1115 = vmatprep.subr.bf16.mxu0 0
  %1116 = vmatpush1.bf16.msra.mxu0 0
  %1117 = vmatprep.subr.bf16.mxu0 0
  %1118 = vmatpush1.bf16.msra.mxu0 0
  %1119 = vmatprep.subr.bf16.mxu0 0
  %1120 = vmatpush1.bf16.msra.mxu0 0
  %1121 = vmatprep.subr.bf16.mxu0 0
  %1122 = vmatpush1.bf16.msra.mxu0 0
  %1123 = vmatprep.subr.bf16.mxu0 0
  %1124 = vmatpush1.bf16.msra.mxu0 0
  %1125 = vmatprep.mubr.bf16.mxu0 0
  %1126 = vmatmul.mubr.bf16.gmra.mrb[0].mxu0 %v1067
  %v1127 = vpop.f32.mrb[0].mxu0
  %v1128 = vadd.f32 %v964, %v1127
  %v1129 = vpop.f32.mrb[0].mxu0
  %v1130 = vpop.f32.mrb[0].mxu0
  %v1131 = vadd.f32 %v967, %v1130
  %v1132 = vpop.f32.mrb[0].mxu0
  %1133 = vmatprep.mubr.bf16.mxu0 0
  %1134 = vmatmul.mubr.bf16.gmra.mrb[0].mxu0 %v1070
  %v1135 = vpop.f32.mrb[0].mxu0
  %v1136 = vadd.f32 %v972, %v1135
  %v1137 = vpop.f32.mrb[0].mxu0
  %v1138 = vpop.f32.mrb[0].mxu0
  %v1139 = vadd.f32 %v975, %v1138
  %v1140 = vpop.f32.mrb[0].mxu0
  %1141 = vmatprep.mubr.bf16.mxu0 0
  %1142 = vmatmul.mubr.bf16.gmra.mrb[0].mxu0 %v1073
  %v1143 = vpop.f32.mrb[0].mxu0
  %v1144 = vadd.f32 %v980, %v1143
  %v1145 = vpop.f32.mrb[0].mxu0
  %v1146 = vpop.f32.mrb[0].mxu0
  %v1147 = vadd.f32 %v983, %v1146
  %v1148 = vpop.f32.mrb[0].mxu0
  %1149 = vmatprep.mubr.bf16.mxu0 0
  %1150 = vmatmul.mubr.bf16.gmra.mrb[0].mxu0 %v1076
  %v1151 = vpop.f32.mrb[0].mxu0
  %v1152 = vadd.f32 %v988, %v1151
  %v1153 = vpop.f32.mrb[0].mxu0
  %v1154 = vpop.f32.mrb[0].mxu0
  %v1155 = vadd.f32 %v991, %v1154
  %v1156 = vpop.f32.mrb[0].mxu0
  %1157 = vmatprep.mubr.bf16.mxu0 0
  %1158 = vmatmul.mubr.bf16.gmra.mrb[0].mxu0 %v1079
  %v1159 = vpop.f32.mrb[0].mxu0
  %v1160 = vadd.f32 %v996, %v1159
  %v1161 = vpop.f32.mrb[0].mxu0
  %v1162 = vpop.f32.mrb[0].mxu0
  %v1163 = vadd.f32 %v999, %v1162
  %v1164 = vpop.f32.mrb[0].mxu0
  %1165 = vmatprep.mubr.bf16.mxu0 0
  %1166 = vmatmul.mubr.bf16.gmra.mrb[0].mxu0 %v1082
  %v1167 = vpop.f32.mrb[0].mxu0
  %v1168 = vadd.f32 %v1004, %v1167
  %v1169 = vpop.f32.mrb[0].mxu0
  %v1170 = vpop.f32.mrb[0].mxu0
  %v1171 = vadd.f32 %v1007, %v1170
  %v1172 = vpop.f32.mrb[0].mxu0
  %1173 = vmatprep.mubr.bf16.mxu0 0
  %1174 = vmatmul.mubr.bf16.gmra.mrb[0].mxu0 %v1085
  %v1175 = vpop.f32.mrb[0].mxu0
  %v1176 = vadd.f32 %v1012, %v1175
  %v1177 = vpop.f32.mrb[0].mxu0
  %v1178 = vpop.f32.mrb[0].mxu0
  %v1179 = vadd.f32 %v1015, %v1178
  %v1180 = vpop.f32.mrb[0].mxu0
  %1181 = vmatprep.mubr.bf16.mxu0 0
  %1182 = vmatmul.mubr.bf16.gmra.mrb[0].mxu0 %v1088
  %v1183 = vpop.f32.mrb[0].mxu0
  %v1184 = vadd.f32 %v1020, %v1183
  %v1185 = vpop.f32.mrb[0].mxu0
  %v1186 = vpop.f32.mrb[0].mxu0
  %v1187 = vadd.f32 %v1023, %v1186
  %v1188 = vpop.f32.mrb[0].mxu0
  %1189 = vdwg.mxu0
  %s1190 = scalar_lea.vmem %s1, 4
  %v1191 = vld [vmem:[%s1190] sm:$0x3]
  %v1192 = vunpack.c.l.b16 %v89
  %v1193 = vunpack.c.l.b16 %v103
  %v1194 = vunpack.c.l.b16 %v117
  %v1195 = vunpack.c.l.b16 %v131
  %v1196 = vunpack.c.l.b16 %v145
  %v1197 = vunpack.c.l.b16 %v159
  %v1198 = vunpack.c.l.b16 %v173
  %v1199 = vunpack.c.l.b16 %v187
  %v1200 = vunpack.c.l.b16 %v201
  %v1201 = vunpack.c.l.b16 %v215
  %v1202 = vunpack.c.l.b16 %v229
  %v1203 = vunpack.c.l.b16 %v243
  %v1204 = vunpack.c.l.b16 %v257
  %v1205 = vunpack.c.l.b16 %v271
  %v1206 = vunpack.c.l.b16 %v285
  %v1207 = vunpack.c.l.b16 %v299
  %v1208 = vpack.c.b16 %v1193, %v1192
  %v1209 = vpack.c.b16 %v1195, %v1194
  %v1210 = vpack.c.b16 %v1197, %v1196
  %v1211 = vpack.c.b16 %v1199, %v1198
  %v1212 = vpack.c.b16 %v1201, %v1200
  %v1213 = vpack.c.b16 %v1203, %v1202
  %v1214 = vpack.c.b16 %v1205, %v1204
  %v1215 = vpack.c.b16 %v1207, %v1206
  %v1217 = vsel %vm900, %v1208, 0
  %v1220 = vsel %vm900, %v1209, 0
  %v1223 = vsel %vm900, %v1210, 0
  %v1226 = vsel %vm900, %v1211, 0
  %v1229 = vsel %vm900, %v1212, 0
  %v1232 = vsel %vm900, %v1213, 0
  %v1235 = vsel %vm900, %v1214, 0
  %v1238 = vsel %vm900, %v1215, 0
  %v1241 = vsel %vm925, %v1191, 0
  %1243 = vmatprep.subr.bf16.mxu0 0
  %1244 = vmatpush1.bf16.msra.mxu0 %v1241
  %1245 = vmatprep.subr.bf16.mxu0 0
  %1246 = vmatpush1.bf16.msra.mxu0 0
  %1247 = vmatprep.subr.bf16.mxu0 0
  %1248 = vmatpush1.bf16.msra.mxu0 0
  %1249 = vmatprep.subr.bf16.mxu0 0
  %1250 = vmatpush1.bf16.msra.mxu0 0
  %1251 = vmatprep.subr.bf16.mxu0 0
  %1252 = vmatpush1.bf16.msra.mxu0 0
  %1253 = vmatprep.subr.bf16.mxu0 0
  %1254 = vmatpush1.bf16.msra.mxu0 0
  %1255 = vmatprep.subr.bf16.mxu0 0
  %1256 = vmatpush1.bf16.msra.mxu0 0
  %1257 = vmatprep.subr.bf16.mxu0 0
  %1258 = vmatpush1.bf16.msra.mxu0 0
  %1259 = vmatprep.subr.bf16.mxu0 0
  %1260 = vmatpush1.bf16.msra.mxu0 0
  %1261 = vmatprep.subr.bf16.mxu0 0
  %1262 = vmatpush1.bf16.msra.mxu0 0
  %1263 = vmatprep.subr.bf16.mxu0 0
  %1264 = vmatpush1.bf16.msra.mxu0 0
  %1265 = vmatprep.subr.bf16.mxu0 0
  %1266 = vmatpush1.bf16.msra.mxu0 0
  %1267 = vmatprep.subr.bf16.mxu0 0
  %1268 = vmatpush1.bf16.msra.mxu0 0
  %1269 = vmatprep.subr.bf16.mxu0 0
  %1270 = vmatpush1.bf16.msra.mxu0 0
  %1271 = vmatprep.subr.bf16.mxu0 0
  %1272 = vmatpush1.bf16.msra.mxu0 0
  %1273 = vmatprep.subr.bf16.mxu0 0
  %1274 = vmatpush1.bf16.msra.mxu0 0
  %1275 = vmatprep.mubr.bf16.mxu0 0
  %1276 = vmatmul.mubr.bf16.gmra.mrb[0].mxu0 %v1217
  %v1277 = vpop.f32.mrb[0].mxu0
  %v1278 = vadd.f32 0.0, %v1277
  %v1279 = vpop.f32.mrb[0].mxu0
  %v1280 = vpop.f32.mrb[0].mxu0
  %v1281 = vadd.f32 0.0, %v1280
  %v1282 = vpop.f32.mrb[0].mxu0
  %1283 = vmatprep.mubr.bf16.mxu0 0
  %1284 = vmatmul.mubr.bf16.gmra.mrb[0].mxu0 %v1220
  %v1285 = vpop.f32.mrb[0].mxu0
  %v1286 = vadd.f32 0.0, %v1285
  %v1287 = vpop.f32.mrb[0].mxu0
  %v1288 = vpop.f32.mrb[0].mxu0
  %v1289 = vadd.f32 0.0, %v1288
  %v1290 = vpop.f32.mrb[0].mxu0
  %1291 = vmatprep.mubr.bf16.mxu0 0
  %1292 = vmatmul.mubr.bf16.gmra.mrb[0].mxu0 %v1223
  %v1293 = vpop.f32.mrb[0].mxu0
  %v1294 = vadd.f32 0.0, %v1293
  %v1295 = vpop.f32.mrb[0].mxu0
  %v1296 = vpop.f32.mrb[0].mxu0
  %v1297 = vadd.f32 0.0, %v1296
  %v1298 = vpop.f32.mrb[0].mxu0
  %1299 = vmatprep.mubr.bf16.mxu0 0
  %1300 = vmatmul.mubr.bf16.gmra.mrb[0].mxu0 %v1226
  %v1301 = vpop.f32.mrb[0].mxu0
  %v1302 = vadd.f32 0.0, %v1301
  %v1303 = vpop.f32.mrb[0].mxu0
  %v1304 = vpop.f32.mrb[0].mxu0
  %v1305 = vadd.f32 0.0, %v1304
  %v1306 = vpop.f32.mrb[0].mxu0
  %1307 = vmatprep.mubr.bf16.mxu0 0
  %1308 = vmatmul.mubr.bf16.gmra.mrb[0].mxu0 %v1229
  %v1309 = vpop.f32.mrb[0].mxu0
  %v1310 = vadd.f32 0.0, %v1309
  %v1311 = vpop.f32.mrb[0].mxu0
  %v1312 = vpop.f32.mrb[0].mxu0
  %v1313 = vadd.f32 0.0, %v1312
  %v1314 = vpop.f32.mrb[0].mxu0
  %1315 = vmatprep.mubr.bf16.mxu0 0
  %1316 = vmatmul.mubr.bf16.gmra.mrb[0].mxu0 %v1232
  %v1317 = vpop.f32.mrb[0].mxu0
  %v1318 = vadd.f32 0.0, %v1317
  %v1319 = vpop.f32.mrb[0].mxu0
  %v1320 = vpop.f32.mrb[0].mxu0
  %v1321 = vadd.f32 0.0, %v1320
  %v1322 = vpop.f32.mrb[0].mxu0
  %1323 = vmatprep.mubr.bf16.mxu0 0
  %1324 = vmatmul.mubr.bf16.gmra.mrb[0].mxu0 %v1235
  %v1325 = vpop.f32.mrb[0].mxu0
  %v1326 = vadd.f32 0.0, %v1325
  %v1327 = vpop.f32.mrb[0].mxu0
  %v1328 = vpop.f32.mrb[0].mxu0
  %v1329 = vadd.f32 0.0, %v1328
  %v1330 = vpop.f32.mrb[0].mxu0
  %1331 = vmatprep.mubr.bf16.mxu0 0
  %1332 = vmatmul.mubr.bf16.gmra.mrb[0].mxu0 %v1238
  %v1333 = vpop.f32.mrb[0].mxu0
  %v1334 = vadd.f32 0.0, %v1333
  %v1335 = vpop.f32.mrb[0].mxu0
  %v1336 = vpop.f32.mrb[0].mxu0
  %v1337 = vadd.f32 0.0, %v1336
  %v1338 = vpop.f32.mrb[0].mxu0
  %1339 = vdwg.mxu0
  %v1340 = vadd.f32 %v1128, %v1278
  %v1341 = vadd.f32 %v1131, %v1281
  %v1342 = vadd.f32 %v1136, %v1286
  %v1343 = vadd.f32 %v1139, %v1289
  %v1344 = vadd.f32 %v1144, %v1294
  %v1345 = vadd.f32 %v1147, %v1297
  %v1346 = vadd.f32 %v1152, %v1302
  %v1347 = vadd.f32 %v1155, %v1305
  %v1348 = vadd.f32 %v1160, %v1310
  %v1349 = vadd.f32 %v1163, %v1313
  %v1350 = vadd.f32 %v1168, %v1318
  %v1351 = vadd.f32 %v1171, %v1321
  %v1352 = vadd.f32 %v1176, %v1326
  %v1353 = vadd.f32 %v1179, %v1329
  %v1354 = vadd.f32 %v1184, %v1334
  %v1355 = vadd.f32 %v1187, %v1337
  %s1356 = scalar_lea.vmem %s1, 6
  %v1357 = vld [vmem:[%s1356] sm:$0x3]
  %v1374 = vunpack.c.l.b16 %v303
  %v1375 = vunpack.c.l.b16 %v304
  %v1376 = vunpack.c.l.b16 %v305
  %v1377 = vunpack.c.l.b16 %v306
  %v1378 = vunpack.c.l.b16 %v307
  %v1379 = vunpack.c.l.b16 %v308
  %v1380 = vunpack.c.l.b16 %v309
  %v1381 = vunpack.c.l.b16 %v310
  %v1382 = vunpack.c.l.b16 %v311
  %v1383 = vunpack.c.l.b16 %v312
  %v1384 = vunpack.c.l.b16 %v313
  %v1385 = vunpack.c.l.b16 %v314
  %v1386 = vunpack.c.l.b16 %v315
  %v1387 = vunpack.c.l.b16 %v316
  %v1388 = vunpack.c.l.b16 %v317
  %v1389 = vunpack.c.l.b16 %v318
  %v1390 = vpack.c.b16 %v1375, %v1374
  %v1391 = vpack.c.b16 %v1377, %v1376
  %v1392 = vpack.c.b16 %v1379, %v1378
  %v1393 = vpack.c.b16 %v1381, %v1380
  %v1394 = vpack.c.b16 %v1383, %v1382
  %v1395 = vpack.c.b16 %v1385, %v1384
  %v1396 = vpack.c.b16 %v1387, %v1386
  %v1397 = vpack.c.b16 %v1389, %v1388
  %v1399 = vsel %vm900, %v1390, 0
  %v1402 = vsel %vm900, %v1391, 0
  %v1405 = vsel %vm900, %v1392, 0
  %v1408 = vsel %vm900, %v1393, 0
  %v1411 = vsel %vm900, %v1394, 0
  %v1414 = vsel %vm900, %v1395, 0
  %v1417 = vsel %vm900, %v1396, 0
  %v1420 = vsel %vm900, %v1397, 0
  %v1423 = vsel %vm925, %v1357, 0
  %1425 = vmatprep.subr.bf16.mxu0 0
  %1426 = vmatpush1.bf16.msra.mxu0 %v1423
  %1427 = vmatprep.subr.bf16.mxu0 0
  %1428 = vmatpush1.bf16.msra.mxu0 0
  %1429 = vmatprep.subr.bf16.mxu0 0
  %1430 = vmatpush1.bf16.msra.mxu0 0
  %1431 = vmatprep.subr.bf16.mxu0 0
  %1432 = vmatpush1.bf16.msra.mxu0 0
  %1433 = vmatprep.subr.bf16.mxu0 0
  %1434 = vmatpush1.bf16.msra.mxu0 0
  %1435 = vmatprep.subr.bf16.mxu0 0
  %1436 = vmatpush1.bf16.msra.mxu0 0
  %1437 = vmatprep.subr.bf16.mxu0 0
  %1438 = vmatpush1.bf16.msra.mxu0 0
  %1439 = vmatprep.subr.bf16.mxu0 0
  %1440 = vmatpush1.bf16.msra.mxu0 0
  %1441 = vmatprep.subr.bf16.mxu0 0
  %1442 = vmatpush1.bf16.msra.mxu0 0
  %1443 = vmatprep.subr.bf16.mxu0 0
  %1444 = vmatpush1.bf16.msra.mxu0 0
  %1445 = vmatprep.subr.bf16.mxu0 0
  %1446 = vmatpush1.bf16.msra.mxu0 0
  %1447 = vmatprep.subr.bf16.mxu0 0
  %1448 = vmatpush1.bf16.msra.mxu0 0
  %1449 = vmatprep.subr.bf16.mxu0 0
  %1450 = vmatpush1.bf16.msra.mxu0 0
  %1451 = vmatprep.subr.bf16.mxu0 0
  %1452 = vmatpush1.bf16.msra.mxu0 0
  %1453 = vmatprep.subr.bf16.mxu0 0
  %1454 = vmatpush1.bf16.msra.mxu0 0
  %1455 = vmatprep.subr.bf16.mxu0 0
  %1456 = vmatpush1.bf16.msra.mxu0 0
  %1457 = vmatprep.mubr.bf16.mxu0 0
  %1458 = vmatmul.mubr.bf16.gmra.mrb[0].mxu0 %v1399
  %v1459 = vpop.f32.mrb[0].mxu0
  %v1460 = vadd.f32 0.0, %v1459
  %v1461 = vpop.f32.mrb[0].mxu0
  %v1462 = vpop.f32.mrb[0].mxu0
  %v1463 = vadd.f32 0.0, %v1462
  %v1464 = vpop.f32.mrb[0].mxu0
  %1465 = vmatprep.mubr.bf16.mxu0 0
  %1466 = vmatmul.mubr.bf16.gmra.mrb[0].mxu0 %v1402
  %v1467 = vpop.f32.mrb[0].mxu0
  %v1468 = vadd.f32 0.0, %v1467
  %v1469 = vpop.f32.mrb[0].mxu0
  %v1470 = vpop.f32.mrb[0].mxu0
  %v1471 = vadd.f32 0.0, %v1470
  %v1472 = vpop.f32.mrb[0].mxu0
  %1473 = vmatprep.mubr.bf16.mxu0 0
  %1474 = vmatmul.mubr.bf16.gmra.mrb[0].mxu0 %v1405
  %v1475 = vpop.f32.mrb[0].mxu0
  %v1476 = vadd.f32 0.0, %v1475
  %v1477 = vpop.f32.mrb[0].mxu0
  %v1478 = vpop.f32.mrb[0].mxu0
  %v1479 = vadd.f32 0.0, %v1478
  %v1480 = vpop.f32.mrb[0].mxu0
  %1481 = vmatprep.mubr.bf16.mxu0 0
  %1482 = vmatmul.mubr.bf16.gmra.mrb[0].mxu0 %v1408
  %v1483 = vpop.f32.mrb[0].mxu0
  %v1484 = vadd.f32 0.0, %v1483
  %v1485 = vpop.f32.mrb[0].mxu0
  %v1486 = vpop.f32.mrb[0].mxu0
  %v1487 = vadd.f32 0.0, %v1486
  %v1488 = vpop.f32.mrb[0].mxu0
  %1489 = vmatprep.mubr.bf16.mxu0 0
  %1490 = vmatmul.mubr.bf16.gmra.mrb[0].mxu0 %v1411
  %v1491 = vpop.f32.mrb[0].mxu0
  %v1492 = vadd.f32 0.0, %v1491
  %v1493 = vpop.f32.mrb[0].mxu0
  %v1494 = vpop.f32.mrb[0].mxu0
  %v1495 = vadd.f32 0.0, %v1494
  %v1496 = vpop.f32.mrb[0].mxu0
  %1497 = vmatprep.mubr.bf16.mxu0 0
  %1498 = vmatmul.mubr.bf16.gmra.mrb[0].mxu0 %v1414
  %v1499 = vpop.f32.mrb[0].mxu0
  %v1500 = vadd.f32 0.0, %v1499
  %v1501 = vpop.f32.mrb[0].mxu0
  %v1502 = vpop.f32.mrb[0].mxu0
  %v1503 = vadd.f32 0.0, %v1502
  %v1504 = vpop.f32.mrb[0].mxu0
  %1505 = vmatprep.mubr.bf16.mxu0 0
  %1506 = vmatmul.mubr.bf16.gmra.mrb[0].mxu0 %v1417
  %v1507 = vpop.f32.mrb[0].mxu0
  %v1508 = vadd.f32 0.0, %v1507
  %v1509 = vpop.f32.mrb[0].mxu0
  %v1510 = vpop.f32.mrb[0].mxu0
  %v1511 = vadd.f32 0.0, %v1510
  %v1512 = vpop.f32.mrb[0].mxu0
  %1513 = vmatprep.mubr.bf16.mxu0 0
  %1514 = vmatmul.mubr.bf16.gmra.mrb[0].mxu0 %v1420
  %v1515 = vpop.f32.mrb[0].mxu0
  %v1516 = vadd.f32 0.0, %v1515
  %v1517 = vpop.f32.mrb[0].mxu0
  %v1518 = vpop.f32.mrb[0].mxu0
  %v1519 = vadd.f32 0.0, %v1518
  %v1520 = vpop.f32.mrb[0].mxu0
  %1521 = vdwg.mxu0
  %v1522 = vadd.f32 %v1340, %v1460
  %v1523 = vadd.f32 %v1341, %v1463
  %v1524 = vadd.f32 %v1342, %v1468
  %v1525 = vadd.f32 %v1343, %v1471
  %v1526 = vadd.f32 %v1344, %v1476
  %v1527 = vadd.f32 %v1345, %v1479
  %v1528 = vadd.f32 %v1346, %v1484
  %v1529 = vadd.f32 %v1347, %v1487
  %v1530 = vadd.f32 %v1348, %v1492
  %v1531 = vadd.f32 %v1349, %v1495
  %v1532 = vadd.f32 %v1350, %v1500
  %v1533 = vadd.f32 %v1351, %v1503
  %v1534 = vadd.f32 %v1352, %v1508
  %v1535 = vadd.f32 %v1353, %v1511
  %v1536 = vadd.f32 %v1354, %v1516
  %v1537 = vadd.f32 %v1355, %v1519
  %s1538 = scalar_lea.vmem %s1, 8
  %v1539 = vld [vmem:[%s1538] sm:$0x3]
  %v1556 = vunpack.c.l.b16 %v322
  %v1557 = vunpack.c.l.b16 %v323
  %v1558 = vunpack.c.l.b16 %v324
  %v1559 = vunpack.c.l.b16 %v325
  %v1560 = vunpack.c.l.b16 %v326
  %v1561 = vunpack.c.l.b16 %v327
  %v1562 = vunpack.c.l.b16 %v328
  %v1563 = vunpack.c.l.b16 %v329
  %v1564 = vunpack.c.l.b16 %v330
  %v1565 = vunpack.c.l.b16 %v331
  %v1566 = vunpack.c.l.b16 %v332
  %v1567 = vunpack.c.l.b16 %v333
  %v1568 = vunpack.c.l.b16 %v334
  %v1569 = vunpack.c.l.b16 %v335
  %v1570 = vunpack.c.l.b16 %v336
  %v1571 = vunpack.c.l.b16 %v337
  %v1572 = vpack.c.b16 %v1557, %v1556
  %v1573 = vpack.c.b16 %v1559, %v1558
  %v1574 = vpack.c.b16 %v1561, %v1560
  %v1575 = vpack.c.b16 %v1563, %v1562
  %v1576 = vpack.c.b16 %v1565, %v1564
  %v1577 = vpack.c.b16 %v1567, %v1566
  %v1578 = vpack.c.b16 %v1569, %v1568
  %v1579 = vpack.c.b16 %v1571, %v1570
  %v1581 = vsel %vm900, %v1572, 0
  %v1584 = vsel %vm900, %v1573, 0
  %v1587 = vsel %vm900, %v1574, 0
  %v1590 = vsel %vm900, %v1575, 0
  %v1593 = vsel %vm900, %v1576, 0
  %v1596 = vsel %vm900, %v1577, 0
  %v1599 = vsel %vm900, %v1578, 0
  %v1602 = vsel %vm900, %v1579, 0
  %v1605 = vsel %vm925, %v1539, 0
  %1607 = vmatprep.subr.bf16.mxu0 0
  %1608 = vmatpush1.bf16.msra.mxu0 %v1605
  %1609 = vmatprep.subr.bf16.mxu0 0
  %1610 = vmatpush1.bf16.msra.mxu0 0
  %1611 = vmatprep.subr.bf16.mxu0 0
  %1612 = vmatpush1.bf16.msra.mxu0 0
  %1613 = vmatprep.subr.bf16.mxu0 0
  %1614 = vmatpush1.bf16.msra.mxu0 0
  %1615 = vmatprep.subr.bf16.mxu0 0
  %1616 = vmatpush1.bf16.msra.mxu0 0
  %1617 = vmatprep.subr.bf16.mxu0 0
  %1618 = vmatpush1.bf16.msra.mxu0 0
  %1619 = vmatprep.subr.bf16.mxu0 0
  %1620 = vmatpush1.bf16.msra.mxu0 0
  %1621 = vmatprep.subr.bf16.mxu0 0
  %1622 = vmatpush1.bf16.msra.mxu0 0
  %1623 = vmatprep.subr.bf16.mxu0 0
  %1624 = vmatpush1.bf16.msra.mxu0 0
  %1625 = vmatprep.subr.bf16.mxu0 0
  %1626 = vmatpush1.bf16.msra.mxu0 0
  %1627 = vmatprep.subr.bf16.mxu0 0
  %1628 = vmatpush1.bf16.msra.mxu0 0
  %1629 = vmatprep.subr.bf16.mxu0 0
  %1630 = vmatpush1.bf16.msra.mxu0 0
  %1631 = vmatprep.subr.bf16.mxu0 0
  %1632 = vmatpush1.bf16.msra.mxu0 0
  %1633 = vmatprep.subr.bf16.mxu0 0
  %1634 = vmatpush1.bf16.msra.mxu0 0
  %1635 = vmatprep.subr.bf16.mxu0 0
  %1636 = vmatpush1.bf16.msra.mxu0 0
  %1637 = vmatprep.subr.bf16.mxu0 0
  %1638 = vmatpush1.bf16.msra.mxu0 0
  %1639 = vmatprep.mubr.bf16.mxu0 0
  %1640 = vmatmul.mubr.bf16.gmra.mrb[0].mxu0 %v1581
  %v1641 = vpop.f32.mrb[0].mxu0
  %v1642 = vadd.f32 0.0, %v1641
  %v1643 = vpop.f32.mrb[0].mxu0
  %v1644 = vpop.f32.mrb[0].mxu0
  %v1645 = vadd.f32 0.0, %v1644
  %v1646 = vpop.f32.mrb[0].mxu0
  %1647 = vmatprep.mubr.bf16.mxu0 0
  %1648 = vmatmul.mubr.bf16.gmra.mrb[0].mxu0 %v1584
  %v1649 = vpop.f32.mrb[0].mxu0
  %v1650 = vadd.f32 0.0, %v1649
  %v1651 = vpop.f32.mrb[0].mxu0
  %v1652 = vpop.f32.mrb[0].mxu0
  %v1653 = vadd.f32 0.0, %v1652
  %v1654 = vpop.f32.mrb[0].mxu0
  %1655 = vmatprep.mubr.bf16.mxu0 0
  %1656 = vmatmul.mubr.bf16.gmra.mrb[0].mxu0 %v1587
  %v1657 = vpop.f32.mrb[0].mxu0
  %v1658 = vadd.f32 0.0, %v1657
  %v1659 = vpop.f32.mrb[0].mxu0
  %v1660 = vpop.f32.mrb[0].mxu0
  %v1661 = vadd.f32 0.0, %v1660
  %v1662 = vpop.f32.mrb[0].mxu0
  %1663 = vmatprep.mubr.bf16.mxu0 0
  %1664 = vmatmul.mubr.bf16.gmra.mrb[0].mxu0 %v1590
  %v1665 = vpop.f32.mrb[0].mxu0
  %v1666 = vadd.f32 0.0, %v1665
  %v1667 = vpop.f32.mrb[0].mxu0
  %v1668 = vpop.f32.mrb[0].mxu0
  %v1669 = vadd.f32 0.0, %v1668
  %v1670 = vpop.f32.mrb[0].mxu0
  %1671 = vmatprep.mubr.bf16.mxu0 0
  %1672 = vmatmul.mubr.bf16.gmra.mrb[0].mxu0 %v1593
  %v1673 = vpop.f32.mrb[0].mxu0
  %v1674 = vadd.f32 0.0, %v1673
  %v1675 = vpop.f32.mrb[0].mxu0
  %v1676 = vpop.f32.mrb[0].mxu0
  %v1677 = vadd.f32 0.0, %v1676
  %v1678 = vpop.f32.mrb[0].mxu0
  %1679 = vmatprep.mubr.bf16.mxu0 0
  %1680 = vmatmul.mubr.bf16.gmra.mrb[0].mxu0 %v1596
  %v1681 = vpop.f32.mrb[0].mxu0
  %v1682 = vadd.f32 0.0, %v1681
  %v1683 = vpop.f32.mrb[0].mxu0
  %v1684 = vpop.f32.mrb[0].mxu0
  %v1685 = vadd.f32 0.0, %v1684
  %v1686 = vpop.f32.mrb[0].mxu0
  %1687 = vmatprep.mubr.bf16.mxu0 0
  %1688 = vmatmul.mubr.bf16.gmra.mrb[0].mxu0 %v1599
  %v1689 = vpop.f32.mrb[0].mxu0
  %v1690 = vadd.f32 0.0, %v1689
  %v1691 = vpop.f32.mrb[0].mxu0
  %v1692 = vpop.f32.mrb[0].mxu0
  %v1693 = vadd.f32 0.0, %v1692
  %v1694 = vpop.f32.mrb[0].mxu0
  %1695 = vmatprep.mubr.bf16.mxu0 0
  %1696 = vmatmul.mubr.bf16.gmra.mrb[0].mxu0 %v1602
  %v1697 = vpop.f32.mrb[0].mxu0
  %v1698 = vadd.f32 0.0, %v1697
  %v1699 = vpop.f32.mrb[0].mxu0
  %v1700 = vpop.f32.mrb[0].mxu0
  %v1701 = vadd.f32 0.0, %v1700
  %v1702 = vpop.f32.mrb[0].mxu0
  %1703 = vdwg.mxu0
  %v1704 = vadd.f32 %v1522, %v1642
  %v1705 = vadd.f32 %v1523, %v1645
  %v1706 = vadd.f32 %v1524, %v1650
  %v1707 = vadd.f32 %v1525, %v1653
  %v1708 = vadd.f32 %v1526, %v1658
  %v1709 = vadd.f32 %v1527, %v1661
  %v1710 = vadd.f32 %v1528, %v1666
  %v1711 = vadd.f32 %v1529, %v1669
  %v1712 = vadd.f32 %v1530, %v1674
  %v1713 = vadd.f32 %v1531, %v1677
  %v1714 = vadd.f32 %v1532, %v1682
  %v1715 = vadd.f32 %v1533, %v1685
  %v1716 = vadd.f32 %v1534, %v1690
  %v1717 = vadd.f32 %v1535, %v1693
  %v1718 = vadd.f32 %v1536, %v1698
  %v1719 = vadd.f32 %v1537, %v1701
  %s1720 = scalar_lea.vmem %s1, 10
  %v1721 = vld [vmem:[%s1720] sm:$0x3]
  %v1722 = vunpack.c.l.b16 %v367
  %v1723 = vunpack.c.l.b16 %v381
  %v1724 = vunpack.c.l.b16 %v395
  %v1725 = vunpack.c.l.b16 %v409
  %v1726 = vunpack.c.l.b16 %v423
  %v1727 = vunpack.c.l.b16 %v437
  %v1728 = vunpack.c.l.b16 %v451
  %v1729 = vunpack.c.l.b16 %v465
  %v1730 = vunpack.c.l.b16 %v479
  %v1731 = vunpack.c.l.b16 %v493
  %v1732 = vunpack.c.l.b16 %v507
  %v1733 = vunpack.c.l.b16 %v521
  %v1734 = vunpack.c.l.b16 %v535
  %v1735 = vunpack.c.l.b16 %v549
  %v1736 = vunpack.c.l.b16 %v563
  %v1737 = vunpack.c.l.b16 %v577
  %v1738 = vpack.c.b16 %v1723, %v1722
  %v1739 = vpack.c.b16 %v1725, %v1724
  %v1740 = vpack.c.b16 %v1727, %v1726
  %v1741 = vpack.c.b16 %v1729, %v1728
  %v1742 = vpack.c.b16 %v1731, %v1730
  %v1743 = vpack.c.b16 %v1733, %v1732
  %v1744 = vpack.c.b16 %v1735, %v1734
  %v1745 = vpack.c.b16 %v1737, %v1736
  %v1747 = vsel %vm900, %v1738, 0
  %v1750 = vsel %vm900, %v1739, 0
  %v1753 = vsel %vm900, %v1740, 0
  %v1756 = vsel %vm900, %v1741, 0
  %v1759 = vsel %vm900, %v1742, 0
  %v1762 = vsel %vm900, %v1743, 0
  %v1765 = vsel %vm900, %v1744, 0
  %v1768 = vsel %vm900, %v1745, 0
  %v1771 = vsel %vm925, %v1721, 0
  %1773 = vmatprep.subr.bf16.mxu0 0
  %1774 = vmatpush1.bf16.msra.mxu0 %v1771
  %1775 = vmatprep.subr.bf16.mxu0 0
  %1776 = vmatpush1.bf16.msra.mxu0 0
  %1777 = vmatprep.subr.bf16.mxu0 0
  %1778 = vmatpush1.bf16.msra.mxu0 0
  %1779 = vmatprep.subr.bf16.mxu0 0
  %1780 = vmatpush1.bf16.msra.mxu0 0
  %1781 = vmatprep.subr.bf16.mxu0 0
  %1782 = vmatpush1.bf16.msra.mxu0 0
  %1783 = vmatprep.subr.bf16.mxu0 0
  %1784 = vmatpush1.bf16.msra.mxu0 0
  %1785 = vmatprep.subr.bf16.mxu0 0
  %1786 = vmatpush1.bf16.msra.mxu0 0
  %1787 = vmatprep.subr.bf16.mxu0 0
  %1788 = vmatpush1.bf16.msra.mxu0 0
  %1789 = vmatprep.subr.bf16.mxu0 0
  %1790 = vmatpush1.bf16.msra.mxu0 0
  %1791 = vmatprep.subr.bf16.mxu0 0
  %1792 = vmatpush1.bf16.msra.mxu0 0
  %1793 = vmatprep.subr.bf16.mxu0 0
  %1794 = vmatpush1.bf16.msra.mxu0 0
  %1795 = vmatprep.subr.bf16.mxu0 0
  %1796 = vmatpush1.bf16.msra.mxu0 0
  %1797 = vmatprep.subr.bf16.mxu0 0
  %1798 = vmatpush1.bf16.msra.mxu0 0
  %1799 = vmatprep.subr.bf16.mxu0 0
  %1800 = vmatpush1.bf16.msra.mxu0 0
  %1801 = vmatprep.subr.bf16.mxu0 0
  %1802 = vmatpush1.bf16.msra.mxu0 0
  %1803 = vmatprep.subr.bf16.mxu0 0
  %1804 = vmatpush1.bf16.msra.mxu0 0
  %1805 = vmatprep.mubr.bf16.mxu0 0
  %1806 = vmatmul.mubr.bf16.gmra.mrb[0].mxu0 %v1747
  %v1807 = vpop.f32.mrb[0].mxu0
  %v1808 = vadd.f32 0.0, %v1807
  %v1809 = vpop.f32.mrb[0].mxu0
  %v1810 = vpop.f32.mrb[0].mxu0
  %v1811 = vadd.f32 0.0, %v1810
  %v1812 = vpop.f32.mrb[0].mxu0
  %1813 = vmatprep.mubr.bf16.mxu0 0
  %1814 = vmatmul.mubr.bf16.gmra.mrb[0].mxu0 %v1750
  %v1815 = vpop.f32.mrb[0].mxu0
  %v1816 = vadd.f32 0.0, %v1815
  %v1817 = vpop.f32.mrb[0].mxu0
  %v1818 = vpop.f32.mrb[0].mxu0
  %v1819 = vadd.f32 0.0, %v1818
  %v1820 = vpop.f32.mrb[0].mxu0
  %1821 = vmatprep.mubr.bf16.mxu0 0
  %1822 = vmatmul.mubr.bf16.gmra.mrb[0].mxu0 %v1753
  %v1823 = vpop.f32.mrb[0].mxu0
  %v1824 = vadd.f32 0.0, %v1823
  %v1825 = vpop.f32.mrb[0].mxu0
  %v1826 = vpop.f32.mrb[0].mxu0
  %v1827 = vadd.f32 0.0, %v1826
  %v1828 = vpop.f32.mrb[0].mxu0
  %1829 = vmatprep.mubr.bf16.mxu0 0
  %1830 = vmatmul.mubr.bf16.gmra.mrb[0].mxu0 %v1756
  %v1831 = vpop.f32.mrb[0].mxu0
  %v1832 = vadd.f32 0.0, %v1831
  %v1833 = vpop.f32.mrb[0].mxu0
  %v1834 = vpop.f32.mrb[0].mxu0
  %v1835 = vadd.f32 0.0, %v1834
  %v1836 = vpop.f32.mrb[0].mxu0
  %1837 = vmatprep.mubr.bf16.mxu0 0
  %1838 = vmatmul.mubr.bf16.gmra.mrb[0].mxu0 %v1759
  %v1839 = vpop.f32.mrb[0].mxu0
  %v1840 = vadd.f32 0.0, %v1839
  %v1841 = vpop.f32.mrb[0].mxu0
  %v1842 = vpop.f32.mrb[0].mxu0
  %v1843 = vadd.f32 0.0, %v1842
  %v1844 = vpop.f32.mrb[0].mxu0
  %1845 = vmatprep.mubr.bf16.mxu0 0
  %1846 = vmatmul.mubr.bf16.gmra.mrb[0].mxu0 %v1762
  %v1847 = vpop.f32.mrb[0].mxu0
  %v1848 = vadd.f32 0.0, %v1847
  %v1849 = vpop.f32.mrb[0].mxu0
  %v1850 = vpop.f32.mrb[0].mxu0
  %v1851 = vadd.f32 0.0, %v1850
  %v1852 = vpop.f32.mrb[0].mxu0
  %1853 = vmatprep.mubr.bf16.mxu0 0
  %1854 = vmatmul.mubr.bf16.gmra.mrb[0].mxu0 %v1765
  %v1855 = vpop.f32.mrb[0].mxu0
  %v1856 = vadd.f32 0.0, %v1855
  %v1857 = vpop.f32.mrb[0].mxu0
  %v1858 = vpop.f32.mrb[0].mxu0
  %v1859 = vadd.f32 0.0, %v1858
  %v1860 = vpop.f32.mrb[0].mxu0
  %1861 = vmatprep.mubr.bf16.mxu0 0
  %1862 = vmatmul.mubr.bf16.gmra.mrb[0].mxu0 %v1768
  %v1863 = vpop.f32.mrb[0].mxu0
  %v1864 = vadd.f32 0.0, %v1863
  %v1865 = vpop.f32.mrb[0].mxu0
  %v1866 = vpop.f32.mrb[0].mxu0
  %v1867 = vadd.f32 0.0, %v1866
  %v1868 = vpop.f32.mrb[0].mxu0
  %1869 = vdwg.mxu0
  %v1870 = vadd.f32 %v1704, %v1808
  %v1871 = vadd.f32 %v1705, %v1811
  %v1872 = vadd.f32 %v1706, %v1816
  %v1873 = vadd.f32 %v1707, %v1819
  %v1874 = vadd.f32 %v1708, %v1824
  %v1875 = vadd.f32 %v1709, %v1827
  %v1876 = vadd.f32 %v1710, %v1832
  %v1877 = vadd.f32 %v1711, %v1835
  %v1878 = vadd.f32 %v1712, %v1840
  %v1879 = vadd.f32 %v1713, %v1843
  %v1880 = vadd.f32 %v1714, %v1848
  %v1881 = vadd.f32 %v1715, %v1851
  %v1882 = vadd.f32 %v1716, %v1856
  %v1883 = vadd.f32 %v1717, %v1859
  %v1884 = vadd.f32 %v1718, %v1864
  %v1885 = vadd.f32 %v1719, %v1867
  %s1886 = scalar_lea.vmem %s1, 12
  %v1887 = vld [vmem:[%s1886] sm:$0x3]
  %v1904 = vunpack.c.l.b16 %v582
  %v1905 = vunpack.c.l.b16 %v583
  %v1906 = vunpack.c.l.b16 %v584
  %v1907 = vunpack.c.l.b16 %v585
  %v1908 = vunpack.c.l.b16 %v586
  %v1909 = vunpack.c.l.b16 %v587
  %v1910 = vunpack.c.l.b16 %v588
  %v1911 = vunpack.c.l.b16 %v589
  %v1912 = vunpack.c.l.b16 %v590
  %v1913 = vunpack.c.l.b16 %v591
  %v1914 = vunpack.c.l.b16 %v592
  %v1915 = vunpack.c.l.b16 %v593
  %v1916 = vunpack.c.l.b16 %v594
  %v1917 = vunpack.c.l.b16 %v595
  %v1918 = vunpack.c.l.b16 %v596
  %v1919 = vunpack.c.l.b16 %v597
  %v1920 = vpack.c.b16 %v1905, %v1904
  %v1921 = vpack.c.b16 %v1907, %v1906
  %v1922 = vpack.c.b16 %v1909, %v1908
  %v1923 = vpack.c.b16 %v1911, %v1910
  %v1924 = vpack.c.b16 %v1913, %v1912
  %v1925 = vpack.c.b16 %v1915, %v1914
  %v1926 = vpack.c.b16 %v1917, %v1916
  %v1927 = vpack.c.b16 %v1919, %v1918
  %v1929 = vsel %vm900, %v1920, 0
  %v1932 = vsel %vm900, %v1921, 0
  %v1935 = vsel %vm900, %v1922, 0
  %v1938 = vsel %vm900, %v1923, 0
  %v1941 = vsel %vm900, %v1924, 0
  %v1944 = vsel %vm900, %v1925, 0
  %v1947 = vsel %vm900, %v1926, 0
  %v1950 = vsel %vm900, %v1927, 0
  %v1953 = vsel %vm925, %v1887, 0
  %1955 = vmatprep.subr.bf16.mxu0 0
  %1956 = vmatpush1.bf16.msra.mxu0 %v1953
  %1957 = vmatprep.subr.bf16.mxu0 0
  %1958 = vmatpush1.bf16.msra.mxu0 0
  %1959 = vmatprep.subr.bf16.mxu0 0
  %1960 = vmatpush1.bf16.msra.mxu0 0
  %1961 = vmatprep.subr.bf16.mxu0 0
  %1962 = vmatpush1.bf16.msra.mxu0 0
  %1963 = vmatprep.subr.bf16.mxu0 0
  %1964 = vmatpush1.bf16.msra.mxu0 0
  %1965 = vmatprep.subr.bf16.mxu0 0
  %1966 = vmatpush1.bf16.msra.mxu0 0
  %1967 = vmatprep.subr.bf16.mxu0 0
  %1968 = vmatpush1.bf16.msra.mxu0 0
  %1969 = vmatprep.subr.bf16.mxu0 0
  %1970 = vmatpush1.bf16.msra.mxu0 0
  %1971 = vmatprep.subr.bf16.mxu0 0
  %1972 = vmatpush1.bf16.msra.mxu0 0
  %1973 = vmatprep.subr.bf16.mxu0 0
  %1974 = vmatpush1.bf16.msra.mxu0 0
  %1975 = vmatprep.subr.bf16.mxu0 0
  %1976 = vmatpush1.bf16.msra.mxu0 0
  %1977 = vmatprep.subr.bf16.mxu0 0
  %1978 = vmatpush1.bf16.msra.mxu0 0
  %1979 = vmatprep.subr.bf16.mxu0 0
  %1980 = vmatpush1.bf16.msra.mxu0 0
  %1981 = vmatprep.subr.bf16.mxu0 0
  %1982 = vmatpush1.bf16.msra.mxu0 0
  %1983 = vmatprep.subr.bf16.mxu0 0
  %1984 = vmatpush1.bf16.msra.mxu0 0
  %1985 = vmatprep.subr.bf16.mxu0 0
  %1986 = vmatpush1.bf16.msra.mxu0 0
  %1987 = vmatprep.mubr.bf16.mxu0 0
  %1988 = vmatmul.mubr.bf16.gmra.mrb[0].mxu0 %v1929
  %v1989 = vpop.f32.mrb[0].mxu0
  %v1990 = vadd.f32 0.0, %v1989
  %v1991 = vpop.f32.mrb[0].mxu0
  %v1992 = vpop.f32.mrb[0].mxu0
  %v1993 = vadd.f32 0.0, %v1992
  %v1994 = vpop.f32.mrb[0].mxu0
  %1995 = vmatprep.mubr.bf16.mxu0 0
  %1996 = vmatmul.mubr.bf16.gmra.mrb[0].mxu0 %v1932
  %v1997 = vpop.f32.mrb[0].mxu0
  %v1998 = vadd.f32 0.0, %v1997
  %v1999 = vpop.f32.mrb[0].mxu0
  %v2000 = vpop.f32.mrb[0].mxu0
  %v2001 = vadd.f32 0.0, %v2000
  %v2002 = vpop.f32.mrb[0].mxu0
  %2003 = vmatprep.mubr.bf16.mxu0 0
  %2004 = vmatmul.mubr.bf16.gmra.mrb[0].mxu0 %v1935
  %v2005 = vpop.f32.mrb[0].mxu0
  %v2006 = vadd.f32 0.0, %v2005
  %v2007 = vpop.f32.mrb[0].mxu0
  %v2008 = vpop.f32.mrb[0].mxu0
  %v2009 = vadd.f32 0.0, %v2008
  %v2010 = vpop.f32.mrb[0].mxu0
  %2011 = vmatprep.mubr.bf16.mxu0 0
  %2012 = vmatmul.mubr.bf16.gmra.mrb[0].mxu0 %v1938
  %v2013 = vpop.f32.mrb[0].mxu0
  %v2014 = vadd.f32 0.0, %v2013
  %v2015 = vpop.f32.mrb[0].mxu0
  %v2016 = vpop.f32.mrb[0].mxu0
  %v2017 = vadd.f32 0.0, %v2016
  %v2018 = vpop.f32.mrb[0].mxu0
  %2019 = vmatprep.mubr.bf16.mxu0 0
  %2020 = vmatmul.mubr.bf16.gmra.mrb[0].mxu0 %v1941
  %v2021 = vpop.f32.mrb[0].mxu0
  %v2022 = vadd.f32 0.0, %v2021
  %v2023 = vpop.f32.mrb[0].mxu0
  %v2024 = vpop.f32.mrb[0].mxu0
  %v2025 = vadd.f32 0.0, %v2024
  %v2026 = vpop.f32.mrb[0].mxu0
  %2027 = vmatprep.mubr.bf16.mxu0 0
  %2028 = vmatmul.mubr.bf16.gmra.mrb[0].mxu0 %v1944
  %v2029 = vpop.f32.mrb[0].mxu0
  %v2030 = vadd.f32 0.0, %v2029
  %v2031 = vpop.f32.mrb[0].mxu0
  %v2032 = vpop.f32.mrb[0].mxu0
  %v2033 = vadd.f32 0.0, %v2032
  %v2034 = vpop.f32.mrb[0].mxu0
  %2035 = vmatprep.mubr.bf16.mxu0 0
  %2036 = vmatmul.mubr.bf16.gmra.mrb[0].mxu0 %v1947
  %v2037 = vpop.f32.mrb[0].mxu0
  %v2038 = vadd.f32 0.0, %v2037
  %v2039 = vpop.f32.mrb[0].mxu0
  %v2040 = vpop.f32.mrb[0].mxu0
  %v2041 = vadd.f32 0.0, %v2040
  %v2042 = vpop.f32.mrb[0].mxu0
  %2043 = vmatprep.mubr.bf16.mxu0 0
  %2044 = vmatmul.mubr.bf16.gmra.mrb[0].mxu0 %v1950
  %v2045 = vpop.f32.mrb[0].mxu0
  %v2046 = vadd.f32 0.0, %v2045
  %v2047 = vpop.f32.mrb[0].mxu0
  %v2048 = vpop.f32.mrb[0].mxu0
  %v2049 = vadd.f32 0.0, %v2048
  %v2050 = vpop.f32.mrb[0].mxu0
  %2051 = vdwg.mxu0
  %v2052 = vadd.f32 %v1870, %v1990
  %v2053 = vadd.f32 %v1871, %v1993
  %v2054 = vadd.f32 %v1872, %v1998
  %v2055 = vadd.f32 %v1873, %v2001
  %v2056 = vadd.f32 %v1874, %v2006
  %v2057 = vadd.f32 %v1875, %v2009
  %v2058 = vadd.f32 %v1876, %v2014
  %v2059 = vadd.f32 %v1877, %v2017
  %v2060 = vadd.f32 %v1878, %v2022
  %v2061 = vadd.f32 %v1879, %v2025
  %v2062 = vadd.f32 %v1880, %v2030
  %v2063 = vadd.f32 %v1881, %v2033
  %v2064 = vadd.f32 %v1882, %v2038
  %v2065 = vadd.f32 %v1883, %v2041
  %v2066 = vadd.f32 %v1884, %v2046
  %v2067 = vadd.f32 %v1885, %v2049
  %s2068 = scalar_lea.vmem %s1, 14
  %v2069 = vld [vmem:[%s2068] sm:$0x3]
  %v2086 = vunpack.c.l.b16 %v601
  %v2087 = vunpack.c.l.b16 %v602
  %v2088 = vunpack.c.l.b16 %v603
  %v2089 = vunpack.c.l.b16 %v604
  %v2090 = vunpack.c.l.b16 %v605
  %v2091 = vunpack.c.l.b16 %v606
  %v2092 = vunpack.c.l.b16 %v607
  %v2093 = vunpack.c.l.b16 %v608
  %v2094 = vunpack.c.l.b16 %v609
  %v2095 = vunpack.c.l.b16 %v610
  %v2096 = vunpack.c.l.b16 %v611
  %v2097 = vunpack.c.l.b16 %v612
  %v2098 = vunpack.c.l.b16 %v613
  %v2099 = vunpack.c.l.b16 %v614
  %v2100 = vunpack.c.l.b16 %v615
  %v2101 = vunpack.c.l.b16 %v616
  %v2102 = vpack.c.b16 %v2087, %v2086
  %v2103 = vpack.c.b16 %v2089, %v2088
  %v2104 = vpack.c.b16 %v2091, %v2090
  %v2105 = vpack.c.b16 %v2093, %v2092
  %v2106 = vpack.c.b16 %v2095, %v2094
  %v2107 = vpack.c.b16 %v2097, %v2096
  %v2108 = vpack.c.b16 %v2099, %v2098
  %v2109 = vpack.c.b16 %v2101, %v2100
  %v2111 = vsel %vm900, %v2102, 0
  %v2114 = vsel %vm900, %v2103, 0
  %v2117 = vsel %vm900, %v2104, 0
  %v2120 = vsel %vm900, %v2105, 0
  %v2123 = vsel %vm900, %v2106, 0
  %v2126 = vsel %vm900, %v2107, 0
  %v2129 = vsel %vm900, %v2108, 0
  %v2132 = vsel %vm900, %v2109, 0
  %v2135 = vsel %vm925, %v2069, 0
  %2137 = vmatprep.subr.bf16.mxu0 0
  %2138 = vmatpush1.bf16.msra.mxu0 %v2135
  %2139 = vmatprep.subr.bf16.mxu0 0
  %2140 = vmatpush1.bf16.msra.mxu0 0
  %2141 = vmatprep.subr.bf16.mxu0 0
  %2142 = vmatpush1.bf16.msra.mxu0 0
  %2143 = vmatprep.subr.bf16.mxu0 0
  %2144 = vmatpush1.bf16.msra.mxu0 0
  %2145 = vmatprep.subr.bf16.mxu0 0
  %2146 = vmatpush1.bf16.msra.mxu0 0
  %2147 = vmatprep.subr.bf16.mxu0 0
  %2148 = vmatpush1.bf16.msra.mxu0 0
  %2149 = vmatprep.subr.bf16.mxu0 0
  %2150 = vmatpush1.bf16.msra.mxu0 0
  %2151 = vmatprep.subr.bf16.mxu0 0
  %2152 = vmatpush1.bf16.msra.mxu0 0
  %2153 = vmatprep.subr.bf16.mxu0 0
  %2154 = vmatpush1.bf16.msra.mxu0 0
  %2155 = vmatprep.subr.bf16.mxu0 0
  %2156 = vmatpush1.bf16.msra.mxu0 0
  %2157 = vmatprep.subr.bf16.mxu0 0
  %2158 = vmatpush1.bf16.msra.mxu0 0
  %2159 = vmatprep.subr.bf16.mxu0 0
  %2160 = vmatpush1.bf16.msra.mxu0 0
  %2161 = vmatprep.subr.bf16.mxu0 0
  %2162 = vmatpush1.bf16.msra.mxu0 0
  %2163 = vmatprep.subr.bf16.mxu0 0
  %2164 = vmatpush1.bf16.msra.mxu0 0
  %2165 = vmatprep.subr.bf16.mxu0 0
  %2166 = vmatpush1.bf16.msra.mxu0 0
  %2167 = vmatprep.subr.bf16.mxu0 0
  %2168 = vmatpush1.bf16.msra.mxu0 0
  %2169 = vmatprep.mubr.bf16.mxu0 0
  %2170 = vmatmul.mubr.bf16.gmra.mrb[0].mxu0 %v2111
  %v2171 = vpop.f32.mrb[0].mxu0
  %v2172 = vadd.f32 0.0, %v2171
  %v2173 = vpop.f32.mrb[0].mxu0
  %v2174 = vpop.f32.mrb[0].mxu0
  %v2175 = vadd.f32 0.0, %v2174
  %v2176 = vpop.f32.mrb[0].mxu0
  %2177 = vmatprep.mubr.bf16.mxu0 0
  %2178 = vmatmul.mubr.bf16.gmra.mrb[0].mxu0 %v2114
  %v2179 = vpop.f32.mrb[0].mxu0
  %v2180 = vadd.f32 0.0, %v2179
  %v2181 = vpop.f32.mrb[0].mxu0
  %v2182 = vpop.f32.mrb[0].mxu0
  %v2183 = vadd.f32 0.0, %v2182
  %v2184 = vpop.f32.mrb[0].mxu0
  %2185 = vmatprep.mubr.bf16.mxu0 0
  %2186 = vmatmul.mubr.bf16.gmra.mrb[0].mxu0 %v2117
  %v2187 = vpop.f32.mrb[0].mxu0
  %v2188 = vadd.f32 0.0, %v2187
  %v2189 = vpop.f32.mrb[0].mxu0
  %v2190 = vpop.f32.mrb[0].mxu0
  %v2191 = vadd.f32 0.0, %v2190
  %v2192 = vpop.f32.mrb[0].mxu0
  %2193 = vmatprep.mubr.bf16.mxu0 0
  %2194 = vmatmul.mubr.bf16.gmra.mrb[0].mxu0 %v2120
  %v2195 = vpop.f32.mrb[0].mxu0
  %v2196 = vadd.f32 0.0, %v2195
  %v2197 = vpop.f32.mrb[0].mxu0
  %v2198 = vpop.f32.mrb[0].mxu0
  %v2199 = vadd.f32 0.0, %v2198
  %v2200 = vpop.f32.mrb[0].mxu0
  %2201 = vmatprep.mubr.bf16.mxu0 0
  %2202 = vmatmul.mubr.bf16.gmra.mrb[0].mxu0 %v2123
  %v2203 = vpop.f32.mrb[0].mxu0
  %v2204 = vadd.f32 0.0, %v2203
  %v2205 = vpop.f32.mrb[0].mxu0
  %v2206 = vpop.f32.mrb[0].mxu0
  %v2207 = vadd.f32 0.0, %v2206
  %v2208 = vpop.f32.mrb[0].mxu0
  %2209 = vmatprep.mubr.bf16.mxu0 0
  %2210 = vmatmul.mubr.bf16.gmra.mrb[0].mxu0 %v2126
  %v2211 = vpop.f32.mrb[0].mxu0
  %v2212 = vadd.f32 0.0, %v2211
  %v2213 = vpop.f32.mrb[0].mxu0
  %v2214 = vpop.f32.mrb[0].mxu0
  %v2215 = vadd.f32 0.0, %v2214
  %v2216 = vpop.f32.mrb[0].mxu0
  %2217 = vmatprep.mubr.bf16.mxu0 0
  %2218 = vmatmul.mubr.bf16.gmra.mrb[0].mxu0 %v2129
  %v2219 = vpop.f32.mrb[0].mxu0
  %v2220 = vadd.f32 0.0, %v2219
  %v2221 = vpop.f32.mrb[0].mxu0
  %v2222 = vpop.f32.mrb[0].mxu0
  %v2223 = vadd.f32 0.0, %v2222
  %v2224 = vpop.f32.mrb[0].mxu0
  %2225 = vmatprep.mubr.bf16.mxu0 0
  %2226 = vmatmul.mubr.bf16.gmra.mrb[0].mxu0 %v2132
  %v2227 = vpop.f32.mrb[0].mxu0
  %v2228 = vadd.f32 0.0, %v2227
  %v2229 = vpop.f32.mrb[0].mxu0
  %v2230 = vpop.f32.mrb[0].mxu0
  %v2231 = vadd.f32 0.0, %v2230
  %v2232 = vpop.f32.mrb[0].mxu0
  %2233 = vdwg.mxu0
  %v2234 = vadd.f32 %v2052, %v2172
  %v2235 = vadd.f32 %v2053, %v2175
  %v2236 = vadd.f32 %v2054, %v2180
  %v2237 = vadd.f32 %v2055, %v2183
  %v2238 = vadd.f32 %v2056, %v2188
  %v2239 = vadd.f32 %v2057, %v2191
  %v2240 = vadd.f32 %v2058, %v2196
  %v2241 = vadd.f32 %v2059, %v2199
  %v2242 = vadd.f32 %v2060, %v2204
  %v2243 = vadd.f32 %v2061, %v2207
  %v2244 = vadd.f32 %v2062, %v2212
  %v2245 = vadd.f32 %v2063, %v2215
  %v2246 = vadd.f32 %v2064, %v2220
  %v2247 = vadd.f32 %v2065, %v2223
  %v2248 = vadd.f32 %v2066, %v2228
  %v2249 = vadd.f32 %v2067, %v2231
  %s2250 = scalar_lea.vmem %s1, 16
  %v2251 = vld [vmem:[%s2250] sm:$0x3]
  %v2252 = vunpack.c.l.b16 %v646
  %v2253 = vunpack.c.l.b16 %v660
  %v2254 = vunpack.c.l.b16 %v674
  %v2255 = vunpack.c.l.b16 %v688
  %v2256 = vunpack.c.l.b16 %v702
  %v2257 = vunpack.c.l.b16 %v716
  %v2258 = vunpack.c.l.b16 %v730
  %v2259 = vunpack.c.l.b16 %v744
  %v2260 = vunpack.c.l.b16 %v758
  %v2261 = vunpack.c.l.b16 %v772
  %v2262 = vunpack.c.l.b16 %v786
  %v2263 = vunpack.c.l.b16 %v800
  %v2264 = vunpack.c.l.b16 %v814
  %v2265 = vunpack.c.l.b16 %v828
  %v2266 = vunpack.c.l.b16 %v842
  %v2267 = vunpack.c.l.b16 %v856
  %v2268 = vpack.c.b16 %v2253, %v2252
  %v2269 = vpack.c.b16 %v2255, %v2254
  %v2270 = vpack.c.b16 %v2257, %v2256
  %v2271 = vpack.c.b16 %v2259, %v2258
  %v2272 = vpack.c.b16 %v2261, %v2260
  %v2273 = vpack.c.b16 %v2263, %v2262
  %v2274 = vpack.c.b16 %v2265, %v2264
  %v2275 = vpack.c.b16 %v2267, %v2266
  %v2277 = vsel %vm900, %v2268, 0
  %v2280 = vsel %vm900, %v2269, 0
  %v2283 = vsel %vm900, %v2270, 0
  %v2286 = vsel %vm900, %v2271, 0
  %v2289 = vsel %vm900, %v2272, 0
  %v2292 = vsel %vm900, %v2273, 0
  %v2295 = vsel %vm900, %v2274, 0
  %v2298 = vsel %vm900, %v2275, 0
  %v2301 = vsel %vm925, %v2251, 0
  %2303 = vmatprep.subr.bf16.mxu0 0
  %2304 = vmatpush1.bf16.msra.mxu0 %v2301
  %2305 = vmatprep.subr.bf16.mxu0 0
  %2306 = vmatpush1.bf16.msra.mxu0 0
  %2307 = vmatprep.subr.bf16.mxu0 0
  %2308 = vmatpush1.bf16.msra.mxu0 0
  %2309 = vmatprep.subr.bf16.mxu0 0
  %2310 = vmatpush1.bf16.msra.mxu0 0
  %2311 = vmatprep.subr.bf16.mxu0 0
  %2312 = vmatpush1.bf16.msra.mxu0 0
  %2313 = vmatprep.subr.bf16.mxu0 0
  %2314 = vmatpush1.bf16.msra.mxu0 0
  %2315 = vmatprep.subr.bf16.mxu0 0
  %2316 = vmatpush1.bf16.msra.mxu0 0
  %2317 = vmatprep.subr.bf16.mxu0 0
  %2318 = vmatpush1.bf16.msra.mxu0 0
  %2319 = vmatprep.subr.bf16.mxu0 0
  %2320 = vmatpush1.bf16.msra.mxu0 0
  %2321 = vmatprep.subr.bf16.mxu0 0
  %2322 = vmatpush1.bf16.msra.mxu0 0
  %2323 = vmatprep.subr.bf16.mxu0 0
  %2324 = vmatpush1.bf16.msra.mxu0 0
  %2325 = vmatprep.subr.bf16.mxu0 0
  %2326 = vmatpush1.bf16.msra.mxu0 0
  %2327 = vmatprep.subr.bf16.mxu0 0
  %2328 = vmatpush1.bf16.msra.mxu0 0
  %2329 = vmatprep.subr.bf16.mxu0 0
  %2330 = vmatpush1.bf16.msra.mxu0 0
  %2331 = vmatprep.subr.bf16.mxu0 0
  %2332 = vmatpush1.bf16.msra.mxu0 0
  %2333 = vmatprep.subr.bf16.mxu0 0
  %2334 = vmatpush1.bf16.msra.mxu0 0
  %2335 = vmatprep.mubr.bf16.mxu0 0
  %2336 = vmatmul.mubr.bf16.gmra.mrb[0].mxu0 %v2277
  %v2337 = vpop.f32.mrb[0].mxu0
  %v2338 = vadd.f32 0.0, %v2337
  %v2339 = vpop.f32.mrb[0].mxu0
  %v2340 = vpop.f32.mrb[0].mxu0
  %v2341 = vadd.f32 0.0, %v2340
  %v2342 = vpop.f32.mrb[0].mxu0
  %2343 = vmatprep.mubr.bf16.mxu0 0
  %2344 = vmatmul.mubr.bf16.gmra.mrb[0].mxu0 %v2280
  %v2345 = vpop.f32.mrb[0].mxu0
  %v2346 = vadd.f32 0.0, %v2345
  %v2347 = vpop.f32.mrb[0].mxu0
  %v2348 = vpop.f32.mrb[0].mxu0
  %v2349 = vadd.f32 0.0, %v2348
  %v2350 = vpop.f32.mrb[0].mxu0
  %2351 = vmatprep.mubr.bf16.mxu0 0
  %2352 = vmatmul.mubr.bf16.gmra.mrb[0].mxu0 %v2283
  %v2353 = vpop.f32.mrb[0].mxu0
  %v2354 = vadd.f32 0.0, %v2353
  %v2355 = vpop.f32.mrb[0].mxu0
  %v2356 = vpop.f32.mrb[0].mxu0
  %v2357 = vadd.f32 0.0, %v2356
  %v2358 = vpop.f32.mrb[0].mxu0
  %2359 = vmatprep.mubr.bf16.mxu0 0
  %2360 = vmatmul.mubr.bf16.gmra.mrb[0].mxu0 %v2286
  %v2361 = vpop.f32.mrb[0].mxu0
  %v2362 = vadd.f32 0.0, %v2361
  %v2363 = vpop.f32.mrb[0].mxu0
  %v2364 = vpop.f32.mrb[0].mxu0
  %v2365 = vadd.f32 0.0, %v2364
  %v2366 = vpop.f32.mrb[0].mxu0
  %2367 = vmatprep.mubr.bf16.mxu0 0
  %2368 = vmatmul.mubr.bf16.gmra.mrb[0].mxu0 %v2289
  %v2369 = vpop.f32.mrb[0].mxu0
  %v2370 = vadd.f32 0.0, %v2369
  %v2371 = vpop.f32.mrb[0].mxu0
  %v2372 = vpop.f32.mrb[0].mxu0
  %v2373 = vadd.f32 0.0, %v2372
  %v2374 = vpop.f32.mrb[0].mxu0
  %2375 = vmatprep.mubr.bf16.mxu0 0
  %2376 = vmatmul.mubr.bf16.gmra.mrb[0].mxu0 %v2292
  %v2377 = vpop.f32.mrb[0].mxu0
  %v2378 = vadd.f32 0.0, %v2377
  %v2379 = vpop.f32.mrb[0].mxu0
  %v2380 = vpop.f32.mrb[0].mxu0
  %v2381 = vadd.f32 0.0, %v2380
  %v2382 = vpop.f32.mrb[0].mxu0
  %2383 = vmatprep.mubr.bf16.mxu0 0
  %2384 = vmatmul.mubr.bf16.gmra.mrb[0].mxu0 %v2295
  %v2385 = vpop.f32.mrb[0].mxu0
  %v2386 = vadd.f32 0.0, %v2385
  %v2387 = vpop.f32.mrb[0].mxu0
  %v2388 = vpop.f32.mrb[0].mxu0
  %v2389 = vadd.f32 0.0, %v2388
  %v2390 = vpop.f32.mrb[0].mxu0
  %2391 = vmatprep.mubr.bf16.mxu0 0
  %2392 = vmatmul.mubr.bf16.gmra.mrb[0].mxu0 %v2298
  %v2393 = vpop.f32.mrb[0].mxu0
  %v2394 = vadd.f32 0.0, %v2393
  %v2395 = vpop.f32.mrb[0].mxu0
  %v2396 = vpop.f32.mrb[0].mxu0
  %v2397 = vadd.f32 0.0, %v2396
  %v2398 = vpop.f32.mrb[0].mxu0
  %2399 = vdwg.mxu0
  %v2400 = vadd.f32 %v2234, %v2338
  %v2401 = vadd.f32 %v2235, %v2341
  %v2402 = vadd.f32 %v2236, %v2346
  %v2403 = vadd.f32 %v2237, %v2349
  %v2404 = vadd.f32 %v2238, %v2354
  %v2405 = vadd.f32 %v2239, %v2357
  %v2406 = vadd.f32 %v2240, %v2362
  %v2407 = vadd.f32 %v2241, %v2365
  %v2408 = vadd.f32 %v2242, %v2370
  %v2409 = vadd.f32 %v2243, %v2373
  %v2410 = vadd.f32 %v2244, %v2378
  %v2411 = vadd.f32 %v2245, %v2381
  %v2412 = vadd.f32 %v2246, %v2386
  %v2413 = vadd.f32 %v2247, %v2389
  %v2414 = vadd.f32 %v2248, %v2394
  %v2415 = vadd.f32 %v2249, %v2397
  %v2416 = vld [vmem:[%s2] sm:$0x1]
  %v2418 = vlaneseq
  %v2419 = vshrl.u32 %v2418, 7
  %v2420 = vsub.s32 0, %v2419
  %v2421 = vrot.slane %v2416, %v2420
  %v2423 = vmul.f32 %v2400, %v2421
  %v2424 = vmul.f32 %v2401, %v2421
  %v2425 = vmul.f32 %v2402, %v2421
  %v2426 = vmul.f32 %v2403, %v2421
  %v2427 = vmul.f32 %v2404, %v2421
  %v2428 = vmul.f32 %v2405, %v2421
  %v2429 = vmul.f32 %v2406, %v2421
  %v2430 = vmul.f32 %v2407, %v2421
  %v2431 = vmul.f32 %v2408, %v2421
  %v2432 = vmul.f32 %v2409, %v2421
  %v2433 = vmul.f32 %v2410, %v2421
  %v2434 = vmul.f32 %v2411, %v2421
  %v2435 = vmul.f32 %v2412, %v2421
  %v2436 = vmul.f32 %v2413, %v2421
  %v2437 = vmul.f32 %v2414, %v2421
  %v2438 = vmul.f32 %v2415, %v2421
  %v2439 = vld [vmem:[%s3] sm:$0x1]
  %v2441 = vlaneseq
  %v2442 = vshrl.u32 %v2441, 7
  %v2443 = vsub.s32 0, %v2442
  %v2444 = vrot.slane %v2439, %v2443
  %v2446 = vadd.f32 %v2423, %v2444
  %v2447 = vadd.f32 %v2424, %v2444
  %v2448 = vadd.f32 %v2425, %v2444
  %v2449 = vadd.f32 %v2426, %v2444
  %v2450 = vadd.f32 %v2427, %v2444
  %v2451 = vadd.f32 %v2428, %v2444
  %v2452 = vadd.f32 %v2429, %v2444
  %v2453 = vadd.f32 %v2430, %v2444
  %v2454 = vadd.f32 %v2431, %v2444
  %v2455 = vadd.f32 %v2432, %v2444
  %v2456 = vadd.f32 %v2433, %v2444
  %v2457 = vadd.f32 %v2434, %v2444
  %v2458 = vadd.f32 %v2435, %v2444
  %v2459 = vadd.f32 %v2436, %v2444
  %v2460 = vadd.f32 %v2437, %v2444
  %v2461 = vadd.f32 %v2438, %v2444
  %v2462 = vmax.f32 %v2446, 0.0
  %v2463 = vmax.f32 %v2447, 0.0
  %v2464 = vmax.f32 %v2448, 0.0
  %v2465 = vmax.f32 %v2449, 0.0
  %v2466 = vmax.f32 %v2450, 0.0
  %v2467 = vmax.f32 %v2451, 0.0
  %v2468 = vmax.f32 %v2452, 0.0
  %v2469 = vmax.f32 %v2453, 0.0
  %v2470 = vmax.f32 %v2454, 0.0
  %v2471 = vmax.f32 %v2455, 0.0
  %v2472 = vmax.f32 %v2456, 0.0
  %v2473 = vmax.f32 %v2457, 0.0
  %v2474 = vmax.f32 %v2458, 0.0
  %v2475 = vmax.f32 %v2459, 0.0
  %v2476 = vmax.f32 %v2460, 0.0
  %v2477 = vmax.f32 %v2461, 0.0
  %v2478 = vpack.c.bf16 %v2463, %v2462
  %v2479 = vpack.c.bf16 %v2465, %v2464
  %v2480 = vpack.c.bf16 %v2467, %v2466
  %v2481 = vpack.c.bf16 %v2469, %v2468
  %v2482 = vpack.c.bf16 %v2471, %v2470
  %v2483 = vpack.c.bf16 %v2473, %v2472
  %v2484 = vpack.c.bf16 %v2475, %v2474
  %v2485 = vpack.c.bf16 %v2477, %v2476
  %v2494 = vunpack.c.l.b16 %v2478
  %v2495 = vunpack.c.h.b16 %v2478
  %v2496 = vunpack.c.l.b16 %v2479
  %v2497 = vunpack.c.h.b16 %v2479
  %v2498 = vunpack.c.l.b16 %v2480
  %v2499 = vunpack.c.h.b16 %v2480
  %v2500 = vunpack.c.l.b16 %v2481
  %v2501 = vunpack.c.h.b16 %v2481
  %v2502 = vunpack.c.l.b16 %v2482
  %v2503 = vunpack.c.h.b16 %v2482
  %v2504 = vunpack.c.l.b16 %v2483
  %v2505 = vunpack.c.h.b16 %v2483
  %v2506 = vunpack.c.l.b16 %v2484
  %v2507 = vunpack.c.h.b16 %v2484
  %v2508 = vunpack.c.l.b16 %v2485
  %v2509 = vunpack.c.h.b16 %v2485
  %v2510 = vpack.c.b16 %v2494, %v2494
  %v2511 = vpack.c.b16 %v2495, %v2495
  %v2512 = vpack.c.b16 %v2496, %v2496
  %v2513 = vpack.c.b16 %v2497, %v2497
  %v2514 = vpack.c.b16 %v2498, %v2498
  %v2515 = vpack.c.b16 %v2499, %v2499
  %v2516 = vpack.c.b16 %v2500, %v2500
  %v2517 = vpack.c.b16 %v2501, %v2501
  %v2518 = vpack.c.b16 %v2502, %v2502
  %v2519 = vpack.c.b16 %v2503, %v2503
  %v2520 = vpack.c.b16 %v2504, %v2504
  %v2521 = vpack.c.b16 %v2505, %v2505
  %v2522 = vpack.c.b16 %v2506, %v2506
  %v2523 = vpack.c.b16 %v2507, %v2507
  %v2524 = vpack.c.b16 %v2508, %v2508
  %v2525 = vpack.c.b16 %v2509, %v2509
  %2542 = vst [vmem:[%s4] sm:$0xf] %v2510
  %2543 = vst [vmem:[%s4 + $0x4] sm:$0xf] %v2511
  %2544 = vst [vmem:[%s4 + $0x8] sm:$0xf] %v2512
  %2545 = vst [vmem:[%s4 + $0xc] sm:$0xf] %v2513
  %2546 = vst [vmem:[%s4 + $0x10] sm:$0xf] %v2514
  %2547 = vst [vmem:[%s4 + $0x14] sm:$0xf] %v2515
  %2548 = vst [vmem:[%s4 + $0x18] sm:$0xf] %v2516
  %2549 = vst [vmem:[%s4 + $0x1c] sm:$0xf] %v2517
  %2550 = vst [vmem:[%s4 + $0x20] sm:$0xf] %v2518
  %2551 = vst [vmem:[%s4 + $0x24] sm:$0xf] %v2519
  %2552 = vst [vmem:[%s4 + $0x28] sm:$0xf] %v2520
  %2553 = vst [vmem:[%s4 + $0x2c] sm:$0xf] %v2521
  %2554 = vst [vmem:[%s4 + $0x30] sm:$0xf] %v2522
  %2555 = vst [vmem:[%s4 + $0x34] sm:$0xf] %v2523
  %2556 = vst [vmem:[%s4 + $0x38] sm:$0xf] %v2524
  %2557 = vst [vmem:[%s4 + $0x3c] sm:$0xf] %v2525
  // Predicated region
  $region18: #{basic_block_forward.2} parent=0 // pred_check
    _
  $region19: #{basic_block_forward.2} parent=0 // pred_check_branch
    %2559 = sbr.rel (0) target = $region21
  $region20: #{basic_block_forward.2} parent=0 // pred_region
    _
  $region21: #{basic_block_forward.2} parent=0 // pred_fallthru
    _
  // Predicated region
  $region22: #{basic_block_forward.2} parent=0 // pred_check
    _
  $region23: #{basic_block_forward.2} parent=0 // pred_check_branch
    %2561 = sbr.rel (0) target = $region25
  $region24: #{basic_block_forward.2} parent=0 // pred_region
    _
  $region25: #{basic_block_forward.2} parent=0 // pred_fallthru
    _

// kernel: basic_block_forward.3
$region0: #{basic_block_forward.3}
  #allocation0 [shape = 'u32[]', space=smem, size = 0x4, offset = 0x4, fixed_abs, tag = 'smem constant byte address 0x4 - core index']
  #allocation1 [shape = 'u32[144,128]{1,0:T(1,128)}', space=vmem, size = 0x12000, scoped, tag = 'internal scratch']
  %s0 = inlined_call_operand.vmem [shape: bf16[2,1,10,10,128], index: 0, kind: input, shape index: {}]
  %s1 = inlined_call_operand.vmem [shape: bf16[1152,128], index: 1, kind: input, shape index: {}]
  %s2 = inlined_call_operand.vmem [shape: f32[1,128], index: 2, kind: input, shape index: {}]
  %s3 = inlined_call_operand.vmem [shape: f32[1,128], index: 3, kind: input, shape index: {}]
  %s4 = inlined_call_operand.vmem [shape: bf16[2,4,9,9,4], index: 4, kind: input, shape index: {}]
  %s5 = inlined_call_operand.vmem [shape: bf16[4,128], index: 5, kind: input, shape index: {}]
  %s6 = inlined_call_operand.vmem [shape: f32[1,128], index: 6, kind: input, shape index: {}]
  %s7 = inlined_call_operand.vmem [shape: f32[1,128], index: 7, kind: input, shape index: {}]
  %s8 = inlined_call_operand.vmem [shape: bf16[2,64,128], index: 8, kind: output, shape index: {}]
  %s9 = sld [smem:[#allocation0]]
  $region83: #{basic_block_forward.3} parent=0
    _
  %s11 = ssub.s32 1, %s9
  %s12 = scalar_select 0, %s11, %s9
  $region1: #{basic_block_forward.3} parent=0
    #allocation2 [shape = 'u8[73728]{0}', space=vmem, size = 0x12000, scoped, tag = 'input window, operand 4, single buffered']
    // Predicated region
    $region2: #{basic_block_forward.3} parent=1 // pred_check
      _
    $region3: #{basic_block_forward.3} parent=1 // pred_check_branch
      %14 = sbr.rel (0) target = $region5
    $region4: #{basic_block_forward.3} parent=1 // pred_region
      _
    $region5: #{basic_block_forward.3} parent=1 // pred_fallthru
      _
    // Predicated region
    $region6: #{basic_block_forward.3} parent=1 // pred_check
      _
    $region7: #{basic_block_forward.3} parent=1 // pred_check_branch
      %16 = sbr.rel (0) target = $region9
    $region8: #{basic_block_forward.3} parent=1 // pred_region
      _
    $region9: #{basic_block_forward.3} parent=1 // pred_fallthru
      _
    // Predicated region
    $region10: #{basic_block_forward.3} parent=1 // pred_check
      _
    $region11: #{basic_block_forward.3} parent=1 // pred_check_branch
      %18 = sbr.rel (0) target = $region13
    $region12: #{basic_block_forward.3} parent=1 // pred_region
      _
    $region13: #{basic_block_forward.3} parent=1 // pred_fallthru
      _
    // Predicated region
    $region14: #{basic_block_forward.3} parent=1 // pred_check
      _
    $region15: #{basic_block_forward.3} parent=1 // pred_check_branch
      %20 = sbr.rel (0) target = $region17
    $region16: #{basic_block_forward.3} parent=1 // pred_region
      _
    $region17: #{basic_block_forward.3} parent=1 // pred_fallthru
      _
    // Predicated region
    $region18: #{basic_block_forward.3} parent=1 // pred_check
      _
    $region19: #{basic_block_forward.3} parent=1 // pred_check_branch
      %22 = sbr.rel (0) target = $region21
    $region20: #{basic_block_forward.3} parent=1 // pred_region
      %s23 = scalar_lea.vmem %s4, 216
      // Predicated region
      $region22: #{basic_block_forward.3} parent=20 // pred_check
        _
      $region23: #{basic_block_forward.3} parent=20 // pred_check_branch
        %25 = sbr.rel (0) target = $region25
      $region24: #{basic_block_forward.3} parent=20 // pred_region
        // Predicated region
        $region26: #{basic_block_forward.3} parent=24 // pred_check
          _
        $region27: #{basic_block_forward.3} parent=24 // pred_check_branch
          %27 = sbr.rel target = $region29
        $region28: #{basic_block_forward.3} parent=24 // pred_region
          // Predicated region
          $region41: #{basic_block_forward.3} parent=28 // pred_check
            _
          $region42: #{basic_block_forward.3} parent=28 // pred_check_branch
            %112 = sbr.rel (0) target = $region44
          $region43: #{basic_block_forward.3} parent=28 // pred_region
            loop: start=0, step=1, limit=1
            $region45: #{basic_block_forward.3} parent=43 // loop_pre_header
              _
            $region46: #{basic_block_forward.3} parent=43 // loop_header
              %s114 = sphi 0, %s118
              %p115 = scmp.ge.s32.totalorder %s114, 1
              %s119 = sphi %s23, %s23
              %s120 = sphi [#allocation2], [#allocation2]
            $region47: #{basic_block_forward.3} parent=43 // loop_header_branch
              %117 = sbr.rel (%p115) target = $region51
            $region48: #{basic_block_forward.3} parent=43 // loop_body
              _
            $region49: #{basic_block_forward.3} parent=43 // loop_footer
              %s118 = sadd.s32 1, %s114
            $region50: #{basic_block_forward.3} parent=43 // loop_footer_branch
              %113 = sbr.rel target = $region46
            $region51: #{basic_block_forward.3} parent=43 // loop_exit
              _
            loop: start=0, step=1, limit=1
            $region52: #{basic_block_forward.3} parent=43 // loop_pre_header
              _
            $region53: #{basic_block_forward.3} parent=43 // loop_header
              %s123 = sphi 0, %s127
              %p124 = scmp.ge.s32.totalorder %s123, 1
              %s128 = sphi %s23, %s23
              %s129 = sphi [#allocation2], [#allocation2]
            $region54: #{basic_block_forward.3} parent=43 // loop_header_branch
              %126 = sbr.rel (%p124) target = $region58
            $region55: #{basic_block_forward.3} parent=43 // loop_body
              %v130 = vld [vmem:[%s128] sm:$0xf]
              %131 = vst [vmem:[%s129] sm:$0xf] %v130
              %v132 = vld [vmem:[%s128 + $0x4] sm:$0xf]
              %133 = vst [vmem:[%s129 + $0x4] sm:$0xf] %v132
              %v134 = vld [vmem:[%s128 + $0x8] sm:$0xf]
              %135 = vst [vmem:[%s129 + $0x8] sm:$0xf] %v134
              %v136 = vld [vmem:[%s128 + $0xc] sm:$0xf]
              %137 = vst [vmem:[%s129 + $0xc] sm:$0xf] %v136
              %v138 = vld [vmem:[%s128 + $0x10] sm:$0xf]
              %139 = vst [vmem:[%s129 + $0x10] sm:$0xf] %v138
              %v140 = vld [vmem:[%s128 + $0x14] sm:$0xf]
              %141 = vst [vmem:[%s129 + $0x14] sm:$0xf] %v140
              %v142 = vld [vmem:[%s128 + $0x18] sm:$0xf]
              %143 = vst [vmem:[%s129 + $0x18] sm:$0xf] %v142
              %v144 = vld [vmem:[%s128 + $0x1c] sm:$0xf]
              %145 = vst [vmem:[%s129 + $0x1c] sm:$0xf] %v144
              %v146 = vld [vmem:[%s128 + $0x20] sm:$0xf]
              %147 = vst [vmem:[%s129 + $0x20] sm:$0xf] %v146
              %v148 = vld [vmem:[%s128 + $0x24] sm:$0xf]
              %149 = vst [vmem:[%s129 + $0x24] sm:$0xf] %v148
              %v150 = vld [vmem:[%s128 + $0x28] sm:$0xf]
              %151 = vst [vmem:[%s129 + $0x28] sm:$0xf] %v150
              %v152 = vld [vmem:[%s128 + $0x2c] sm:$0xf]
              %153 = vst [vmem:[%s129 + $0x2c] sm:$0xf] %v152
              %v154 = vld [vmem:[%s128 + $0x30] sm:$0xf]
              %155 = vst [vmem:[%s129 + $0x30] sm:$0xf] %v154
              %v156 = vld [vmem:[%s128 + $0x34] sm:$0xf]
              %157 = vst [vmem:[%s129 + $0x34] sm:$0xf] %v156
              %v158 = vld [vmem:[%s128 + $0x38] sm:$0xf]
              %159 = vst [vmem:[%s129 + $0x38] sm:$0xf] %v158
              %v160 = vld [vmem:[%s128 + $0x3c] sm:$0xf]
              %161 = vst [vmem:[%s129 + $0x3c] sm:$0xf] %v160
              %v162 = vld [vmem:[%s128 + $0x40] sm:$0xf]
              %163 = vst [vmem:[%s129 + $0x40] sm:$0xf] %v162
              %v164 = vld [vmem:[%s128 + $0x44] sm:$0xf]
              %165 = vst [vmem:[%s129 + $0x44] sm:$0xf] %v164
              %v166 = vld [vmem:[%s128 + $0x120] sm:$0xf]
              %167 = vst [vmem:[%s129 + $0x48] sm:$0xf] %v166
              %v168 = vld [vmem:[%s128 + $0x124] sm:$0xf]
              %169 = vst [vmem:[%s129 + $0x4c] sm:$0xf] %v168
              %v170 = vld [vmem:[%s128 + $0x128] sm:$0xf]
              %171 = vst [vmem:[%s129 + $0x50] sm:$0xf] %v170
              %v172 = vld [vmem:[%s128 + $0x12c] sm:$0xf]
              %173 = vst [vmem:[%s129 + $0x54] sm:$0xf] %v172
              %v174 = vld [vmem:[%s128 + $0x130] sm:$0xf]
              %175 = vst [vmem:[%s129 + $0x58] sm:$0xf] %v174
              %v176 = vld [vmem:[%s128 + $0x134] sm:$0xf]
              %177 = vst [vmem:[%s129 + $0x5c] sm:$0xf] %v176
              %v178 = vld [vmem:[%s128 + $0x138] sm:$0xf]
              %179 = vst [vmem:[%s129 + $0x60] sm:$0xf] %v178
              %v180 = vld [vmem:[%s128 + $0x13c] sm:$0xf]
              %181 = vst [vmem:[%s129 + $0x64] sm:$0xf] %v180
              %v182 = vld [vmem:[%s128 + $0x140] sm:$0xf]
              %183 = vst [vmem:[%s129 + $0x68] sm:$0xf] %v182
              %v184 = vld [vmem:[%s128 + $0x144] sm:$0xf]
              %185 = vst [vmem:[%s129 + $0x6c] sm:$0xf] %v184
              %v186 = vld [vmem:[%s128 + $0x148] sm:$0xf]
              %187 = vst [vmem:[%s129 + $0x70] sm:$0xf] %v186
              %v188 = vld [vmem:[%s128 + $0x14c] sm:$0xf]
              %189 = vst [vmem:[%s129 + $0x74] sm:$0xf] %v188
              %v190 = vld [vmem:[%s128 + $0x150] sm:$0xf]
              %191 = vst [vmem:[%s129 + $0x78] sm:$0xf] %v190
              %v192 = vld [vmem:[%s128 + $0x154] sm:$0xf]
              %193 = vst [vmem:[%s129 + $0x7c] sm:$0xf] %v192
              %v194 = vld [vmem:[%s128 + $0x158] sm:$0xf]
              %195 = vst [vmem:[%s129 + $0x80] sm:$0xf] %v194
              %v196 = vld [vmem:[%s128 + $0x15c] sm:$0xf]
              %197 = vst [vmem:[%s129 + $0x84] sm:$0xf] %v196
              %v198 = vld [vmem:[%s128 + $0x160] sm:$0xf]
              %199 = vst [vmem:[%s129 + $0x88] sm:$0xf] %v198
              %v200 = vld [vmem:[%s128 + $0x164] sm:$0xf]
              %201 = vst [vmem:[%s129 + $0x8c] sm:$0xf] %v200
            $region56: #{basic_block_forward.3} parent=43 // loop_footer
              %s127 = sadd.s32 1, %s123
            $region57: #{basic_block_forward.3} parent=43 // loop_footer_branch
              %122 = sbr.rel target = $region53
            $region58: #{basic_block_forward.3} parent=43 // loop_exit
              _
          $region44: #{basic_block_forward.3} parent=28 // pred_fallthru
            _
        $region29: #{basic_block_forward.3} parent=24 // pred_fallthru
          _
        // Predicated region
        $region30: #{basic_block_forward.3} parent=24 // pred_check
          _
        $region31: #{basic_block_forward.3} parent=24 // pred_check_branch
          %29 = sbr.rel (0) target = $region33
        $region32: #{basic_block_forward.3} parent=24 // pred_region
          loop: start=0, step=1, limit=1
          $region34: #{basic_block_forward.3} parent=32 // loop_pre_header
            _
          $region35: #{basic_block_forward.3} parent=32 // loop_header
            %s32 = sphi 0, %s36
            %p33 = scmp.ge.s32.totalorder %s32, 1
            %s37 = sphi %s23, %s23
            %s38 = sphi [#allocation2], [#allocation2]
          $region36: #{basic_block_forward.3} parent=32 // loop_header_branch
            %35 = sbr.rel (%p33) target = $region40
          $region37: #{basic_block_forward.3} parent=32 // loop_body
            %v39 = vld [vmem:[%s37] sm:$0xf]
            %40 = vst [vmem:[%s38] sm:$0xf] %v39
            %v41 = vld [vmem:[%s37 + $0x4] sm:$0xf]
            %42 = vst [vmem:[%s38 + $0x4] sm:$0xf] %v41
            %v43 = vld [vmem:[%s37 + $0x8] sm:$0xf]
            %44 = vst [vmem:[%s38 + $0x8] sm:$0xf] %v43
            %v45 = vld [vmem:[%s37 + $0xc] sm:$0xf]
            %46 = vst [vmem:[%s38 + $0xc] sm:$0xf] %v45
            %v47 = vld [vmem:[%s37 + $0x10] sm:$0xf]
            %48 = vst [vmem:[%s38 + $0x10] sm:$0xf] %v47
            %v49 = vld [vmem:[%s37 + $0x14] sm:$0xf]
            %50 = vst [vmem:[%s38 + $0x14] sm:$0xf] %v49
            %v51 = vld [vmem:[%s37 + $0x18] sm:$0xf]
            %52 = vst [vmem:[%s38 + $0x18] sm:$0xf] %v51
            %v53 = vld [vmem:[%s37 + $0x1c] sm:$0xf]
            %54 = vst [vmem:[%s38 + $0x1c] sm:$0xf] %v53
            %v55 = vld [vmem:[%s37 + $0x20] sm:$0xf]
            %56 = vst [vmem:[%s38 + $0x20] sm:$0xf] %v55
            %v57 = vld [vmem:[%s37 + $0x24] sm:$0xf]
            %58 = vst [vmem:[%s38 + $0x24] sm:$0xf] %v57
            %v59 = vld [vmem:[%s37 + $0x28] sm:$0xf]
            %60 = vst [vmem:[%s38 + $0x28] sm:$0xf] %v59
            %v61 = vld [vmem:[%s37 + $0x2c] sm:$0xf]
            %62 = vst [vmem:[%s38 + $0x2c] sm:$0xf] %v61
            %v63 = vld [vmem:[%s37 + $0x30] sm:$0xf]
            %64 = vst [vmem:[%s38 + $0x30] sm:$0xf] %v63
            %v65 = vld [vmem:[%s37 + $0x34] sm:$0xf]
            %66 = vst [vmem:[%s38 + $0x34] sm:$0xf] %v65
            %v67 = vld [vmem:[%s37 + $0x38] sm:$0xf]
            %68 = vst [vmem:[%s38 + $0x38] sm:$0xf] %v67
            %v69 = vld [vmem:[%s37 + $0x3c] sm:$0xf]
            %70 = vst [vmem:[%s38 + $0x3c] sm:$0xf] %v69
            %v71 = vld [vmem:[%s37 + $0x40] sm:$0xf]
            %72 = vst [vmem:[%s38 + $0x40] sm:$0xf] %v71
            %v73 = vld [vmem:[%s37 + $0x44] sm:$0xf]
            %74 = vst [vmem:[%s38 + $0x44] sm:$0xf] %v73
            %v75 = vld [vmem:[%s37 + $0x120] sm:$0xf]
            %76 = vst [vmem:[%s38 + $0x48] sm:$0xf] %v75
            %v77 = vld [vmem:[%s37 + $0x124] sm:$0xf]
            %78 = vst [vmem:[%s38 + $0x4c] sm:$0xf] %v77
            %v79 = vld [vmem:[%s37 + $0x128] sm:$0xf]
            %80 = vst [vmem:[%s38 + $0x50] sm:$0xf] %v79
            %v81 = vld [vmem:[%s37 + $0x12c] sm:$0xf]
            %82 = vst [vmem:[%s38 + $0x54] sm:$0xf] %v81
            %v83 = vld [vmem:[%s37 + $0x130] sm:$0xf]
            %84 = vst [vmem:[%s38 + $0x58] sm:$0xf] %v83
            %v85 = vld [vmem:[%s37 + $0x134] sm:$0xf]
            %86 = vst [vmem:[%s38 + $0x5c] sm:$0xf] %v85
            %v87 = vld [vmem:[%s37 + $0x138] sm:$0xf]
            %88 = vst [vmem:[%s38 + $0x60] sm:$0xf] %v87
            %v89 = vld [vmem:[%s37 + $0x13c] sm:$0xf]
            %90 = vst [vmem:[%s38 + $0x64] sm:$0xf] %v89
            %v91 = vld [vmem:[%s37 + $0x140] sm:$0xf]
            %92 = vst [vmem:[%s38 + $0x68] sm:$0xf] %v91
            %v93 = vld [vmem:[%s37 + $0x144] sm:$0xf]
            %94 = vst [vmem:[%s38 + $0x6c] sm:$0xf] %v93
            %v95 = vld [vmem:[%s37 + $0x148] sm:$0xf]
            %96 = vst [vmem:[%s38 + $0x70] sm:$0xf] %v95
            %v97 = vld [vmem:[%s37 + $0x14c] sm:$0xf]
            %98 = vst [vmem:[%s38 + $0x74] sm:$0xf] %v97
            %v99 = vld [vmem:[%s37 + $0x150] sm:$0xf]
            %100 = vst [vmem:[%s38 + $0x78] sm:$0xf] %v99
            %v101 = vld [vmem:[%s37 + $0x154] sm:$0xf]
            %102 = vst [vmem:[%s38 + $0x7c] sm:$0xf] %v101
            %v103 = vld [vmem:[%s37 + $0x158] sm:$0xf]
            %104 = vst [vmem:[%s38 + $0x80] sm:$0xf] %v103
            %v105 = vld [vmem:[%s37 + $0x15c] sm:$0xf]
            %106 = vst [vmem:[%s38 + $0x84] sm:$0xf] %v105
            %v107 = vld [vmem:[%s37 + $0x160] sm:$0xf]
            %108 = vst [vmem:[%s38 + $0x88] sm:$0xf] %v107
            %v109 = vld [vmem:[%s37 + $0x164] sm:$0xf]
            %110 = vst [vmem:[%s38 + $0x8c] sm:$0xf] %v109
          $region38: #{basic_block_forward.3} parent=32 // loop_footer
            %s36 = sadd.s32 1, %s32
          $region39: #{basic_block_forward.3} parent=32 // loop_footer_branch
            %31 = sbr.rel target = $region35
          $region40: #{basic_block_forward.3} parent=32 // loop_exit
            _
        $region33: #{basic_block_forward.3} parent=24 // pred_fallthru
          _
      $region25: #{basic_block_forward.3} parent=20 // pred_fallthru
        _
      %202 = vnop
    $region21: #{basic_block_forward.3} parent=1 // pred_fallthru
      _
    // Predicated region
    $region59: #{basic_block_forward.3} parent=1 // pred_check
      _
    $region60: #{basic_block_forward.3} parent=1 // pred_check_branch
      %204 = sbr.rel (0) target = $region62
    $region61: #{basic_block_forward.3} parent=1 // pred_region
      _
    $region62: #{basic_block_forward.3} parent=1 // pred_fallthru
      _
    // Predicated region
    $region63: #{basic_block_forward.3} parent=1 // pred_check
      _
    $region64: #{basic_block_forward.3} parent=1 // pred_check_branch
      %206 = sbr.rel (0) target = $region66
    $region65: #{basic_block_forward.3} parent=1 // pred_region
      _
    $region66: #{basic_block_forward.3} parent=1 // pred_fallthru
      _
    // Predicated region
    $region67: #{basic_block_forward.3} parent=1 // pred_check
      _
    $region68: #{basic_block_forward.3} parent=1 // pred_check_branch
      %208 = sbr.rel (0) target = $region70
    $region69: #{basic_block_forward.3} parent=1 // pred_region
      _
    $region70: #{basic_block_forward.3} parent=1 // pred_fallthru
      _
    // Predicated region
    $region71: #{basic_block_forward.3} parent=1 // pred_check
      _
    $region72: #{basic_block_forward.3} parent=1 // pred_check_branch
      %210 = sbr.rel (0) target = $region74
    $region73: #{basic_block_forward.3} parent=1 // pred_region
      _
    $region74: #{basic_block_forward.3} parent=1 // pred_fallthru
      _
    %s212 = smul.u32 0, 8
    %s213 = smul.u32 %s212, 2
    %s214 = smul.addr %s213, 4
    %s215 = scalar_lea.vmem %s0, %s214
    %v216 = vld [vmem:[%s215] sm:$0xf]
    %v217 = vld [vmem:[%s215 + $0x8] sm:$0xf]
    %v218 = vld [vmem:[%s215 + $0x10] sm:$0xf]
    %v219 = vld [vmem:[%s215 + $0x18] sm:$0xf]
    %v220 = vld [vmem:[%s215 + $0x20] sm:$0xf]
    %v221 = vld [vmem:[%s215 + $0x28] sm:$0xf]
    %v222 = vld [vmem:[%s215 + $0x30] sm:$0xf]
    %v223 = vld [vmem:[%s215 + $0x38] sm:$0xf]
    %v224 = vld [vmem:[%s215 + $0x50] sm:$0xf]
    %v225 = vld [vmem:[%s215 + $0x58] sm:$0xf]
    %v226 = vld [vmem:[%s215 + $0x60] sm:$0xf]
    %v227 = vld [vmem:[%s215 + $0x68] sm:$0xf]
    %v228 = vld [vmem:[%s215 + $0x70] sm:$0xf]
    %v229 = vld [vmem:[%s215 + $0x78] sm:$0xf]
    %v230 = vld [vmem:[%s215 + $0x80] sm:$0xf]
    %v231 = vld [vmem:[%s215 + $0x88] sm:$0xf]
    %v232 = vld [vmem:[%s215 + $0x4] sm:$0x1]
    %v233 = vld [vmem:[%s215 + $0xc] sm:$0x1]
    %v234 = vld [vmem:[%s215 + $0x14] sm:$0x1]
    %v235 = vld [vmem:[%s215 + $0x1c] sm:$0x1]
    %v236 = vld [vmem:[%s215 + $0x24] sm:$0x1]
    %v237 = vld [vmem:[%s215 + $0x2c] sm:$0x1]
    %v238 = vld [vmem:[%s215 + $0x34] sm:$0x1]
    %v239 = vld [vmem:[%s215 + $0x3c] sm:$0x1]
    %v240 = vld [vmem:[%s215 + $0x54] sm:$0x1]
    %v241 = vld [vmem:[%s215 + $0x5c] sm:$0x1]
    %v242 = vld [vmem:[%s215 + $0x64] sm:$0x1]
    %v243 = vld [vmem:[%s215 + $0x6c] sm:$0x1]
    %v244 = vld [vmem:[%s215 + $0x74] sm:$0x1]
    %v245 = vld [vmem:[%s215 + $0x7c] sm:$0x1]
    %v246 = vld [vmem:[%s215 + $0x84] sm:$0x1]
    %v247 = vld [vmem:[%s215 + $0x8c] sm:$0x1]
    %vm248 = vsmask.f32 3328
    %vm249 = vsmask.f32 7440
    %vm250 = vmor %vm248, %vm249
    %v252 = vshrl.u32 %v216, 16
    %v254 = vrot.slane %v252, 4
    %v255 = vshll.u32 %v216, 16
    %v257 = vrot.slane %v255, 5
    %v258 = vor.u32 %v254, %v257
    %v259 = vrot.slane %v258, 4
    %v261 = vshll.u32 %v232, 16
    %v263 = vrot.slane %v261, 5
    %v264 = vsel %vm250, %v259, %v263
    %v266 = vshrl.u32 %v217, 16
    %v268 = vrot.slane %v266, 4
    %v269 = vshll.u32 %v217, 16
    %v271 = vrot.slane %v269, 5
    %v272 = vor.u32 %v268, %v271
    %v273 = vrot.slane %v272, 4
    %v275 = vshll.u32 %v233, 16
    %v277 = vrot.slane %v275, 5
    %v278 = vsel %vm250, %v273, %v277
    %v280 = vshrl.u32 %v218, 16
    %v282 = vrot.slane %v280, 4
    %v283 = vshll.u32 %v218, 16
    %v285 = vrot.slane %v283, 5
    %v286 = vor.u32 %v282, %v285
    %v287 = vrot.slane %v286, 4
    %v289 = vshll.u32 %v234, 16
    %v291 = vrot.slane %v289, 5
    %v292 = vsel %vm250, %v287, %v291
    %v294 = vshrl.u32 %v219, 16
    %v296 = vrot.slane %v294, 4
    %v297 = vshll.u32 %v219, 16
    %v299 = vrot.slane %v297, 5
    %v300 = vor.u32 %v296, %v299
    %v301 = vrot.slane %v300, 4
    %v303 = vshll.u32 %v235, 16
    %v305 = vrot.slane %v303, 5
    %v306 = vsel %vm250, %v301, %v305
    %v308 = vshrl.u32 %v220, 16
    %v310 = vrot.slane %v308, 4
    %v311 = vshll.u32 %v220, 16
    %v313 = vrot.slane %v311, 5
    %v314 = vor.u32 %v310, %v313
    %v315 = vrot.slane %v314, 4
    %v317 = vshll.u32 %v236, 16
    %v319 = vrot.slane %v317, 5
    %v320 = vsel %vm250, %v315, %v319
    %v322 = vshrl.u32 %v221, 16
    %v324 = vrot.slane %v322, 4
    %v325 = vshll.u32 %v221, 16
    %v327 = vrot.slane %v325, 5
    %v328 = vor.u32 %v324, %v327
    %v329 = vrot.slane %v328, 4
    %v331 = vshll.u32 %v237, 16
    %v333 = vrot.slane %v331, 5
    %v334 = vsel %vm250, %v329, %v333
    %v336 = vshrl.u32 %v222, 16
    %v338 = vrot.slane %v336, 4
    %v339 = vshll.u32 %v222, 16
    %v341 = vrot.slane %v339, 5
    %v342 = vor.u32 %v338, %v341
    %v343 = vrot.slane %v342, 4
    %v345 = vshll.u32 %v238, 16
    %v347 = vrot.slane %v345, 5
    %v348 = vsel %vm250, %v343, %v347
    %v350 = vshrl.u32 %v223, 16
    %v352 = vrot.slane %v350, 4
    %v353 = vshll.u32 %v223, 16
    %v355 = vrot.slane %v353, 5
    %v356 = vor.u32 %v352, %v355
    %v357 = vrot.slane %v356, 4
    %v359 = vshll.u32 %v239, 16
    %v361 = vrot.slane %v359, 5
    %v362 = vsel %vm250, %v357, %v361
    %v364 = vshrl.u32 %v224, 16
    %v366 = vrot.slane %v364, 4
    %v367 = vshll.u32 %v224, 16
    %v369 = vrot.slane %v367, 5
    %v370 = vor.u32 %v366, %v369
    %v371 = vrot.slane %v370, 4
    %v373 = vshll.u32 %v240, 16
    %v375 = vrot.slane %v373, 5
    %v376 = vsel %vm250, %v371, %v375
    %v378 = vshrl.u32 %v225, 16
    %v380 = vrot.slane %v378, 4
    %v381 = vshll.u32 %v225, 16
    %v383 = vrot.slane %v381, 5
    %v384 = vor.u32 %v380, %v383
    %v385 = vrot.slane %v384, 4
    %v387 = vshll.u32 %v241, 16
    %v389 = vrot.slane %v387, 5
    %v390 = vsel %vm250, %v385, %v389
    %v392 = vshrl.u32 %v226, 16
    %v394 = vrot.slane %v392, 4
    %v395 = vshll.u32 %v226, 16
    %v397 = vrot.slane %v395, 5
    %v398 = vor.u32 %v394, %v397
    %v399 = vrot.slane %v398, 4
    %v401 = vshll.u32 %v242, 16
    %v403 = vrot.slane %v401, 5
    %v404 = vsel %vm250, %v399, %v403
    %v406 = vshrl.u32 %v227, 16
    %v408 = vrot.slane %v406, 4
    %v409 = vshll.u32 %v227, 16
    %v411 = vrot.slane %v409, 5
    %v412 = vor.u32 %v408, %v411
    %v413 = vrot.slane %v412, 4
    %v415 = vshll.u32 %v243, 16
    %v417 = vrot.slane %v415, 5
    %v418 = vsel %vm250, %v413, %v417
    %v420 = vshrl.u32 %v228, 16
    %v422 = vrot.slane %v420, 4
    %v423 = vshll.u32 %v228, 16
    %v425 = vrot.slane %v423, 5
    %v426 = vor.u32 %v422, %v425
    %v427 = vrot.slane %v426, 4
    %v429 = vshll.u32 %v244, 16
    %v431 = vrot.slane %v429, 5
    %v432 = vsel %vm250, %v427, %v431
    %v434 = vshrl.u32 %v229, 16
    %v436 = vrot.slane %v434, 4
    %v437 = vshll.u32 %v229, 16
    %v439 = vrot.slane %v437, 5
    %v440 = vor.u32 %v436, %v439
    %v441 = vrot.slane %v440, 4
    %v443 = vshll.u32 %v245, 16
    %v445 = vrot.slane %v443, 5
    %v446 = vsel %vm250, %v441, %v445
    %v448 = vshrl.u32 %v230, 16
    %v450 = vrot.slane %v448, 4
    %v451 = vshll.u32 %v230, 16
    %v453 = vrot.slane %v451, 5
    %v454 = vor.u32 %v450, %v453
    %v455 = vrot.slane %v454, 4
    %v457 = vshll.u32 %v246, 16
    %v459 = vrot.slane %v457, 5
    %v460 = vsel %vm250, %v455, %v459
    %v462 = vshrl.u32 %v231, 16
    %v464 = vrot.slane %v462, 4
    %v465 = vshll.u32 %v231, 16
    %v467 = vrot.slane %v465, 5
    %v468 = vor.u32 %v464, %v467
    %v469 = vrot.slane %v468, 4
    %v471 = vshll.u32 %v247, 16
    %v473 = vrot.slane %v471, 5
    %v474 = vsel %vm250, %v469, %v473
    %v475 = vld [vmem:[%s215] sm:$0xe]
    %v476 = vld [vmem:[%s215 + $0x8] sm:$0xe]
    %v477 = vld [vmem:[%s215 + $0x10] sm:$0xe]
    %v478 = vld [vmem:[%s215 + $0x18] sm:$0xe]
    %v479 = vld [vmem:[%s215 + $0x20] sm:$0xe]
    %v480 = vld [vmem:[%s215 + $0x28] sm:$0xe]
    %v481 = vld [vmem:[%s215 + $0x30] sm:$0xe]
    %v482 = vld [vmem:[%s215 + $0x38] sm:$0xe]
    %v483 = vld [vmem:[%s215 + $0x50] sm:$0xe]
    %v484 = vld [vmem:[%s215 + $0x58] sm:$0xe]
    %v485 = vld [vmem:[%s215 + $0x60] sm:$0xe]
    %v486 = vld [vmem:[%s215 + $0x68] sm:$0xe]
    %v487 = vld [vmem:[%s215 + $0x70] sm:$0xe]
    %v488 = vld [vmem:[%s215 + $0x78] sm:$0xe]
    %v489 = vld [vmem:[%s215 + $0x80] sm:$0xe]
    %v490 = vld [vmem:[%s215 + $0x88] sm:$0xe]
    %vm523 = vcmask 1042432
    %vm524 = vcmask 1046532
    %vm525 = vmor %vm523, %vm524
    %v526 = vrot.slane %v475, 5
    %v527 = vrot.slane %v526, 4
    %v528 = vrot.slane %v232, 5
    %v529 = vsel %vm525, %v527, %v528
    %v530 = vrot.slane %v476, 5
    %v531 = vrot.slane %v530, 4
    %v532 = vrot.slane %v233, 5
    %v533 = vsel %vm525, %v531, %v532
    %v534 = vrot.slane %v477, 5
    %v535 = vrot.slane %v534, 4
    %v536 = vrot.slane %v234, 5
    %v537 = vsel %vm525, %v535, %v536
    %v538 = vrot.slane %v478, 5
    %v539 = vrot.slane %v538, 4
    %v540 = vrot.slane %v235, 5
    %v541 = vsel %vm525, %v539, %v540
    %v542 = vrot.slane %v479, 5
    %v543 = vrot.slane %v542, 4
    %v544 = vrot.slane %v236, 5
    %v545 = vsel %vm525, %v543, %v544
    %v546 = vrot.slane %v480, 5
    %v547 = vrot.slane %v546, 4
    %v548 = vrot.slane %v237, 5
    %v549 = vsel %vm525, %v547, %v548
    %v550 = vrot.slane %v481, 5
    %v551 = vrot.slane %v550, 4
    %v552 = vrot.slane %v238, 5
    %v553 = vsel %vm525, %v551, %v552
    %v554 = vrot.slane %v482, 5
    %v555 = vrot.slane %v554, 4
    %v556 = vrot.slane %v239, 5
    %v557 = vsel %vm525, %v555, %v556
    %v558 = vrot.slane %v483, 5
    %v559 = vrot.slane %v558, 4
    %v560 = vrot.slane %v240, 5
    %v561 = vsel %vm525, %v559, %v560
    %v562 = vrot.slane %v484, 5
    %v563 = vrot.slane %v562, 4
    %v564 = vrot.slane %v241, 5
    %v565 = vsel %vm525, %v563, %v564
    %v566 = vrot.slane %v485, 5
    %v567 = vrot.slane %v566, 4
    %v568 = vrot.slane %v242, 5
    %v569 = vsel %vm525, %v567, %v568
    %v570 = vrot.slane %v486, 5
    %v571 = vrot.slane %v570, 4
    %v572 = vrot.slane %v243, 5
    %v573 = vsel %vm525, %v571, %v572
    %v574 = vrot.slane %v487, 5
    %v575 = vrot.slane %v574, 4
    %v576 = vrot.slane %v244, 5
    %v577 = vsel %vm525, %v575, %v576
    %v578 = vrot.slane %v488, 5
    %v579 = vrot.slane %v578, 4
    %v580 = vrot.slane %v245, 5
    %v581 = vsel %vm525, %v579, %v580
    %v582 = vrot.slane %v489, 5
    %v583 = vrot.slane %v582, 4
    %v584 = vrot.slane %v246, 5
    %v585 = vsel %vm525, %v583, %v584
    %v586 = vrot.slane %v490, 5
    %v587 = vrot.slane %v586, 4
    %v588 = vrot.slane %v247, 5
    %v589 = vsel %vm525, %v587, %v588
    %s590 = sadd.s32 %s212, 1
    %s591 = smul.u32 %s590, 2
    %s592 = smul.addr %s591, 4
    %s593 = scalar_lea.vmem %s0, %s592
    %v594 = vld [vmem:[%s593] sm:$0xf]
    %v595 = vld [vmem:[%s593 + $0x8] sm:$0xf]
    %v596 = vld [vmem:[%s593 + $0x10] sm:$0xf]
    %v597 = vld [vmem:[%s593 + $0x18] sm:$0xf]
    %v598 = vld [vmem:[%s593 + $0x20] sm:$0xf]
    %v599 = vld [vmem:[%s593 + $0x28] sm:$0xf]
    %v600 = vld [vmem:[%s593 + $0x30] sm:$0xf]
    %v601 = vld [vmem:[%s593 + $0x38] sm:$0xf]
    %v602 = vld [vmem:[%s593 + $0x50] sm:$0xf]
    %v603 = vld [vmem:[%s593 + $0x58] sm:$0xf]
    %v604 = vld [vmem:[%s593 + $0x60] sm:$0xf]
    %v605 = vld [vmem:[%s593 + $0x68] sm:$0xf]
    %v606 = vld [vmem:[%s593 + $0x70] sm:$0xf]
    %v607 = vld [vmem:[%s593 + $0x78] sm:$0xf]
    %v608 = vld [vmem:[%s593 + $0x80] sm:$0xf]
    %v609 = vld [vmem:[%s593 + $0x88] sm:$0xf]
    %v610 = vld [vmem:[%s593 + $0x4] sm:$0x1]
    %v611 = vld [vmem:[%s593 + $0xc] sm:$0x1]
    %v612 = vld [vmem:[%s593 + $0x14] sm:$0x1]
    %v613 = vld [vmem:[%s593 + $0x1c] sm:$0x1]
    %v614 = vld [vmem:[%s593 + $0x24] sm:$0x1]
    %v615 = vld [vmem:[%s593 + $0x2c] sm:$0x1]
    %v616 = vld [vmem:[%s593 + $0x34] sm:$0x1]
    %v617 = vld [vmem:[%s593 + $0x3c] sm:$0x1]
    %v618 = vld [vmem:[%s593 + $0x54] sm:$0x1]
    %v619 = vld [vmem:[%s593 + $0x5c] sm:$0x1]
    %v620 = vld [vmem:[%s593 + $0x64] sm:$0x1]
    %v621 = vld [vmem:[%s593 + $0x6c] sm:$0x1]
    %v622 = vld [vmem:[%s593 + $0x74] sm:$0x1]
    %v623 = vld [vmem:[%s593 + $0x7c] sm:$0x1]
    %v624 = vld [vmem:[%s593 + $0x84] sm:$0x1]
    %v625 = vld [vmem:[%s593 + $0x8c] sm:$0x1]
    %v627 = vshrl.u32 %v594, 16
    %v629 = vrot.slane %v627, 4
    %v630 = vshll.u32 %v594, 16
    %v632 = vrot.slane %v630, 5
    %v633 = vor.u32 %v629, %v632
    %v634 = vrot.slane %v633, 4
    %v636 = vshll.u32 %v610, 16
    %v638 = vrot.slane %v636, 5
    %v639 = vsel %vm250, %v634, %v638
    %v641 = vshrl.u32 %v595, 16
    %v643 = vrot.slane %v641, 4
    %v644 = vshll.u32 %v595, 16
    %v646 = vrot.slane %v644, 5
    %v647 = vor.u32 %v643, %v646
    %v648 = vrot.slane %v647, 4
    %v650 = vshll.u32 %v611, 16
    %v652 = vrot.slane %v650, 5
    %v653 = vsel %vm250, %v648, %v652
    %v655 = vshrl.u32 %v596, 16
    %v657 = vrot.slane %v655, 4
    %v658 = vshll.u32 %v596, 16
    %v660 = vrot.slane %v658, 5
    %v661 = vor.u32 %v657, %v660
    %v662 = vrot.slane %v661, 4
    %v664 = vshll.u32 %v612, 16
    %v666 = vrot.slane %v664, 5
    %v667 = vsel %vm250, %v662, %v666
    %v669 = vshrl.u32 %v597, 16
    %v671 = vrot.slane %v669, 4
    %v672 = vshll.u32 %v597, 16
    %v674 = vrot.slane %v672, 5
    %v675 = vor.u32 %v671, %v674
    %v676 = vrot.slane %v675, 4
    %v678 = vshll.u32 %v613, 16
    %v680 = vrot.slane %v678, 5
    %v681 = vsel %vm250, %v676, %v680
    %v683 = vshrl.u32 %v598, 16
    %v685 = vrot.slane %v683, 4
    %v686 = vshll.u32 %v598, 16
    %v688 = vrot.slane %v686, 5
    %v689 = vor.u32 %v685, %v688
    %v690 = vrot.slane %v689, 4
    %v692 = vshll.u32 %v614, 16
    %v694 = vrot.slane %v692, 5
    %v695 = vsel %vm250, %v690, %v694
    %v697 = vshrl.u32 %v599, 16
    %v699 = vrot.slane %v697, 4
    %v700 = vshll.u32 %v599, 16
    %v702 = vrot.slane %v700, 5
    %v703 = vor.u32 %v699, %v702
    %v704 = vrot.slane %v703, 4
    %v706 = vshll.u32 %v615, 16
    %v708 = vrot.slane %v706, 5
    %v709 = vsel %vm250, %v704, %v708
    %v711 = vshrl.u32 %v600, 16
    %v713 = vrot.slane %v711, 4
    %v714 = vshll.u32 %v600, 16
    %v716 = vrot.slane %v714, 5
    %v717 = vor.u32 %v713, %v716
    %v718 = vrot.slane %v717, 4
    %v720 = vshll.u32 %v616, 16
    %v722 = vrot.slane %v720, 5
    %v723 = vsel %vm250, %v718, %v722
    %v725 = vshrl.u32 %v601, 16
    %v727 = vrot.slane %v725, 4
    %v728 = vshll.u32 %v601, 16
    %v730 = vrot.slane %v728, 5
    %v731 = vor.u32 %v727, %v730
    %v732 = vrot.slane %v731, 4
    %v734 = vshll.u32 %v617, 16
    %v736 = vrot.slane %v734, 5
    %v737 = vsel %vm250, %v732, %v736
    %v739 = vshrl.u32 %v602, 16
    %v741 = vrot.slane %v739, 4
    %v742 = vshll.u32 %v602, 16
    %v744 = vrot.slane %v742, 5
    %v745 = vor.u32 %v741, %v744
    %v746 = vrot.slane %v745, 4
    %v748 = vshll.u32 %v618, 16
    %v750 = vrot.slane %v748, 5
    %v751 = vsel %vm250, %v746, %v750
    %v753 = vshrl.u32 %v603, 16
    %v755 = vrot.slane %v753, 4
    %v756 = vshll.u32 %v603, 16
    %v758 = vrot.slane %v756, 5
    %v759 = vor.u32 %v755, %v758
    %v760 = vrot.slane %v759, 4
    %v762 = vshll.u32 %v619, 16
    %v764 = vrot.slane %v762, 5
    %v765 = vsel %vm250, %v760, %v764
    %v767 = vshrl.u32 %v604, 16
    %v769 = vrot.slane %v767, 4
    %v770 = vshll.u32 %v604, 16
    %v772 = vrot.slane %v770, 5
    %v773 = vor.u32 %v769, %v772
    %v774 = vrot.slane %v773, 4
    %v776 = vshll.u32 %v620, 16
    %v778 = vrot.slane %v776, 5
    %v779 = vsel %vm250, %v774, %v778
    %v781 = vshrl.u32 %v605, 16
    %v783 = vrot.slane %v781, 4
    %v784 = vshll.u32 %v605, 16
    %v786 = vrot.slane %v784, 5
    %v787 = vor.u32 %v783, %v786
    %v788 = vrot.slane %v787, 4
    %v790 = vshll.u32 %v621, 16
    %v792 = vrot.slane %v790, 5
    %v793 = vsel %vm250, %v788, %v792
    %v795 = vshrl.u32 %v606, 16
    %v797 = vrot.slane %v795, 4
    %v798 = vshll.u32 %v606, 16
    %v800 = vrot.slane %v798, 5
    %v801 = vor.u32 %v797, %v800
    %v802 = vrot.slane %v801, 4
    %v804 = vshll.u32 %v622, 16
    %v806 = vrot.slane %v804, 5
    %v807 = vsel %vm250, %v802, %v806
    %v809 = vshrl.u32 %v607, 16
    %v811 = vrot.slane %v809, 4
    %v812 = vshll.u32 %v607, 16
    %v814 = vrot.slane %v812, 5
    %v815 = vor.u32 %v811, %v814
    %v816 = vrot.slane %v815, 4
    %v818 = vshll.u32 %v623, 16
    %v820 = vrot.slane %v818, 5
    %v821 = vsel %vm250, %v816, %v820
    %v823 = vshrl.u32 %v608, 16
    %v825 = vrot.slane %v823, 4
    %v826 = vshll.u32 %v608, 16
    %v828 = vrot.slane %v826, 5
    %v829 = vor.u32 %v825, %v828
    %v830 = vrot.slane %v829, 4
    %v832 = vshll.u32 %v624, 16
    %v834 = vrot.slane %v832, 5
    %v835 = vsel %vm250, %v830, %v834
    %v837 = vshrl.u32 %v609, 16
    %v839 = vrot.slane %v837, 4
    %v840 = vshll.u32 %v609, 16
    %v842 = vrot.slane %v840, 5
    %v843 = vor.u32 %v839, %v842
    %v844 = vrot.slane %v843, 4
    %v846 = vshll.u32 %v625, 16
    %v848 = vrot.slane %v846, 5
    %v849 = vsel %vm250, %v844, %v848
    %v850 = vld [vmem:[%s593] sm:$0xe]
    %v851 = vld [vmem:[%s593 + $0x8] sm:$0xe]
    %v852 = vld [vmem:[%s593 + $0x10] sm:$0xe]
    %v853 = vld [vmem:[%s593 + $0x18] sm:$0xe]
    %v854 = vld [vmem:[%s593 + $0x20] sm:$0xe]
    %v855 = vld [vmem:[%s593 + $0x28] sm:$0xe]
    %v856 = vld [vmem:[%s593 + $0x30] sm:$0xe]
    %v857 = vld [vmem:[%s593 + $0x38] sm:$0xe]
    %v858 = vld [vmem:[%s593 + $0x50] sm:$0xe]
    %v859 = vld [vmem:[%s593 + $0x58] sm:$0xe]
    %v860 = vld [vmem:[%s593 + $0x60] sm:$0xe]
    %v861 = vld [vmem:[%s593 + $0x68] sm:$0xe]
    %v862 = vld [vmem:[%s593 + $0x70] sm:$0xe]
    %v863 = vld [vmem:[%s593 + $0x78] sm:$0xe]
    %v864 = vld [vmem:[%s593 + $0x80] sm:$0xe]
    %v865 = vld [vmem:[%s593 + $0x88] sm:$0xe]
    %v898 = vrot.slane %v850, 5
    %v899 = vrot.slane %v898, 4
    %v900 = vrot.slane %v610, 5
    %v901 = vsel %vm525, %v899, %v900
    %v902 = vrot.slane %v851, 5
    %v903 = vrot.slane %v902, 4
    %v904 = vrot.slane %v611, 5
    %v905 = vsel %vm525, %v903, %v904
    %v906 = vrot.slane %v852, 5
    %v907 = vrot.slane %v906, 4
    %v908 = vrot.slane %v612, 5
    %v909 = vsel %vm525, %v907, %v908
    %v910 = vrot.slane %v853, 5
    %v911 = vrot.slane %v910, 4
    %v912 = vrot.slane %v613, 5
    %v913 = vsel %vm525, %v911, %v912
    %v914 = vrot.slane %v854, 5
    %v915 = vrot.slane %v914, 4
    %v916 = vrot.slane %v614, 5
    %v917 = vsel %vm525, %v915, %v916
    %v918 = vrot.slane %v855, 5
    %v919 = vrot.slane %v918, 4
    %v920 = vrot.slane %v615, 5
    %v921 = vsel %vm525, %v919, %v920
    %v922 = vrot.slane %v856, 5
    %v923 = vrot.slane %v922, 4
    %v924 = vrot.slane %v616, 5
    %v925 = vsel %vm525, %v923, %v924
    %v926 = vrot.slane %v857, 5
    %v927 = vrot.slane %v926, 4
    %v928 = vrot.slane %v617, 5
    %v929 = vsel %vm525, %v927, %v928
    %v930 = vrot.slane %v858, 5
    %v931 = vrot.slane %v930, 4
    %v932 = vrot.slane %v618, 5
    %v933 = vsel %vm525, %v931, %v932
    %v934 = vrot.slane %v859, 5
    %v935 = vrot.slane %v934, 4
    %v936 = vrot.slane %v619, 5
    %v937 = vsel %vm525, %v935, %v936
    %v938 = vrot.slane %v860, 5
    %v939 = vrot.slane %v938, 4
    %v940 = vrot.slane %v620, 5
    %v941 = vsel %vm525, %v939, %v940
    %v942 = vrot.slane %v861, 5
    %v943 = vrot.slane %v942, 4
    %v944 = vrot.slane %v621, 5
    %v945 = vsel %vm525, %v943, %v944
    %v946 = vrot.slane %v862, 5
    %v947 = vrot.slane %v946, 4
    %v948 = vrot.slane %v622, 5
    %v949 = vsel %vm525, %v947, %v948
    %v950 = vrot.slane %v863, 5
    %v951 = vrot.slane %v950, 4
    %v952 = vrot.slane %v623, 5
    %v953 = vsel %vm525, %v951, %v952
    %v954 = vrot.slane %v864, 5
    %v955 = vrot.slane %v954, 4
    %v956 = vrot.slane %v624, 5
    %v957 = vsel %vm525, %v955, %v956
    %v958 = vrot.slane %v865, 5
    %v959 = vrot.slane %v958, 4
    %v960 = vrot.slane %v625, 5
    %v961 = vsel %vm525, %v959, %v960
    %s962 = sadd.s32 %s212, 2
    %s963 = smul.u32 %s962, 2
    %s964 = smul.addr %s963, 4
    %s965 = scalar_lea.vmem %s0, %s964
    %v966 = vld [vmem:[%s965] sm:$0xf]
    %v967 = vld [vmem:[%s965 + $0x8] sm:$0xf]
    %v968 = vld [vmem:[%s965 + $0x10] sm:$0xf]
    %v969 = vld [vmem:[%s965 + $0x18] sm:$0xf]
    %v970 = vld [vmem:[%s965 + $0x20] sm:$0xf]
    %v971 = vld [vmem:[%s965 + $0x28] sm:$0xf]
    %v972 = vld [vmem:[%s965 + $0x30] sm:$0xf]
    %v973 = vld [vmem:[%s965 + $0x38] sm:$0xf]
    %v974 = vld [vmem:[%s965 + $0x50] sm:$0xf]
    %v975 = vld [vmem:[%s965 + $0x58] sm:$0xf]
    %v976 = vld [vmem:[%s965 + $0x60] sm:$0xf]
    %v977 = vld [vmem:[%s965 + $0x68] sm:$0xf]
    %v978 = vld [vmem:[%s965 + $0x70] sm:$0xf]
    %v979 = vld [vmem:[%s965 + $0x78] sm:$0xf]
    %v980 = vld [vmem:[%s965 + $0x80] sm:$0xf]
    %v981 = vld [vmem:[%s965 + $0x88] sm:$0xf]
    %v982 = vld [vmem:[%s965 + $0x4] sm:$0x1]
    %v983 = vld [vmem:[%s965 + $0xc] sm:$0x1]
    %v984 = vld [vmem:[%s965 + $0x14] sm:$0x1]
    %v985 = vld [vmem:[%s965 + $0x1c] sm:$0x1]
    %v986 = vld [vmem:[%s965 + $0x24] sm:$0x1]
    %v987 = vld [vmem:[%s965 + $0x2c] sm:$0x1]
    %v988 = vld [vmem:[%s965 + $0x34] sm:$0x1]
    %v989 = vld [vmem:[%s965 + $0x3c] sm:$0x1]
    %v990 = vld [vmem:[%s965 + $0x54] sm:$0x1]
    %v991 = vld [vmem:[%s965 + $0x5c] sm:$0x1]
    %v992 = vld [vmem:[%s965 + $0x64] sm:$0x1]
    %v993 = vld [vmem:[%s965 + $0x6c] sm:$0x1]
    %v994 = vld [vmem:[%s965 + $0x74] sm:$0x1]
    %v995 = vld [vmem:[%s965 + $0x7c] sm:$0x1]
    %v996 = vld [vmem:[%s965 + $0x84] sm:$0x1]
    %v997 = vld [vmem:[%s965 + $0x8c] sm:$0x1]
    %v999 = vshrl.u32 %v966, 16
    %v1001 = vrot.slane %v999, 4
    %v1002 = vshll.u32 %v966, 16
    %v1004 = vrot.slane %v1002, 5
    %v1005 = vor.u32 %v1001, %v1004
    %v1006 = vrot.slane %v1005, 4
    %v1008 = vshll.u32 %v982, 16
    %v1010 = vrot.slane %v1008, 5
    %v1011 = vsel %vm250, %v1006, %v1010
    %v1013 = vshrl.u32 %v967, 16
    %v1015 = vrot.slane %v1013, 4
    %v1016 = vshll.u32 %v967, 16
    %v1018 = vrot.slane %v1016, 5
    %v1019 = vor.u32 %v1015, %v1018
    %v1020 = vrot.slane %v1019, 4
    %v1022 = vshll.u32 %v983, 16
    %v1024 = vrot.slane %v1022, 5
    %v1025 = vsel %vm250, %v1020, %v1024
    %v1027 = vshrl.u32 %v968, 16
    %v1029 = vrot.slane %v1027, 4
    %v1030 = vshll.u32 %v968, 16
    %v1032 = vrot.slane %v1030, 5
    %v1033 = vor.u32 %v1029, %v1032
    %v1034 = vrot.slane %v1033, 4
    %v1036 = vshll.u32 %v984, 16
    %v1038 = vrot.slane %v1036, 5
    %v1039 = vsel %vm250, %v1034, %v1038
    %v1041 = vshrl.u32 %v969, 16
    %v1043 = vrot.slane %v1041, 4
    %v1044 = vshll.u32 %v969, 16
    %v1046 = vrot.slane %v1044, 5
    %v1047 = vor.u32 %v1043, %v1046
    %v1048 = vrot.slane %v1047, 4
    %v1050 = vshll.u32 %v985, 16
    %v1052 = vrot.slane %v1050, 5
    %v1053 = vsel %vm250, %v1048, %v1052
    %v1055 = vshrl.u32 %v970, 16
    %v1057 = vrot.slane %v1055, 4
    %v1058 = vshll.u32 %v970, 16
    %v1060 = vrot.slane %v1058, 5
    %v1061 = vor.u32 %v1057, %v1060
    %v1062 = vrot.slane %v1061, 4
    %v1064 = vshll.u32 %v986, 16
    %v1066 = vrot.slane %v1064, 5
    %v1067 = vsel %vm250, %v1062, %v1066
    %v1069 = vshrl.u32 %v971, 16
    %v1071 = vrot.slane %v1069, 4
    %v1072 = vshll.u32 %v971, 16
    %v1074 = vrot.slane %v1072, 5
    %v1075 = vor.u32 %v1071, %v1074
    %v1076 = vrot.slane %v1075, 4
    %v1078 = vshll.u32 %v987, 16
    %v1080 = vrot.slane %v1078, 5
    %v1081 = vsel %vm250, %v1076, %v1080
    %v1083 = vshrl.u32 %v972, 16
    %v1085 = vrot.slane %v1083, 4
    %v1086 = vshll.u32 %v972, 16
    %v1088 = vrot.slane %v1086, 5
    %v1089 = vor.u32 %v1085, %v1088
    %v1090 = vrot.slane %v1089, 4
    %v1092 = vshll.u32 %v988, 16
    %v1094 = vrot.slane %v1092, 5
    %v1095 = vsel %vm250, %v1090, %v1094
    %v1097 = vshrl.u32 %v973, 16
    %v1099 = vrot.slane %v1097, 4
    %v1100 = vshll.u32 %v973, 16
    %v1102 = vrot.slane %v1100, 5
    %v1103 = vor.u32 %v1099, %v1102
    %v1104 = vrot.slane %v1103, 4
    %v1106 = vshll.u32 %v989, 16
    %v1108 = vrot.slane %v1106, 5
    %v1109 = vsel %vm250, %v1104, %v1108
    %v1111 = vshrl.u32 %v974, 16
    %v1113 = vrot.slane %v1111, 4
    %v1114 = vshll.u32 %v974, 16
    %v1116 = vrot.slane %v1114, 5
    %v1117 = vor.u32 %v1113, %v1116
    %v1118 = vrot.slane %v1117, 4
    %v1120 = vshll.u32 %v990, 16
    %v1122 = vrot.slane %v1120, 5
    %v1123 = vsel %vm250, %v1118, %v1122
    %v1125 = vshrl.u32 %v975, 16
    %v1127 = vrot.slane %v1125, 4
    %v1128 = vshll.u32 %v975, 16
    %v1130 = vrot.slane %v1128, 5
    %v1131 = vor.u32 %v1127, %v1130
    %v1132 = vrot.slane %v1131, 4
    %v1134 = vshll.u32 %v991, 16
    %v1136 = vrot.slane %v1134, 5
    %v1137 = vsel %vm250, %v1132, %v1136
    %v1139 = vshrl.u32 %v976, 16
    %v1141 = vrot.slane %v1139, 4
    %v1142 = vshll.u32 %v976, 16
    %v1144 = vrot.slane %v1142, 5
    %v1145 = vor.u32 %v1141, %v1144
    %v1146 = vrot.slane %v1145, 4
    %v1148 = vshll.u32 %v992, 16
    %v1150 = vrot.slane %v1148, 5
    %v1151 = vsel %vm250, %v1146, %v1150
    %v1153 = vshrl.u32 %v977, 16
    %v1155 = vrot.slane %v1153, 4
    %v1156 = vshll.u32 %v977, 16
    %v1158 = vrot.slane %v1156, 5
    %v1159 = vor.u32 %v1155, %v1158
    %v1160 = vrot.slane %v1159, 4
    %v1162 = vshll.u32 %v993, 16
    %v1164 = vrot.slane %v1162, 5
    %v1165 = vsel %vm250, %v1160, %v1164
    %v1167 = vshrl.u32 %v978, 16
    %v1169 = vrot.slane %v1167, 4
    %v1170 = vshll.u32 %v978, 16
    %v1172 = vrot.slane %v1170, 5
    %v1173 = vor.u32 %v1169, %v1172
    %v1174 = vrot.slane %v1173, 4
    %v1176 = vshll.u32 %v994, 16
    %v1178 = vrot.slane %v1176, 5
    %v1179 = vsel %vm250, %v1174, %v1178
    %v1181 = vshrl.u32 %v979, 16
    %v1183 = vrot.slane %v1181, 4
    %v1184 = vshll.u32 %v979, 16
    %v1186 = vrot.slane %v1184, 5
    %v1187 = vor.u32 %v1183, %v1186
    %v1188 = vrot.slane %v1187, 4
    %v1190 = vshll.u32 %v995, 16
    %v1192 = vrot.slane %v1190, 5
    %v1193 = vsel %vm250, %v1188, %v1192
    %v1195 = vshrl.u32 %v980, 16
    %v1197 = vrot.slane %v1195, 4
    %v1198 = vshll.u32 %v980, 16
    %v1200 = vrot.slane %v1198, 5
    %v1201 = vor.u32 %v1197, %v1200
    %v1202 = vrot.slane %v1201, 4
    %v1204 = vshll.u32 %v996, 16
    %v1206 = vrot.slane %v1204, 5
    %v1207 = vsel %vm250, %v1202, %v1206
    %v1209 = vshrl.u32 %v981, 16
    %v1211 = vrot.slane %v1209, 4
    %v1212 = vshll.u32 %v981, 16
    %v1214 = vrot.slane %v1212, 5
    %v1215 = vor.u32 %v1211, %v1214
    %v1216 = vrot.slane %v1215, 4
    %v1218 = vshll.u32 %v997, 16
    %v1220 = vrot.slane %v1218, 5
    %v1221 = vsel %vm250, %v1216, %v1220
    %v1222 = vld [vmem:[%s965] sm:$0xe]
    %v1223 = vld [vmem:[%s965 + $0x8] sm:$0xe]
    %v1224 = vld [vmem:[%s965 + $0x10] sm:$0xe]
    %v1225 = vld [vmem:[%s965 + $0x18] sm:$0xe]
    %v1226 = vld [vmem:[%s965 + $0x20] sm:$0xe]
    %v1227 = vld [vmem:[%s965 + $0x28] sm:$0xe]
    %v1228 = vld [vmem:[%s965 + $0x30] sm:$0xe]
    %v1229 = vld [vmem:[%s965 + $0x38] sm:$0xe]
    %v1230 = vld [vmem:[%s965 + $0x50] sm:$0xe]
    %v1231 = vld [vmem:[%s965 + $0x58] sm:$0xe]
    %v1232 = vld [vmem:[%s965 + $0x60] sm:$0xe]
    %v1233 = vld [vmem:[%s965 + $0x68] sm:$0xe]
    %v1234 = vld [vmem:[%s965 + $0x70] sm:$0xe]
    %v1235 = vld [vmem:[%s965 + $0x78] sm:$0xe]
    %v1236 = vld [vmem:[%s965 + $0x80] sm:$0xe]
    %v1237 = vld [vmem:[%s965 + $0x88] sm:$0xe]
    %v1270 = vrot.slane %v1222, 5
    %v1271 = vrot.slane %v1270, 4
    %v1272 = vrot.slane %v982, 5
    %v1273 = vsel %vm525, %v1271, %v1272
    %v1274 = vrot.slane %v1223, 5
    %v1275 = vrot.slane %v1274, 4
    %v1276 = vrot.slane %v983, 5
    %v1277 = vsel %vm525, %v1275, %v1276
    %v1278 = vrot.slane %v1224, 5
    %v1279 = vrot.slane %v1278, 4
    %v1280 = vrot.slane %v984, 5
    %v1281 = vsel %vm525, %v1279, %v1280
    %v1282 = vrot.slane %v1225, 5
    %v1283 = vrot.slane %v1282, 4
    %v1284 = vrot.slane %v985, 5
    %v1285 = vsel %vm525, %v1283, %v1284
    %v1286 = vrot.slane %v1226, 5
    %v1287 = vrot.slane %v1286, 4
    %v1288 = vrot.slane %v986, 5
    %v1289 = vsel %vm525, %v1287, %v1288
    %v1290 = vrot.slane %v1227, 5
    %v1291 = vrot.slane %v1290, 4
    %v1292 = vrot.slane %v987, 5
    %v1293 = vsel %vm525, %v1291, %v1292
    %v1294 = vrot.slane %v1228, 5
    %v1295 = vrot.slane %v1294, 4
    %v1296 = vrot.slane %v988, 5
    %v1297 = vsel %vm525, %v1295, %v1296
    %v1298 = vrot.slane %v1229, 5
    %v1299 = vrot.slane %v1298, 4
    %v1300 = vrot.slane %v989, 5
    %v1301 = vsel %vm525, %v1299, %v1300
    %v1302 = vrot.slane %v1230, 5
    %v1303 = vrot.slane %v1302, 4
    %v1304 = vrot.slane %v990, 5
    %v1305 = vsel %vm525, %v1303, %v1304
    %v1306 = vrot.slane %v1231, 5
    %v1307 = vrot.slane %v1306, 4
    %v1308 = vrot.slane %v991, 5
    %v1309 = vsel %vm525, %v1307, %v1308
    %v1310 = vrot.slane %v1232, 5
    %v1311 = vrot.slane %v1310, 4
    %v1312 = vrot.slane %v992, 5
    %v1313 = vsel %vm525, %v1311, %v1312
    %v1314 = vrot.slane %v1233, 5
    %v1315 = vrot.slane %v1314, 4
    %v1316 = vrot.slane %v993, 5
    %v1317 = vsel %vm525, %v1315, %v1316
    %v1318 = vrot.slane %v1234, 5
    %v1319 = vrot.slane %v1318, 4
    %v1320 = vrot.slane %v994, 5
    %v1321 = vsel %vm525, %v1319, %v1320
    %v1322 = vrot.slane %v1235, 5
    %v1323 = vrot.slane %v1322, 4
    %v1324 = vrot.slane %v995, 5
    %v1325 = vsel %vm525, %v1323, %v1324
    %v1326 = vrot.slane %v1236, 5
    %v1327 = vrot.slane %v1326, 4
    %v1328 = vrot.slane %v996, 5
    %v1329 = vsel %vm525, %v1327, %v1328
    %v1330 = vrot.slane %v1237, 5
    %v1331 = vrot.slane %v1330, 4
    %v1332 = vrot.slane %v997, 5
    %v1333 = vsel %vm525, %v1331, %v1332
    %v1350 = vunpack.c.l.b16 %v216
    %v1351 = vunpack.c.l.b16 %v217
    %v1352 = vunpack.c.l.b16 %v218
    %v1353 = vunpack.c.l.b16 %v219
    %v1354 = vunpack.c.l.b16 %v220
    %v1355 = vunpack.c.l.b16 %v221
    %v1356 = vunpack.c.l.b16 %v222
    %v1357 = vunpack.c.l.b16 %v223
    %v1358 = vunpack.c.l.b16 %v224
    %v1359 = vunpack.c.l.b16 %v225
    %v1360 = vunpack.c.l.b16 %v226
    %v1361 = vunpack.c.l.b16 %v227
    %v1362 = vunpack.c.l.b16 %v228
    %v1363 = vunpack.c.l.b16 %v229
    %v1364 = vunpack.c.l.b16 %v230
    %v1365 = vunpack.c.l.b16 %v231
    %v1366 = vpack.c.b16 %v1351, %v1350
    %v1367 = vpack.c.b16 %v1353, %v1352
    %v1368 = vpack.c.b16 %v1355, %v1354
    %v1369 = vpack.c.b16 %v1357, %v1356
    %v1370 = vpack.c.b16 %v1359, %v1358
    %v1371 = vpack.c.b16 %v1361, %v1360
    %v1372 = vpack.c.b16 %v1363, %v1362
    %v1373 = vpack.c.b16 %v1365, %v1364
    %v1382 = vunpack.c.l.b16 %v264
    %v1383 = vunpack.c.l.b16 %v278
    %v1384 = vunpack.c.l.b16 %v292
    %v1385 = vunpack.c.l.b16 %v306
    %v1386 = vunpack.c.l.b16 %v320
    %v1387 = vunpack.c.l.b16 %v334
    %v1388 = vunpack.c.l.b16 %v348
    %v1389 = vunpack.c.l.b16 %v362
    %v1390 = vunpack.c.l.b16 %v376
    %v1391 = vunpack.c.l.b16 %v390
    %v1392 = vunpack.c.l.b16 %v404
    %v1393 = vunpack.c.l.b16 %v418
    %v1394 = vunpack.c.l.b16 %v432
    %v1395 = vunpack.c.l.b16 %v446
    %v1396 = vunpack.c.l.b16 %v460
    %v1397 = vunpack.c.l.b16 %v474
    %v1398 = vpack.c.b16 %v1383, %v1382
    %v1399 = vpack.c.b16 %v1385, %v1384
    %v1400 = vpack.c.b16 %v1387, %v1386
    %v1401 = vpack.c.b16 %v1389, %v1388
    %v1402 = vpack.c.b16 %v1391, %v1390
    %v1403 = vpack.c.b16 %v1393, %v1392
    %v1404 = vpack.c.b16 %v1395, %v1394
    %v1405 = vpack.c.b16 %v1397, %v1396
    %v1414 = vunpack.c.l.b16 %v529
    %v1415 = vunpack.c.l.b16 %v533
    %v1416 = vunpack.c.l.b16 %v537
    %v1417 = vunpack.c.l.b16 %v541
    %v1418 = vunpack.c.l.b16 %v545
    %v1419 = vunpack.c.l.b16 %v549
    %v1420 = vunpack.c.l.b16 %v553
    %v1421 = vunpack.c.l.b16 %v557
    %v1422 = vunpack.c.l.b16 %v561
    %v1423 = vunpack.c.l.b16 %v565
    %v1424 = vunpack.c.l.b16 %v569
    %v1425 = vunpack.c.l.b16 %v573
    %v1426 = vunpack.c.l.b16 %v577
    %v1427 = vunpack.c.l.b16 %v581
    %v1428 = vunpack.c.l.b16 %v585
    %v1429 = vunpack.c.l.b16 %v589
    %v1430 = vpack.c.b16 %v1415, %v1414
    %v1431 = vpack.c.b16 %v1417, %v1416
    %v1432 = vpack.c.b16 %v1419, %v1418
    %v1433 = vpack.c.b16 %v1421, %v1420
    %v1434 = vpack.c.b16 %v1423, %v1422
    %v1435 = vpack.c.b16 %v1425, %v1424
    %v1436 = vpack.c.b16 %v1427, %v1426
    %v1437 = vpack.c.b16 %v1429, %v1428
    %v1462 = vunpack.c.l.b16 %v594
    %v1463 = vunpack.c.l.b16 %v595
    %v1464 = vunpack.c.l.b16 %v596
    %v1465 = vunpack.c.l.b16 %v597
    %v1466 = vunpack.c.l.b16 %v598
    %v1467 = vunpack.c.l.b16 %v599
    %v1468 = vunpack.c.l.b16 %v600
    %v1469 = vunpack.c.l.b16 %v601
    %v1470 = vunpack.c.l.b16 %v602
    %v1471 = vunpack.c.l.b16 %v603
    %v1472 = vunpack.c.l.b16 %v604
    %v1473 = vunpack.c.l.b16 %v605
    %v1474 = vunpack.c.l.b16 %v606
    %v1475 = vunpack.c.l.b16 %v607
    %v1476 = vunpack.c.l.b16 %v608
    %v1477 = vunpack.c.l.b16 %v609
    %v1478 = vpack.c.b16 %v1463, %v1462
    %v1479 = vpack.c.b16 %v1465, %v1464
    %v1480 = vpack.c.b16 %v1467, %v1466
    %v1481 = vpack.c.b16 %v1469, %v1468
    %v1482 = vpack.c.b16 %v1471, %v1470
    %v1483 = vpack.c.b16 %v1473, %v1472
    %v1484 = vpack.c.b16 %v1475, %v1474
    %v1485 = vpack.c.b16 %v1477, %v1476
    %v1494 = vunpack.c.l.b16 %v639
    %v1495 = vunpack.c.l.b16 %v653
    %v1496 = vunpack.c.l.b16 %v667
    %v1497 = vunpack.c.l.b16 %v681
    %v1498 = vunpack.c.l.b16 %v695
    %v1499 = vunpack.c.l.b16 %v709
    %v1500 = vunpack.c.l.b16 %v723
    %v1501 = vunpack.c.l.b16 %v737
    %v1502 = vunpack.c.l.b16 %v751
    %v1503 = vunpack.c.l.b16 %v765
    %v1504 = vunpack.c.l.b16 %v779
    %v1505 = vunpack.c.l.b16 %v793
    %v1506 = vunpack.c.l.b16 %v807
    %v1507 = vunpack.c.l.b16 %v821
    %v1508 = vunpack.c.l.b16 %v835
    %v1509 = vunpack.c.l.b16 %v849
    %v1510 = vpack.c.b16 %v1495, %v1494
    %v1511 = vpack.c.b16 %v1497, %v1496
    %v1512 = vpack.c.b16 %v1499, %v1498
    %v1513 = vpack.c.b16 %v1501, %v1500
    %v1514 = vpack.c.b16 %v1503, %v1502
    %v1515 = vpack.c.b16 %v1505, %v1504
    %v1516 = vpack.c.b16 %v1507, %v1506
    %v1517 = vpack.c.b16 %v1509, %v1508
    %v1526 = vunpack.c.l.b16 %v901
    %v1527 = vunpack.c.l.b16 %v905
    %v1528 = vunpack.c.l.b16 %v909
    %v1529 = vunpack.c.l.b16 %v913
    %v1530 = vunpack.c.l.b16 %v917
    %v1531 = vunpack.c.l.b16 %v921
    %v1532 = vunpack.c.l.b16 %v925
    %v1533 = vunpack.c.l.b16 %v929
    %v1534 = vunpack.c.l.b16 %v933
    %v1535 = vunpack.c.l.b16 %v937
    %v1536 = vunpack.c.l.b16 %v941
    %v1537 = vunpack.c.l.b16 %v945
    %v1538 = vunpack.c.l.b16 %v949
    %v1539 = vunpack.c.l.b16 %v953
    %v1540 = vunpack.c.l.b16 %v957
    %v1541 = vunpack.c.l.b16 %v961
    %v1542 = vpack.c.b16 %v1527, %v1526
    %v1543 = vpack.c.b16 %v1529, %v1528
    %v1544 = vpack.c.b16 %v1531, %v1530
    %v1545 = vpack.c.b16 %v1533, %v1532
    %v1546 = vpack.c.b16 %v1535, %v1534
    %v1547 = vpack.c.b16 %v1537, %v1536
    %v1548 = vpack.c.b16 %v1539, %v1538
    %v1549 = vpack.c.b16 %v1541, %v1540
    %v1574 = vunpack.c.l.b16 %v966
    %v1575 = vunpack.c.l.b16 %v967
    %v1576 = vunpack.c.l.b16 %v968
    %v1577 = vunpack.c.l.b16 %v969
    %v1578 = vunpack.c.l.b16 %v970
    %v1579 = vunpack.c.l.b16 %v971
    %v1580 = vunpack.c.l.b16 %v972
    %v1581 = vunpack.c.l.b16 %v973
    %v1582 = vunpack.c.l.b16 %v974
    %v1583 = vunpack.c.l.b16 %v975
    %v1584 = vunpack.c.l.b16 %v976
    %v1585 = vunpack.c.l.b16 %v977
    %v1586 = vunpack.c.l.b16 %v978
    %v1587 = vunpack.c.l.b16 %v979
    %v1588 = vunpack.c.l.b16 %v980
    %v1589 = vunpack.c.l.b16 %v981
    %v1590 = vpack.c.b16 %v1575, %v1574
    %v1591 = vpack.c.b16 %v1577, %v1576
    %v1592 = vpack.c.b16 %v1579, %v1578
    %v1593 = vpack.c.b16 %v1581, %v1580
    %v1594 = vpack.c.b16 %v1583, %v1582
    %v1595 = vpack.c.b16 %v1585, %v1584
    %v1596 = vpack.c.b16 %v1587, %v1586
    %v1597 = vpack.c.b16 %v1589, %v1588
    %v1606 = vunpack.c.l.b16 %v1011
    %v1607 = vunpack.c.l.b16 %v1025
    %v1608 = vunpack.c.l.b16 %v1039
    %v1609 = vunpack.c.l.b16 %v1053
    %v1610 = vunpack.c.l.b16 %v1067
    %v1611 = vunpack.c.l.b16 %v1081
    %v1612 = vunpack.c.l.b16 %v1095
    %v1613 = vunpack.c.l.b16 %v1109
    %v1614 = vunpack.c.l.b16 %v1123
    %v1615 = vunpack.c.l.b16 %v1137
    %v1616 = vunpack.c.l.b16 %v1151
    %v1617 = vunpack.c.l.b16 %v1165
    %v1618 = vunpack.c.l.b16 %v1179
    %v1619 = vunpack.c.l.b16 %v1193
    %v1620 = vunpack.c.l.b16 %v1207
    %v1621 = vunpack.c.l.b16 %v1221
    %v1622 = vpack.c.b16 %v1607, %v1606
    %v1623 = vpack.c.b16 %v1609, %v1608
    %v1624 = vpack.c.b16 %v1611, %v1610
    %v1625 = vpack.c.b16 %v1613, %v1612
    %v1626 = vpack.c.b16 %v1615, %v1614
    %v1627 = vpack.c.b16 %v1617, %v1616
    %v1628 = vpack.c.b16 %v1619, %v1618
    %v1629 = vpack.c.b16 %v1621, %v1620
    %v1638 = vunpack.c.l.b16 %v1273
    %v1639 = vunpack.c.l.b16 %v1277
    %v1640 = vunpack.c.l.b16 %v1281
    %v1641 = vunpack.c.l.b16 %v1285
    %v1642 = vunpack.c.l.b16 %v1289
    %v1643 = vunpack.c.l.b16 %v1293
    %v1644 = vunpack.c.l.b16 %v1297
    %v1645 = vunpack.c.l.b16 %v1301
    %v1646 = vunpack.c.l.b16 %v1305
    %v1647 = vunpack.c.l.b16 %v1309
    %v1648 = vunpack.c.l.b16 %v1313
    %v1649 = vunpack.c.l.b16 %v1317
    %v1650 = vunpack.c.l.b16 %v1321
    %v1651 = vunpack.c.l.b16 %v1325
    %v1652 = vunpack.c.l.b16 %v1329
    %v1653 = vunpack.c.l.b16 %v1333
    %v1654 = vpack.c.b16 %v1639, %v1638
    %v1655 = vpack.c.b16 %v1641, %v1640
    %v1656 = vpack.c.b16 %v1643, %v1642
    %v1657 = vpack.c.b16 %v1645, %v1644
    %v1658 = vpack.c.b16 %v1647, %v1646
    %v1659 = vpack.c.b16 %v1649, %v1648
    %v1660 = vpack.c.b16 %v1651, %v1650
    %v1661 = vpack.c.b16 %v1653, %v1652
    %v1670 = vld [vmem:[%s1] sm:$0xf]
    %v1671 = vld [vmem:[%s1 + $0x4] sm:$0xf]
    %v1672 = vld [vmem:[%s1 + $0x8] sm:$0xf]
    %v1673 = vld [vmem:[%s1 + $0xc] sm:$0xf]
    %v1674 = vld [vmem:[%s1 + $0x10] sm:$0xf]
    %v1675 = vld [vmem:[%s1 + $0x14] sm:$0xf]
    %v1676 = vld [vmem:[%s1 + $0x18] sm:$0xf]
    %v1677 = vld [vmem:[%s1 + $0x1c] sm:$0xf]
    %v1678 = vld [vmem:[%s1 + $0x20] sm:$0xf]
    %v1679 = vld [vmem:[%s1 + $0x24] sm:$0xf]
    %v1680 = vld [vmem:[%s1 + $0x28] sm:$0xf]
    %v1681 = vld [vmem:[%s1 + $0x2c] sm:$0xf]
    %v1682 = vld [vmem:[%s1 + $0x30] sm:$0xf]
    %v1683 = vld [vmem:[%s1 + $0x34] sm:$0xf]
    %v1684 = vld [vmem:[%s1 + $0x38] sm:$0xf]
    %v1685 = vld [vmem:[%s1 + $0x3c] sm:$0xf]
    %v1686 = vld [vmem:[%s1 + $0x40] sm:$0xf]
    %v1687 = vld [vmem:[%s1 + $0x44] sm:$0xf]
    %v1688 = vld [vmem:[%s1 + $0x48] sm:$0xf]
    %v1689 = vld [vmem:[%s1 + $0x4c] sm:$0xf]
    %v1690 = vld [vmem:[%s1 + $0x50] sm:$0xf]
    %v1691 = vld [vmem:[%s1 + $0x54] sm:$0xf]
    %v1692 = vld [vmem:[%s1 + $0x58] sm:$0xf]
    %v1693 = vld [vmem:[%s1 + $0x5c] sm:$0xf]
    %v1694 = vld [vmem:[%s1 + $0x60] sm:$0xf]
    %v1695 = vld [vmem:[%s1 + $0x64] sm:$0xf]
    %v1696 = vld [vmem:[%s1 + $0x68] sm:$0xf]
    %v1697 = vld [vmem:[%s1 + $0x6c] sm:$0xf]
    %v1698 = vld [vmem:[%s1 + $0x70] sm:$0xf]
    %v1699 = vld [vmem:[%s1 + $0x74] sm:$0xf]
    %v1700 = vld [vmem:[%s1 + $0x78] sm:$0xf]
    %v1701 = vld [vmem:[%s1 + $0x7c] sm:$0xf]
    %v1702 = vld [vmem:[%s1 + $0x80] sm:$0xf]
    %v1703 = vld [vmem:[%s1 + $0x84] sm:$0xf]
    %v1704 = vld [vmem:[%s1 + $0x88] sm:$0xf]
    %v1705 = vld [vmem:[%s1 + $0x8c] sm:$0xf]
    %v1706 = vld [vmem:[%s1 + $0x90] sm:$0xf]
    %v1707 = vld [vmem:[%s1 + $0x94] sm:$0xf]
    %v1708 = vld [vmem:[%s1 + $0x98] sm:$0xf]
    %v1709 = vld [vmem:[%s1 + $0x9c] sm:$0xf]
    %v1710 = vld [vmem:[%s1 + $0xa0] sm:$0xf]
    %v1711 = vld [vmem:[%s1 + $0xa4] sm:$0xf]
    %v1712 = vld [vmem:[%s1 + $0xa8] sm:$0xf]
    %v1713 = vld [vmem:[%s1 + $0xac] sm:$0xf]
    %v1714 = vld [vmem:[%s1 + $0xb0] sm:$0xf]
    %v1715 = vld [vmem:[%s1 + $0xb4] sm:$0xf]
    %v1716 = vld [vmem:[%s1 + $0xb8] sm:$0xf]
    %v1717 = vld [vmem:[%s1 + $0xbc] sm:$0xf]
    %v1718 = vld [vmem:[%s1 + $0xc0] sm:$0xf]
    %v1719 = vld [vmem:[%s1 + $0xc4] sm:$0xf]
    %v1720 = vld [vmem:[%s1 + $0xc8] sm:$0xf]
    %v1721 = vld [vmem:[%s1 + $0xcc] sm:$0xf]
    %v1722 = vld [vmem:[%s1 + $0xd0] sm:$0xf]
    %v1723 = vld [vmem:[%s1 + $0xd4] sm:$0xf]
    %v1724 = vld [vmem:[%s1 + $0xd8] sm:$0xf]
    %v1725 = vld [vmem:[%s1 + $0xdc] sm:$0xf]
    %v1726 = vld [vmem:[%s1 + $0xe0] sm:$0xf]
    %v1727 = vld [vmem:[%s1 + $0xe4] sm:$0xf]
    %v1728 = vld [vmem:[%s1 + $0xe8] sm:$0xf]
    %v1729 = vld [vmem:[%s1 + $0xec] sm:$0xf]
    %v1730 = vld [vmem:[%s1 + $0xf0] sm:$0xf]
    %v1731 = vld [vmem:[%s1 + $0xf4] sm:$0xf]
    %v1732 = vld [vmem:[%s1 + $0xf8] sm:$0xf]
    %v1733 = vld [vmem:[%s1 + $0xfc] sm:$0xf]
    %v1734 = vld [vmem:[%s1 + $0x100] sm:$0xf]
    %v1735 = vld [vmem:[%s1 + $0x104] sm:$0xf]
    %v1736 = vld [vmem:[%s1 + $0x108] sm:$0xf]
    %v1737 = vld [vmem:[%s1 + $0x10c] sm:$0xf]
    %v1738 = vld [vmem:[%s1 + $0x110] sm:$0xf]
    %v1739 = vld [vmem:[%s1 + $0x114] sm:$0xf]
    %v1740 = vld [vmem:[%s1 + $0x118] sm:$0xf]
    %v1741 = vld [vmem:[%s1 + $0x11c] sm:$0xf]
    %v1742 = vld [vmem:[%s1 + $0x120] sm:$0xf]
    %v1743 = vld [vmem:[%s1 + $0x124] sm:$0xf]
    %v1744 = vld [vmem:[%s1 + $0x128] sm:$0xf]
    %v1745 = vld [vmem:[%s1 + $0x12c] sm:$0xf]
    %v1746 = vld [vmem:[%s1 + $0x130] sm:$0xf]
    %v1747 = vld [vmem:[%s1 + $0x134] sm:$0xf]
    %v1748 = vld [vmem:[%s1 + $0x138] sm:$0xf]
    %v1749 = vld [vmem:[%s1 + $0x13c] sm:$0xf]
    %v1750 = vld [vmem:[%s1 + $0x140] sm:$0xf]
    %v1751 = vld [vmem:[%s1 + $0x144] sm:$0xf]
    %v1752 = vld [vmem:[%s1 + $0x148] sm:$0xf]
    %v1753 = vld [vmem:[%s1 + $0x14c] sm:$0xf]
    %v1754 = vld [vmem:[%s1 + $0x150] sm:$0xf]
    %v1755 = vld [vmem:[%s1 + $0x154] sm:$0xf]
    %v1756 = vld [vmem:[%s1 + $0x158] sm:$0xf]
    %v1757 = vld [vmem:[%s1 + $0x15c] sm:$0xf]
    %v1758 = vld [vmem:[%s1 + $0x160] sm:$0xf]
    %v1759 = vld [vmem:[%s1 + $0x164] sm:$0xf]
    %v1760 = vld [vmem:[%s1 + $0x168] sm:$0xf]
    %v1761 = vld [vmem:[%s1 + $0x16c] sm:$0xf]
    %v1762 = vld [vmem:[%s1 + $0x170] sm:$0xf]
    %v1763 = vld [vmem:[%s1 + $0x174] sm:$0xf]
    %v1764 = vld [vmem:[%s1 + $0x178] sm:$0xf]
    %v1765 = vld [vmem:[%s1 + $0x17c] sm:$0xf]
    %v1766 = vld [vmem:[%s1 + $0x180] sm:$0xf]
    %v1767 = vld [vmem:[%s1 + $0x184] sm:$0xf]
    %v1768 = vld [vmem:[%s1 + $0x188] sm:$0xf]
    %v1769 = vld [vmem:[%s1 + $0x18c] sm:$0xf]
    %v1770 = vld [vmem:[%s1 + $0x190] sm:$0xf]
    %v1771 = vld [vmem:[%s1 + $0x194] sm:$0xf]
    %v1772 = vld [vmem:[%s1 + $0x198] sm:$0xf]
    %v1773 = vld [vmem:[%s1 + $0x19c] sm:$0xf]
    %v1774 = vld [vmem:[%s1 + $0x1a0] sm:$0xf]
    %v1775 = vld [vmem:[%s1 + $0x1a4] sm:$0xf]
    %v1776 = vld [vmem:[%s1 + $0x1a8] sm:$0xf]
    %v1777 = vld [vmem:[%s1 + $0x1ac] sm:$0xf]
    %v1778 = vld [vmem:[%s1 + $0x1b0] sm:$0xf]
    %v1779 = vld [vmem:[%s1 + $0x1b4] sm:$0xf]
    %v1780 = vld [vmem:[%s1 + $0x1b8] sm:$0xf]
    %v1781 = vld [vmem:[%s1 + $0x1bc] sm:$0xf]
    %v1782 = vld [vmem:[%s1 + $0x1c0] sm:$0xf]
    %v1783 = vld [vmem:[%s1 + $0x1c4] sm:$0xf]
    %v1784 = vld [vmem:[%s1 + $0x1c8] sm:$0xf]
    %v1785 = vld [vmem:[%s1 + $0x1cc] sm:$0xf]
    %v1786 = vld [vmem:[%s1 + $0x1d0] sm:$0xf]
    %v1787 = vld [vmem:[%s1 + $0x1d4] sm:$0xf]
    %v1788 = vld [vmem:[%s1 + $0x1d8] sm:$0xf]
    %v1789 = vld [vmem:[%s1 + $0x1dc] sm:$0xf]
    %v1790 = vld [vmem:[%s1 + $0x1e0] sm:$0xf]
    %v1791 = vld [vmem:[%s1 + $0x1e4] sm:$0xf]
    %v1792 = vld [vmem:[%s1 + $0x1e8] sm:$0xf]
    %v1793 = vld [vmem:[%s1 + $0x1ec] sm:$0xf]
    %v1794 = vld [vmem:[%s1 + $0x1f0] sm:$0xf]
    %v1795 = vld [vmem:[%s1 + $0x1f4] sm:$0xf]
    %v1796 = vld [vmem:[%s1 + $0x1f8] sm:$0xf]
    %v1797 = vld [vmem:[%s1 + $0x1fc] sm:$0xf]
    %v1798 = vld [vmem:[%s1 + $0x200] sm:$0xf]
    %v1799 = vld [vmem:[%s1 + $0x204] sm:$0xf]
    %v1800 = vld [vmem:[%s1 + $0x208] sm:$0xf]
    %v1801 = vld [vmem:[%s1 + $0x20c] sm:$0xf]
    %v1802 = vld [vmem:[%s1 + $0x210] sm:$0xf]
    %v1803 = vld [vmem:[%s1 + $0x214] sm:$0xf]
    %v1804 = vld [vmem:[%s1 + $0x218] sm:$0xf]
    %v1805 = vld [vmem:[%s1 + $0x21c] sm:$0xf]
    %v1806 = vld [vmem:[%s1 + $0x220] sm:$0xf]
    %v1807 = vld [vmem:[%s1 + $0x224] sm:$0xf]
    %v1808 = vld [vmem:[%s1 + $0x228] sm:$0xf]
    %v1809 = vld [vmem:[%s1 + $0x22c] sm:$0xf]
    %v1810 = vld [vmem:[%s1 + $0x230] sm:$0xf]
    %v1811 = vld [vmem:[%s1 + $0x234] sm:$0xf]
    %v1812 = vld [vmem:[%s1 + $0x238] sm:$0xf]
    %v1813 = vld [vmem:[%s1 + $0x23c] sm:$0xf]
    %v1958 = vunpack.c.l.b16 %v1670
    %v1959 = vunpack.c.l.b16 %v1671
    %v1960 = vunpack.c.l.b16 %v1672
    %v1961 = vunpack.c.l.b16 %v1673
    %v1962 = vunpack.c.l.b16 %v1674
    %v1963 = vunpack.c.l.b16 %v1675
    %v1964 = vunpack.c.l.b16 %v1676
    %v1965 = vunpack.c.l.b16 %v1677
    %v1966 = vunpack.c.l.b16 %v1678
    %v1967 = vunpack.c.l.b16 %v1679
    %v1968 = vunpack.c.l.b16 %v1680
    %v1969 = vunpack.c.l.b16 %v1681
    %v1970 = vunpack.c.l.b16 %v1682
    %v1971 = vunpack.c.l.b16 %v1683
    %v1972 = vunpack.c.l.b16 %v1684
    %v1973 = vunpack.c.l.b16 %v1685
    %v1974 = vunpack.c.l.b16 %v1686
    %v1975 = vunpack.c.l.b16 %v1687
    %v1976 = vunpack.c.l.b16 %v1688
    %v1977 = vunpack.c.l.b16 %v1689
    %v1978 = vunpack.c.l.b16 %v1690
    %v1979 = vunpack.c.l.b16 %v1691
    %v1980 = vunpack.c.l.b16 %v1692
    %v1981 = vunpack.c.l.b16 %v1693
    %v1982 = vunpack.c.l.b16 %v1694
    %v1983 = vunpack.c.l.b16 %v1695
    %v1984 = vunpack.c.l.b16 %v1696
    %v1985 = vunpack.c.l.b16 %v1697
    %v1986 = vunpack.c.l.b16 %v1698
    %v1987 = vunpack.c.l.b16 %v1699
    %v1988 = vunpack.c.l.b16 %v1700
    %v1989 = vunpack.c.l.b16 %v1701
    %v1990 = vunpack.c.l.b16 %v1702
    %v1991 = vunpack.c.l.b16 %v1703
    %v1992 = vunpack.c.l.b16 %v1704
    %v1993 = vunpack.c.l.b16 %v1705
    %v1994 = vunpack.c.l.b16 %v1706
    %v1995 = vunpack.c.l.b16 %v1707
    %v1996 = vunpack.c.l.b16 %v1708
    %v1997 = vunpack.c.l.b16 %v1709
    %v1998 = vunpack.c.l.b16 %v1710
    %v1999 = vunpack.c.l.b16 %v1711
    %v2000 = vunpack.c.l.b16 %v1712
    %v2001 = vunpack.c.l.b16 %v1713
    %v2002 = vunpack.c.l.b16 %v1714
    %v2003 = vunpack.c.l.b16 %v1715
    %v2004 = vunpack.c.l.b16 %v1716
    %v2005 = vunpack.c.l.b16 %v1717
    %v2006 = vunpack.c.l.b16 %v1718
    %v2007 = vunpack.c.l.b16 %v1719
    %v2008 = vunpack.c.l.b16 %v1720
    %v2009 = vunpack.c.l.b16 %v1721
    %v2010 = vunpack.c.l.b16 %v1722
    %v2011 = vunpack.c.l.b16 %v1723
    %v2012 = vunpack.c.l.b16 %v1724
    %v2013 = vunpack.c.l.b16 %v1725
    %v2014 = vunpack.c.l.b16 %v1726
    %v2015 = vunpack.c.l.b16 %v1727
    %v2016 = vunpack.c.l.b16 %v1728
    %v2017 = vunpack.c.l.b16 %v1729
    %v2018 = vunpack.c.l.b16 %v1730
    %v2019 = vunpack.c.l.b16 %v1731
    %v2020 = vunpack.c.l.b16 %v1732
    %v2021 = vunpack.c.l.b16 %v1733
    %v2022 = vunpack.c.l.b16 %v1734
    %v2023 = vunpack.c.l.b16 %v1735
    %v2024 = vunpack.c.l.b16 %v1736
    %v2025 = vunpack.c.l.b16 %v1737
    %v2026 = vunpack.c.l.b16 %v1738
    %v2027 = vunpack.c.l.b16 %v1739
    %v2028 = vunpack.c.l.b16 %v1740
    %v2029 = vunpack.c.l.b16 %v1741
    %v2030 = vunpack.c.l.b16 %v1742
    %v2031 = vunpack.c.l.b16 %v1743
    %v2032 = vunpack.c.l.b16 %v1744
    %v2033 = vunpack.c.l.b16 %v1745
    %v2034 = vunpack.c.l.b16 %v1746
    %v2035 = vunpack.c.l.b16 %v1747
    %v2036 = vunpack.c.l.b16 %v1748
    %v2037 = vunpack.c.l.b16 %v1749
    %v2038 = vunpack.c.l.b16 %v1750
    %v2039 = vunpack.c.l.b16 %v1751
    %v2040 = vunpack.c.l.b16 %v1752
    %v2041 = vunpack.c.l.b16 %v1753
    %v2042 = vunpack.c.l.b16 %v1754
    %v2043 = vunpack.c.l.b16 %v1755
    %v2044 = vunpack.c.l.b16 %v1756
    %v2045 = vunpack.c.l.b16 %v1757
    %v2046 = vunpack.c.l.b16 %v1758
    %v2047 = vunpack.c.l.b16 %v1759
    %v2048 = vunpack.c.l.b16 %v1760
    %v2049 = vunpack.c.l.b16 %v1761
    %v2050 = vunpack.c.l.b16 %v1762
    %v2051 = vunpack.c.l.b16 %v1763
    %v2052 = vunpack.c.l.b16 %v1764
    %v2053 = vunpack.c.l.b16 %v1765
    %v2054 = vunpack.c.l.b16 %v1766
    %v2055 = vunpack.c.l.b16 %v1767
    %v2056 = vunpack.c.l.b16 %v1768
    %v2057 = vunpack.c.l.b16 %v1769
    %v2058 = vunpack.c.l.b16 %v1770
    %v2059 = vunpack.c.l.b16 %v1771
    %v2060 = vunpack.c.l.b16 %v1772
    %v2061 = vunpack.c.l.b16 %v1773
    %v2062 = vunpack.c.l.b16 %v1774
    %v2063 = vunpack.c.l.b16 %v1775
    %v2064 = vunpack.c.l.b16 %v1776
    %v2065 = vunpack.c.l.b16 %v1777
    %v2066 = vunpack.c.l.b16 %v1778
    %v2067 = vunpack.c.l.b16 %v1779
    %v2068 = vunpack.c.l.b16 %v1780
    %v2069 = vunpack.c.l.b16 %v1781
    %v2070 = vunpack.c.l.b16 %v1782
    %v2071 = vunpack.c.l.b16 %v1783
    %v2072 = vunpack.c.l.b16 %v1784
    %v2073 = vunpack.c.l.b16 %v1785
    %v2074 = vunpack.c.l.b16 %v1786
    %v2075 = vunpack.c.l.b16 %v1787
    %v2076 = vunpack.c.l.b16 %v1788
    %v2077 = vunpack.c.l.b16 %v1789
    %v2078 = vunpack.c.l.b16 %v1790
    %v2079 = vunpack.c.l.b16 %v1791
    %v2080 = vunpack.c.l.b16 %v1792
    %v2081 = vunpack.c.l.b16 %v1793
    %v2082 = vunpack.c.l.b16 %v1794
    %v2083 = vunpack.c.l.b16 %v1795
    %v2084 = vunpack.c.l.b16 %v1796
    %v2085 = vunpack.c.l.b16 %v1797
    %v2086 = vunpack.c.l.b16 %v1798
    %v2087 = vunpack.c.l.b16 %v1799
    %v2088 = vunpack.c.l.b16 %v1800
    %v2089 = vunpack.c.l.b16 %v1801
    %v2090 = vunpack.c.l.b16 %v1802
    %v2091 = vunpack.c.l.b16 %v1803
    %v2092 = vunpack.c.l.b16 %v1804
    %v2093 = vunpack.c.l.b16 %v1805
    %v2094 = vunpack.c.l.b16 %v1806
    %v2095 = vunpack.c.l.b16 %v1807
    %v2096 = vunpack.c.l.b16 %v1808
    %v2097 = vunpack.c.l.b16 %v1809
    %v2098 = vunpack.c.l.b16 %v1810
    %v2099 = vunpack.c.l.b16 %v1811
    %v2100 = vunpack.c.l.b16 %v1812
    %v2101 = vunpack.c.l.b16 %v1813
    %v2102 = vpack.c.b16 %v1959, %v1958
    %v2103 = vpack.c.b16 %v1961, %v1960
    %v2104 = vpack.c.b16 %v1963, %v1962
    %v2105 = vpack.c.b16 %v1965, %v1964
    %v2106 = vpack.c.b16 %v1967, %v1966
    %v2107 = vpack.c.b16 %v1969, %v1968
    %v2108 = vpack.c.b16 %v1971, %v1970
    %v2109 = vpack.c.b16 %v1973, %v1972
    %v2110 = vpack.c.b16 %v1975, %v1974
    %v2111 = vpack.c.b16 %v1977, %v1976
    %v2112 = vpack.c.b16 %v1979, %v1978
    %v2113 = vpack.c.b16 %v1981, %v1980
    %v2114 = vpack.c.b16 %v1983, %v1982
    %v2115 = vpack.c.b16 %v1985, %v1984
    %v2116 = vpack.c.b16 %v1987, %v1986
    %v2117 = vpack.c.b16 %v1989, %v1988
    %v2118 = vpack.c.b16 %v1991, %v1990
    %v2119 = vpack.c.b16 %v1993, %v1992
    %v2120 = vpack.c.b16 %v1995, %v1994
    %v2121 = vpack.c.b16 %v1997, %v1996
    %v2122 = vpack.c.b16 %v1999, %v1998
    %v2123 = vpack.c.b16 %v2001, %v2000
    %v2124 = vpack.c.b16 %v2003, %v2002
    %v2125 = vpack.c.b16 %v2005, %v2004
    %v2126 = vpack.c.b16 %v2007, %v2006
    %v2127 = vpack.c.b16 %v2009, %v2008
    %v2128 = vpack.c.b16 %v2011, %v2010
    %v2129 = vpack.c.b16 %v2013, %v2012
    %v2130 = vpack.c.b16 %v2015, %v2014
    %v2131 = vpack.c.b16 %v2017, %v2016
    %v2132 = vpack.c.b16 %v2019, %v2018
    %v2133 = vpack.c.b16 %v2021, %v2020
    %v2134 = vpack.c.b16 %v2023, %v2022
    %v2135 = vpack.c.b16 %v2025, %v2024
    %v2136 = vpack.c.b16 %v2027, %v2026
    %v2137 = vpack.c.b16 %v2029, %v2028
    %v2138 = vpack.c.b16 %v2031, %v2030
    %v2139 = vpack.c.b16 %v2033, %v2032
    %v2140 = vpack.c.b16 %v2035, %v2034
    %v2141 = vpack.c.b16 %v2037, %v2036
    %v2142 = vpack.c.b16 %v2039, %v2038
    %v2143 = vpack.c.b16 %v2041, %v2040
    %v2144 = vpack.c.b16 %v2043, %v2042
    %v2145 = vpack.c.b16 %v2045, %v2044
    %v2146 = vpack.c.b16 %v2047, %v2046
    %v2147 = vpack.c.b16 %v2049, %v2048
    %v2148 = vpack.c.b16 %v2051, %v2050
    %v2149 = vpack.c.b16 %v2053, %v2052
    %v2150 = vpack.c.b16 %v2055, %v2054
    %v2151 = vpack.c.b16 %v2057, %v2056
    %v2152 = vpack.c.b16 %v2059, %v2058
    %v2153 = vpack.c.b16 %v2061, %v2060
    %v2154 = vpack.c.b16 %v2063, %v2062
    %v2155 = vpack.c.b16 %v2065, %v2064
    %v2156 = vpack.c.b16 %v2067, %v2066
    %v2157 = vpack.c.b16 %v2069, %v2068
    %v2158 = vpack.c.b16 %v2071, %v2070
    %v2159 = vpack.c.b16 %v2073, %v2072
    %v2160 = vpack.c.b16 %v2075, %v2074
    %v2161 = vpack.c.b16 %v2077, %v2076
    %v2162 = vpack.c.b16 %v2079, %v2078
    %v2163 = vpack.c.b16 %v2081, %v2080
    %v2164 = vpack.c.b16 %v2083, %v2082
    %v2165 = vpack.c.b16 %v2085, %v2084
    %v2166 = vpack.c.b16 %v2087, %v2086
    %v2167 = vpack.c.b16 %v2089, %v2088
    %v2168 = vpack.c.b16 %v2091, %v2090
    %v2169 = vpack.c.b16 %v2093, %v2092
    %v2170 = vpack.c.b16 %v2095, %v2094
    %v2171 = vpack.c.b16 %v2097, %v2096
    %v2172 = vpack.c.b16 %v2099, %v2098
    %v2173 = vpack.c.b16 %v2101, %v2100
    %2246 = vmatprep.subr.bf16.mxu0 0
    %2247 = vmatpush1.bf16.msra.mxu0 %v2102
    %2248 = vmatprep.subr.bf16.mxu0 0
    %2249 = vmatpush1.bf16.msra.mxu0 %v2103
    %2250 = vmatprep.subr.bf16.mxu0 0
    %2251 = vmatpush1.bf16.msra.mxu0 %v2104
    %2252 = vmatprep.subr.bf16.mxu0 0
    %2253 = vmatpush1.bf16.msra.mxu0 %v2105
    %2254 = vmatprep.subr.bf16.mxu0 0
    %2255 = vmatpush1.bf16.msra.mxu0 %v2106
    %2256 = vmatprep.subr.bf16.mxu0 0
    %2257 = vmatpush1.bf16.msra.mxu0 %v2107
    %2258 = vmatprep.subr.bf16.mxu0 0
    %2259 = vmatpush1.bf16.msra.mxu0 %v2108
    %2260 = vmatprep.subr.bf16.mxu0 0
    %2261 = vmatpush1.bf16.msra.mxu0 %v2109
    %2262 = vmatprep.subr.bf16.mxu0 0
    %2263 = vmatpush1.bf16.msra.mxu0 %v2110
    %2264 = vmatprep.subr.bf16.mxu0 0
    %2265 = vmatpush1.bf16.msra.mxu0 %v2111
    %2266 = vmatprep.subr.bf16.mxu0 0
    %2267 = vmatpush1.bf16.msra.mxu0 %v2112
    %2268 = vmatprep.subr.bf16.mxu0 0
    %2269 = vmatpush1.bf16.msra.mxu0 %v2113
    %2270 = vmatprep.subr.bf16.mxu0 0
    %2271 = vmatpush1.bf16.msra.mxu0 %v2114
    %2272 = vmatprep.subr.bf16.mxu0 0
    %2273 = vmatpush1.bf16.msra.mxu0 %v2115
    %2274 = vmatprep.subr.bf16.mxu0 0
    %2275 = vmatpush1.bf16.msra.mxu0 %v2116
    %2276 = vmatprep.subr.bf16.mxu0 0
    %2277 = vmatpush1.bf16.msra.mxu0 %v2117
    %2278 = vmatprep.mubr.bf16.mxu0 %v1398
    %2279 = vmatmul.mubr.bf16.gmra.mrb[0].mxu0 %v1366
    %v2280 = vpop.f32.mrb[0].mxu0
    %v2281 = vadd.f32 0.0, %v2280
    %v2282 = vpop.f32.mrb[0].mxu0
    %v2283 = vpop.f32.mrb[0].mxu0
    %v2284 = vadd.f32 0.0, %v2283
    %v2285 = vpop.f32.mrb[0].mxu0
    %2286 = vmatprep.mubr.bf16.mxu0 %v1399
    %2287 = vmatmul.mubr.bf16.gmra.mrb[0].mxu0 %v1367
    %v2288 = vpop.f32.mrb[0].mxu0
    %v2289 = vadd.f32 0.0, %v2288
    %v2290 = vpop.f32.mrb[0].mxu0
    %v2291 = vpop.f32.mrb[0].mxu0
    %v2292 = vadd.f32 0.0, %v2291
    %v2293 = vpop.f32.mrb[0].mxu0
    %2294 = vmatprep.mubr.bf16.mxu0 %v1400
    %2295 = vmatmul.mubr.bf16.gmra.mrb[0].mxu0 %v1368
    %v2296 = vpop.f32.mrb[0].mxu0
    %v2297 = vadd.f32 0.0, %v2296
    %v2298 = vpop.f32.mrb[0].mxu0
    %v2299 = vpop.f32.mrb[0].mxu0
    %v2300 = vadd.f32 0.0, %v2299
    %v2301 = vpop.f32.mrb[0].mxu0
    %2302 = vmatprep.mubr.bf16.mxu0 %v1401
    %2303 = vmatmul.mubr.bf16.gmra.mrb[0].mxu0 %v1369
    %v2304 = vpop.f32.mrb[0].mxu0
    %v2305 = vadd.f32 0.0, %v2304
    %v2306 = vpop.f32.mrb[0].mxu0
    %v2307 = vpop.f32.mrb[0].mxu0
    %v2308 = vadd.f32 0.0, %v2307
    %v2309 = vpop.f32.mrb[0].mxu0
    %2310 = vmatprep.mubr.bf16.mxu0 %v1402
    %2311 = vmatmul.mubr.bf16.gmra.mrb[0].mxu0 %v1370
    %v2312 = vpop.f32.mrb[0].mxu0
    %v2313 = vadd.f32 0.0, %v2312
    %v2314 = vpop.f32.mrb[0].mxu0
    %v2315 = vpop.f32.mrb[0].mxu0
    %v2316 = vadd.f32 0.0, %v2315
    %v2317 = vpop.f32.mrb[0].mxu0
    %2318 = vmatprep.mubr.bf16.mxu0 %v1403
    %2319 = vmatmul.mubr.bf16.gmra.mrb[0].mxu0 %v1371
    %v2320 = vpop.f32.mrb[0].mxu0
    %v2321 = vadd.f32 0.0, %v2320
    %v2322 = vpop.f32.mrb[0].mxu0
    %v2323 = vpop.f32.mrb[0].mxu0
    %v2324 = vadd.f32 0.0, %v2323
    %v2325 = vpop.f32.mrb[0].mxu0
    %2326 = vmatprep.mubr.bf16.mxu0 %v1404
    %2327 = vmatmul.mubr.bf16.gmra.mrb[0].mxu0 %v1372
    %v2328 = vpop.f32.mrb[0].mxu0
    %v2329 = vadd.f32 0.0, %v2328
    %v2330 = vpop.f32.mrb[0].mxu0
    %v2331 = vpop.f32.mrb[0].mxu0
    %v2332 = vadd.f32 0.0, %v2331
    %v2333 = vpop.f32.mrb[0].mxu0
    %2334 = vmatprep.mubr.bf16.mxu0 %v1405
    %2335 = vmatmul.mubr.bf16.gmra.mrb[0].mxu0 %v1373
    %v2336 = vpop.f32.mrb[0].mxu0
    %v2337 = vadd.f32 0.0, %v2336
    %v2338 = vpop.f32.mrb[0].mxu0
    %v2339 = vpop.f32.mrb[0].mxu0
    %v2340 = vadd.f32 0.0, %v2339
    %v2341 = vpop.f32.mrb[0].mxu0
    %2342 = vdwg.mxu0
    %2343 = vmatprep.subr.bf16.mxu0 0
    %2344 = vmatpush1.bf16.msra.mxu0 %v2118
    %2345 = vmatprep.subr.bf16.mxu0 0
    %2346 = vmatpush1.bf16.msra.mxu0 %v2119
    %2347 = vmatprep.subr.bf16.mxu0 0
    %2348 = vmatpush1.bf16.msra.mxu0 %v2120
    %2349 = vmatprep.subr.bf16.mxu0 0
    %2350 = vmatpush1.bf16.msra.mxu0 %v2121
    %2351 = vmatprep.subr.bf16.mxu0 0
    %2352 = vmatpush1.bf16.msra.mxu0 %v2122
    %2353 = vmatprep.subr.bf16.mxu0 0
    %2354 = vmatpush1.bf16.msra.mxu0 %v2123
    %2355 = vmatprep.subr.bf16.mxu0 0
    %2356 = vmatpush1.bf16.msra.mxu0 %v2124
    %2357 = vmatprep.subr.bf16.mxu0 0
    %2358 = vmatpush1.bf16.msra.mxu0 %v2125
    %2359 = vmatprep.subr.bf16.mxu0 0
    %2360 = vmatpush1.bf16.msra.mxu0 %v2126
    %2361 = vmatprep.subr.bf16.mxu0 0
    %2362 = vmatpush1.bf16.msra.mxu0 %v2127
    %2363 = vmatprep.subr.bf16.mxu0 0
    %2364 = vmatpush1.bf16.msra.mxu0 %v2128
    %2365 = vmatprep.subr.bf16.mxu0 0
    %2366 = vmatpush1.bf16.msra.mxu0 %v2129
    %2367 = vmatprep.subr.bf16.mxu0 0
    %2368 = vmatpush1.bf16.msra.mxu0 %v2130
    %2369 = vmatprep.subr.bf16.mxu0 0
    %2370 = vmatpush1.bf16.msra.mxu0 %v2131
    %2371 = vmatprep.subr.bf16.mxu0 0
    %2372 = vmatpush1.bf16.msra.mxu0 %v2132
    %2373 = vmatprep.subr.bf16.mxu0 0
    %2374 = vmatpush1.bf16.msra.mxu0 %v2133
    %2375 = vmatprep.mubr.bf16.mxu0 %v1478
    %2376 = vmatmul.mubr.bf16.gmra.mrb[0].mxu0 %v1430
    %v2377 = vpop.f32.mrb[0].mxu0
    %v2378 = vadd.f32 %v2281, %v2377
    %v2379 = vpop.f32.mrb[0].mxu0
    %v2380 = vpop.f32.mrb[0].mxu0
    %v2381 = vadd.f32 %v2284, %v2380
    %v2382 = vpop.f32.mrb[0].mxu0
    %2383 = vmatprep.mubr.bf16.mxu0 %v1479
    %2384 = vmatmul.mubr.bf16.gmra.mrb[0].mxu0 %v1431
    %v2385 = vpop.f32.mrb[0].mxu0
    %v2386 = vadd.f32 %v2289, %v2385
    %v2387 = vpop.f32.mrb[0].mxu0
    %v2388 = vpop.f32.mrb[0].mxu0
    %v2389 = vadd.f32 %v2292, %v2388
    %v2390 = vpop.f32.mrb[0].mxu0
    %2391 = vmatprep.mubr.bf16.mxu0 %v1480
    %2392 = vmatmul.mubr.bf16.gmra.mrb[0].mxu0 %v1432
    %v2393 = vpop.f32.mrb[0].mxu0
    %v2394 = vadd.f32 %v2297, %v2393
    %v2395 = vpop.f32.mrb[0].mxu0
    %v2396 = vpop.f32.mrb[0].mxu0
    %v2397 = vadd.f32 %v2300, %v2396
    %v2398 = vpop.f32.mrb[0].mxu0
    %2399 = vmatprep.mubr.bf16.mxu0 %v1481
    %2400 = vmatmul.mubr.bf16.gmra.mrb[0].mxu0 %v1433
    %v2401 = vpop.f32.mrb[0].mxu0
    %v2402 = vadd.f32 %v2305, %v2401
    %v2403 = vpop.f32.mrb[0].mxu0
    %v2404 = vpop.f32.mrb[0].mxu0
    %v2405 = vadd.f32 %v2308, %v2404
    %v2406 = vpop.f32.mrb[0].mxu0
    %2407 = vmatprep.mubr.bf16.mxu0 %v1482
    %2408 = vmatmul.mubr.bf16.gmra.mrb[0].mxu0 %v1434
    %v2409 = vpop.f32.mrb[0].mxu0
    %v2410 = vadd.f32 %v2313, %v2409
    %v2411 = vpop.f32.mrb[0].mxu0
    %v2412 = vpop.f32.mrb[0].mxu0
    %v2413 = vadd.f32 %v2316, %v2412
    %v2414 = vpop.f32.mrb[0].mxu0
    %2415 = vmatprep.mubr.bf16.mxu0 %v1483
    %2416 = vmatmul.mubr.bf16.gmra.mrb[0].mxu0 %v1435
    %v2417 = vpop.f32.mrb[0].mxu0
    %v2418 = vadd.f32 %v2321, %v2417
    %v2419 = vpop.f32.mrb[0].mxu0
    %v2420 = vpop.f32.mrb[0].mxu0
    %v2421 = vadd.f32 %v2324, %v2420
    %v2422 = vpop.f32.mrb[0].mxu0
    %2423 = vmatprep.mubr.bf16.mxu0 %v1484
    %2424 = vmatmul.mubr.bf16.gmra.mrb[0].mxu0 %v1436
    %v2425 = vpop.f32.mrb[0].mxu0
    %v2426 = vadd.f32 %v2329, %v2425
    %v2427 = vpop.f32.mrb[0].mxu0
    %v2428 = vpop.f32.mrb[0].mxu0
    %v2429 = vadd.f32 %v2332, %v2428
    %v2430 = vpop.f32.mrb[0].mxu0
    %2431 = vmatprep.mubr.bf16.mxu0 %v1485
    %2432 = vmatmul.mubr.bf16.gmra.mrb[0].mxu0 %v1437
    %v2433 = vpop.f32.mrb[0].mxu0
    %v2434 = vadd.f32 %v2337, %v2433
    %v2435 = vpop.f32.mrb[0].mxu0
    %v2436 = vpop.f32.mrb[0].mxu0
    %v2437 = vadd.f32 %v2340, %v2436
    %v2438 = vpop.f32.mrb[0].mxu0
    %2439 = vdwg.mxu0
    %2440 = vmatprep.subr.bf16.mxu0 0
    %2441 = vmatpush1.bf16.msra.mxu0 %v2134
    %2442 = vmatprep.subr.bf16.mxu0 0
    %2443 = vmatpush1.bf16.msra.mxu0 %v2135
    %2444 = vmatprep.subr.bf16.mxu0 0
    %2445 = vmatpush1.bf16.msra.mxu0 %v2136
    %2446 = vmatprep.subr.bf16.mxu0 0
    %2447 = vmatpush1.bf16.msra.mxu0 %v2137
    %2448 = vmatprep.subr.bf16.mxu0 0
    %2449 = vmatpush1.bf16.msra.mxu0 %v2138
    %2450 = vmatprep.subr.bf16.mxu0 0
    %2451 = vmatpush1.bf16.msra.mxu0 %v2139
    %2452 = vmatprep.subr.bf16.mxu0 0
    %2453 = vmatpush1.bf16.msra.mxu0 %v2140
    %2454 = vmatprep.subr.bf16.mxu0 0
    %2455 = vmatpush1.bf16.msra.mxu0 %v2141
    %2456 = vmatprep.subr.bf16.mxu0 0
    %2457 = vmatpush1.bf16.msra.mxu0 %v2142
    %2458 = vmatprep.subr.bf16.mxu0 0
    %2459 = vmatpush1.bf16.msra.mxu0 %v2143
    %2460 = vmatprep.subr.bf16.mxu0 0
    %2461 = vmatpush1.bf16.msra.mxu0 %v2144
    %2462 = vmatprep.subr.bf16.mxu0 0
    %2463 = vmatpush1.bf16.msra.mxu0 %v2145
    %2464 = vmatprep.subr.bf16.mxu0 0
    %2465 = vmatpush1.bf16.msra.mxu0 %v2146
    %2466 = vmatprep.subr.bf16.mxu0 0
    %2467 = vmatpush1.bf16.msra.mxu0 %v2147
    %2468 = vmatprep.subr.bf16.mxu0 0
    %2469 = vmatpush1.bf16.msra.mxu0 %v2148
    %2470 = vmatprep.subr.bf16.mxu0 0
    %2471 = vmatpush1.bf16.msra.mxu0 %v2149
    %2472 = vmatprep.mubr.bf16.mxu0 %v1542
    %2473 = vmatmul.mubr.bf16.gmra.mrb[0].mxu0 %v1510
    %v2474 = vpop.f32.mrb[0].mxu0
    %v2475 = vadd.f32 %v2378, %v2474
    %v2476 = vpop.f32.mrb[0].mxu0
    %v2477 = vpop.f32.mrb[0].mxu0
    %v2478 = vadd.f32 %v2381, %v2477
    %v2479 = vpop.f32.mrb[0].mxu0
    %2480 = vmatprep.mubr.bf16.mxu0 %v1543
    %2481 = vmatmul.mubr.bf16.gmra.mrb[0].mxu0 %v1511
    %v2482 = vpop.f32.mrb[0].mxu0
    %v2483 = vadd.f32 %v2386, %v2482
    %v2484 = vpop.f32.mrb[0].mxu0
    %v2485 = vpop.f32.mrb[0].mxu0
    %v2486 = vadd.f32 %v2389, %v2485
    %v2487 = vpop.f32.mrb[0].mxu0
    %2488 = vmatprep.mubr.bf16.mxu0 %v1544
    %2489 = vmatmul.mubr.bf16.gmra.mrb[0].mxu0 %v1512
    %v2490 = vpop.f32.mrb[0].mxu0
    %v2491 = vadd.f32 %v2394, %v2490
    %v2492 = vpop.f32.mrb[0].mxu0
    %v2493 = vpop.f32.mrb[0].mxu0
    %v2494 = vadd.f32 %v2397, %v2493
    %v2495 = vpop.f32.mrb[0].mxu0
    %2496 = vmatprep.mubr.bf16.mxu0 %v1545
    %2497 = vmatmul.mubr.bf16.gmra.mrb[0].mxu0 %v1513
    %v2498 = vpop.f32.mrb[0].mxu0
    %v2499 = vadd.f32 %v2402, %v2498
    %v2500 = vpop.f32.mrb[0].mxu0
    %v2501 = vpop.f32.mrb[0].mxu0
    %v2502 = vadd.f32 %v2405, %v2501
    %v2503 = vpop.f32.mrb[0].mxu0
    %2504 = vmatprep.mubr.bf16.mxu0 %v1546
    %2505 = vmatmul.mubr.bf16.gmra.mrb[0].mxu0 %v1514
    %v2506 = vpop.f32.mrb[0].mxu0
    %v2507 = vadd.f32 %v2410, %v2506
    %v2508 = vpop.f32.mrb[0].mxu0
    %v2509 = vpop.f32.mrb[0].mxu0
    %v2510 = vadd.f32 %v2413, %v2509
    %v2511 = vpop.f32.mrb[0].mxu0
    %2512 = vmatprep.mubr.bf16.mxu0 %v1547
    %2513 = vmatmul.mubr.bf16.gmra.mrb[0].mxu0 %v1515
    %v2514 = vpop.f32.mrb[0].mxu0
    %v2515 = vadd.f32 %v2418, %v2514
    %v2516 = vpop.f32.mrb[0].mxu0
    %v2517 = vpop.f32.mrb[0].mxu0
    %v2518 = vadd.f32 %v2421, %v2517
    %v2519 = vpop.f32.mrb[0].mxu0
    %2520 = vmatprep.mubr.bf16.mxu0 %v1548
    %2521 = vmatmul.mubr.bf16.gmra.mrb[0].mxu0 %v1516
    %v2522 = vpop.f32.mrb[0].mxu0
    %v2523 = vadd.f32 %v2426, %v2522
    %v2524 = vpop.f32.mrb[0].mxu0
    %v2525 = vpop.f32.mrb[0].mxu0
    %v2526 = vadd.f32 %v2429, %v2525
    %v2527 = vpop.f32.mrb[0].mxu0
    %2528 = vmatprep.mubr.bf16.mxu0 %v1549
    %2529 = vmatmul.mubr.bf16.gmra.mrb[0].mxu0 %v1517
    %v2530 = vpop.f32.mrb[0].mxu0
    %v2531 = vadd.f32 %v2434, %v2530
    %v2532 = vpop.f32.mrb[0].mxu0
    %v2533 = vpop.f32.mrb[0].mxu0
    %v2534 = vadd.f32 %v2437, %v2533
    %v2535 = vpop.f32.mrb[0].mxu0
    %2536 = vdwg.mxu0
    %2537 = vmatprep.subr.bf16.mxu0 0
    %2538 = vmatpush1.bf16.msra.mxu0 %v2150
    %2539 = vmatprep.subr.bf16.mxu0 0
    %2540 = vmatpush1.bf16.msra.mxu0 %v2151
    %2541 = vmatprep.subr.bf16.mxu0 0
    %2542 = vmatpush1.bf16.msra.mxu0 %v2152
    %2543 = vmatprep.subr.bf16.mxu0 0
    %2544 = vmatpush1.bf16.msra.mxu0 %v2153
    %2545 = vmatprep.subr.bf16.mxu0 0
    %2546 = vmatpush1.bf16.msra.mxu0 %v2154
    %2547 = vmatprep.subr.bf16.mxu0 0
    %2548 = vmatpush1.bf16.msra.mxu0 %v2155
    %2549 = vmatprep.subr.bf16.mxu0 0
    %2550 = vmatpush1.bf16.msra.mxu0 %v2156
    %2551 = vmatprep.subr.bf16.mxu0 0
    %2552 = vmatpush1.bf16.msra.mxu0 %v2157
    %2553 = vmatprep.subr.bf16.mxu0 0
    %2554 = vmatpush1.bf16.msra.mxu0 %v2158
    %2555 = vmatprep.subr.bf16.mxu0 0
    %2556 = vmatpush1.bf16.msra.mxu0 %v2159
    %2557 = vmatprep.subr.bf16.mxu0 0
    %2558 = vmatpush1.bf16.msra.mxu0 %v2160
    %2559 = vmatprep.subr.bf16.mxu0 0
    %2560 = vmatpush1.bf16.msra.mxu0 %v2161
    %2561 = vmatprep.subr.bf16.mxu0 0
    %2562 = vmatpush1.bf16.msra.mxu0 %v2162
    %2563 = vmatprep.subr.bf16.mxu0 0
    %2564 = vmatpush1.bf16.msra.mxu0 %v2163
    %2565 = vmatprep.subr.bf16.mxu0 0
    %2566 = vmatpush1.bf16.msra.mxu0 %v2164
    %2567 = vmatprep.subr.bf16.mxu0 0
    %2568 = vmatpush1.bf16.msra.mxu0 %v2165
    %2569 = vmatprep.mubr.bf16.mxu0 %v1622
    %2570 = vmatmul.mubr.bf16.gmra.mrb[0].mxu0 %v1590
    %v2571 = vpop.f32.mrb[0].mxu0
    %v2572 = vadd.f32 %v2475, %v2571
    %v2573 = vpop.f32.mrb[0].mxu0
    %v2574 = vpop.f32.mrb[0].mxu0
    %v2575 = vadd.f32 %v2478, %v2574
    %v2576 = vpop.f32.mrb[0].mxu0
    %2577 = vmatprep.mubr.bf16.mxu0 %v1623
    %2578 = vmatmul.mubr.bf16.gmra.mrb[0].mxu0 %v1591
    %v2579 = vpop.f32.mrb[0].mxu0
    %v2580 = vadd.f32 %v2483, %v2579
    %v2581 = vpop.f32.mrb[0].mxu0
    %v2582 = vpop.f32.mrb[0].mxu0
    %v2583 = vadd.f32 %v2486, %v2582
    %v2584 = vpop.f32.mrb[0].mxu0
    %2585 = vmatprep.mubr.bf16.mxu0 %v1624
    %2586 = vmatmul.mubr.bf16.gmra.mrb[0].mxu0 %v1592
    %v2587 = vpop.f32.mrb[0].mxu0
    %v2588 = vadd.f32 %v2491, %v2587
    %v2589 = vpop.f32.mrb[0].mxu0
    %v2590 = vpop.f32.mrb[0].mxu0
    %v2591 = vadd.f32 %v2494, %v2590
    %v2592 = vpop.f32.mrb[0].mxu0
    %2593 = vmatprep.mubr.bf16.mxu0 %v1625
    %2594 = vmatmul.mubr.bf16.gmra.mrb[0].mxu0 %v1593
    %v2595 = vpop.f32.mrb[0].mxu0
    %v2596 = vadd.f32 %v2499, %v2595
    %v2597 = vpop.f32.mrb[0].mxu0
    %v2598 = vpop.f32.mrb[0].mxu0
    %v2599 = vadd.f32 %v2502, %v2598
    %v2600 = vpop.f32.mrb[0].mxu0
    %2601 = vmatprep.mubr.bf16.mxu0 %v1626
    %2602 = vmatmul.mubr.bf16.gmra.mrb[0].mxu0 %v1594
    %v2603 = vpop.f32.mrb[0].mxu0
    %v2604 = vadd.f32 %v2507, %v2603
    %v2605 = vpop.f32.mrb[0].mxu0
    %v2606 = vpop.f32.mrb[0].mxu0
    %v2607 = vadd.f32 %v2510, %v2606
    %v2608 = vpop.f32.mrb[0].mxu0
    %2609 = vmatprep.mubr.bf16.mxu0 %v1627
    %2610 = vmatmul.mubr.bf16.gmra.mrb[0].mxu0 %v1595
    %v2611 = vpop.f32.mrb[0].mxu0
    %v2612 = vadd.f32 %v2515, %v2611
    %v2613 = vpop.f32.mrb[0].mxu0
    %v2614 = vpop.f32.mrb[0].mxu0
    %v2615 = vadd.f32 %v2518, %v2614
    %v2616 = vpop.f32.mrb[0].mxu0
    %2617 = vmatprep.mubr.bf16.mxu0 %v1628
    %2618 = vmatmul.mubr.bf16.gmra.mrb[0].mxu0 %v1596
    %v2619 = vpop.f32.mrb[0].mxu0
    %v2620 = vadd.f32 %v2523, %v2619
    %v2621 = vpop.f32.mrb[0].mxu0
    %v2622 = vpop.f32.mrb[0].mxu0
    %v2623 = vadd.f32 %v2526, %v2622
    %v2624 = vpop.f32.mrb[0].mxu0
    %2625 = vmatprep.mubr.bf16.mxu0 %v1629
    %2626 = vmatmul.mubr.bf16.gmra.mrb[0].mxu0 %v1597
    %v2627 = vpop.f32.mrb[0].mxu0
    %v2628 = vadd.f32 %v2531, %v2627
    %v2629 = vpop.f32.mrb[0].mxu0
    %v2630 = vpop.f32.mrb[0].mxu0
    %v2631 = vadd.f32 %v2534, %v2630
    %v2632 = vpop.f32.mrb[0].mxu0
    %2633 = vdwg.mxu0
    %2634 = vmatprep.subr.bf16.mxu0 0
    %2635 = vmatpush1.bf16.msra.mxu0 %v2166
    %2636 = vmatprep.subr.bf16.mxu0 0
    %2637 = vmatpush1.bf16.msra.mxu0 %v2167
    %2638 = vmatprep.subr.bf16.mxu0 0
    %2639 = vmatpush1.bf16.msra.mxu0 %v2168
    %2640 = vmatprep.subr.bf16.mxu0 0
    %2641 = vmatpush1.bf16.msra.mxu0 %v2169
    %2642 = vmatprep.subr.bf16.mxu0 0
    %2643 = vmatpush1.bf16.msra.mxu0 %v2170
    %2644 = vmatprep.subr.bf16.mxu0 0
    %2645 = vmatpush1.bf16.msra.mxu0 %v2171
    %2646 = vmatprep.subr.bf16.mxu0 0
    %2647 = vmatpush1.bf16.msra.mxu0 %v2172
    %2648 = vmatprep.subr.bf16.mxu0 0
    %2649 = vmatpush1.bf16.msra.mxu0 %v2173
    %2650 = vmatprep.subr.bf16.mxu0 0
    %2651 = vmatpush1.bf16.msra.mxu0 0
    %2652 = vmatprep.subr.bf16.mxu0 0
    %2653 = vmatpush1.bf16.msra.mxu0 0
    %2654 = vmatprep.subr.bf16.mxu0 0
    %2655 = vmatpush1.bf16.msra.mxu0 0
    %2656 = vmatprep.subr.bf16.mxu0 0
    %2657 = vmatpush1.bf16.msra.mxu0 0
    %2658 = vmatprep.subr.bf16.mxu0 0
    %2659 = vmatpush1.bf16.msra.mxu0 0
    %2660 = vmatprep.subr.bf16.mxu0 0
    %2661 = vmatpush1.bf16.msra.mxu0 0
    %2662 = vmatprep.subr.bf16.mxu0 0
    %2663 = vmatpush1.bf16.msra.mxu0 0
    %2664 = vmatprep.subr.bf16.mxu0 0
    %2665 = vmatpush1.bf16.msra.mxu0 0
    %2666 = vmatprep.mubr.bf16.mxu0 0
    %2667 = vmatmul.mubr.bf16.gmra.mrb[0].mxu0 %v1654
    %v2668 = vpop.f32.mrb[0].mxu0
    %v2669 = vadd.f32 %v2572, %v2668
    %v2670 = vpop.f32.mrb[0].mxu0
    %v2671 = vpop.f32.mrb[0].mxu0
    %v2672 = vadd.f32 %v2575, %v2671
    %v2673 = vpop.f32.mrb[0].mxu0
    %2674 = vmatprep.mubr.bf16.mxu0 0
    %2675 = vmatmul.mubr.bf16.gmra.mrb[0].mxu0 %v1655
    %v2676 = vpop.f32.mrb[0].mxu0
    %v2677 = vadd.f32 %v2580, %v2676
    %v2678 = vpop.f32.mrb[0].mxu0
    %v2679 = vpop.f32.mrb[0].mxu0
    %v2680 = vadd.f32 %v2583, %v2679
    %v2681 = vpop.f32.mrb[0].mxu0
    %2682 = vmatprep.mubr.bf16.mxu0 0
    %2683 = vmatmul.mubr.bf16.gmra.mrb[0].mxu0 %v1656
    %v2684 = vpop.f32.mrb[0].mxu0
    %v2685 = vadd.f32 %v2588, %v2684
    %v2686 = vpop.f32.mrb[0].mxu0
    %v2687 = vpop.f32.mrb[0].mxu0
    %v2688 = vadd.f32 %v2591, %v2687
    %v2689 = vpop.f32.mrb[0].mxu0
    %2690 = vmatprep.mubr.bf16.mxu0 0
    %2691 = vmatmul.mubr.bf16.gmra.mrb[0].mxu0 %v1657
    %v2692 = vpop.f32.mrb[0].mxu0
    %v2693 = vadd.f32 %v2596, %v2692
    %v2694 = vpop.f32.mrb[0].mxu0
    %v2695 = vpop.f32.mrb[0].mxu0
    %v2696 = vadd.f32 %v2599, %v2695
    %v2697 = vpop.f32.mrb[0].mxu0
    %2698 = vmatprep.mubr.bf16.mxu0 0
    %2699 = vmatmul.mubr.bf16.gmra.mrb[0].mxu0 %v1658
    %v2700 = vpop.f32.mrb[0].mxu0
    %v2701 = vadd.f32 %v2604, %v2700
    %v2702 = vpop.f32.mrb[0].mxu0
    %v2703 = vpop.f32.mrb[0].mxu0
    %v2704 = vadd.f32 %v2607, %v2703
    %v2705 = vpop.f32.mrb[0].mxu0
    %2706 = vmatprep.mubr.bf16.mxu0 0
    %2707 = vmatmul.mubr.bf16.gmra.mrb[0].mxu0 %v1659
    %v2708 = vpop.f32.mrb[0].mxu0
    %v2709 = vadd.f32 %v2612, %v2708
    %v2710 = vpop.f32.mrb[0].mxu0
    %v2711 = vpop.f32.mrb[0].mxu0
    %v2712 = vadd.f32 %v2615, %v2711
    %v2713 = vpop.f32.mrb[0].mxu0
    %2714 = vmatprep.mubr.bf16.mxu0 0
    %2715 = vmatmul.mubr.bf16.gmra.mrb[0].mxu0 %v1660
    %v2716 = vpop.f32.mrb[0].mxu0
    %v2717 = vadd.f32 %v2620, %v2716
    %v2718 = vpop.f32.mrb[0].mxu0
    %v2719 = vpop.f32.mrb[0].mxu0
    %v2720 = vadd.f32 %v2623, %v2719
    %v2721 = vpop.f32.mrb[0].mxu0
    %2722 = vmatprep.mubr.bf16.mxu0 0
    %2723 = vmatmul.mubr.bf16.gmra.mrb[0].mxu0 %v1661
    %v2724 = vpop.f32.mrb[0].mxu0
    %v2725 = vadd.f32 %v2628, %v2724
    %v2726 = vpop.f32.mrb[0].mxu0
    %v2727 = vpop.f32.mrb[0].mxu0
    %v2728 = vadd.f32 %v2631, %v2727
    %v2729 = vpop.f32.mrb[0].mxu0
    %2730 = vdwg.mxu0
    %v2731 = vld [vmem:[%s2] sm:$0x1]
    %v2733 = vlaneseq
    %v2734 = vshrl.u32 %v2733, 7
    %v2735 = vsub.s32 0, %v2734
    %v2736 = vrot.slane %v2731, %v2735
    %v2738 = vmul.f32 %v2669, %v2736
    %v2739 = vmul.f32 %v2672, %v2736
    %v2740 = vmul.f32 %v2677, %v2736
    %v2741 = vmul.f32 %v2680, %v2736
    %v2742 = vmul.f32 %v2685, %v2736
    %v2743 = vmul.f32 %v2688, %v2736
    %v2744 = vmul.f32 %v2693, %v2736
    %v2745 = vmul.f32 %v2696, %v2736
    %v2746 = vmul.f32 %v2701, %v2736
    %v2747 = vmul.f32 %v2704, %v2736
    %v2748 = vmul.f32 %v2709, %v2736
    %v2749 = vmul.f32 %v2712, %v2736
    %v2750 = vmul.f32 %v2717, %v2736
    %v2751 = vmul.f32 %v2720, %v2736
    %v2752 = vmul.f32 %v2725, %v2736
    %v2753 = vmul.f32 %v2728, %v2736
    %v2754 = vld [vmem:[%s3] sm:$0x1]
    %v2756 = vlaneseq
    %v2757 = vshrl.u32 %v2756, 7
    %v2758 = vsub.s32 0, %v2757
    %v2759 = vrot.slane %v2754, %v2758
    %v2761 = vadd.f32 %v2738, %v2759
    %v2762 = vadd.f32 %v2739, %v2759
    %v2763 = vadd.f32 %v2740, %v2759
    %v2764 = vadd.f32 %v2741, %v2759
    %v2765 = vadd.f32 %v2742, %v2759
    %v2766 = vadd.f32 %v2743, %v2759
    %v2767 = vadd.f32 %v2744, %v2759
    %v2768 = vadd.f32 %v2745, %v2759
    %v2769 = vadd.f32 %v2746, %v2759
    %v2770 = vadd.f32 %v2747, %v2759
    %v2771 = vadd.f32 %v2748, %v2759
    %v2772 = vadd.f32 %v2749, %v2759
    %v2773 = vadd.f32 %v2750, %v2759
    %v2774 = vadd.f32 %v2751, %v2759
    %v2775 = vadd.f32 %v2752, %v2759
    %v2776 = vadd.f32 %v2753, %v2759
    %s2777 = smul.addr %s213, 4
    %s2778 = scalar_lea.vmem [#allocation2], %s2777
    %v2779 = vld [vmem:[%s2778] sm:$0xf]
    %v2780 = vld [vmem:[%s2778 + $0x8] sm:$0xf]
    %v2781 = vld [vmem:[%s2778 + $0x10] sm:$0xf]
    %v2782 = vld [vmem:[%s2778 + $0x18] sm:$0xf]
    %v2783 = vld [vmem:[%s2778 + $0x20] sm:$0xf]
    %v2784 = vld [vmem:[%s2778 + $0x28] sm:$0xf]
    %v2785 = vld [vmem:[%s2778 + $0x30] sm:$0xf]
    %v2786 = vld [vmem:[%s2778 + $0x38] sm:$0xf]
    %v2787 = vld [vmem:[%s2778 + $0x48] sm:$0xf]
    %v2788 = vld [vmem:[%s2778 + $0x50] sm:$0xf]
    %v2789 = vld [vmem:[%s2778 + $0x58] sm:$0xf]
    %v2790 = vld [vmem:[%s2778 + $0x60] sm:$0xf]
    %v2791 = vld [vmem:[%s2778 + $0x68] sm:$0xf]
    %v2792 = vld [vmem:[%s2778 + $0x70] sm:$0xf]
    %v2793 = vld [vmem:[%s2778 + $0x78] sm:$0xf]
    %v2794 = vld [vmem:[%s2778 + $0x80] sm:$0xf]
    %v2795 = vld [vmem:[%s5] sm:$0x3]
    %v2812 = vunpack.c.l.b16 %v2779
    %v2813 = vunpack.c.l.b16 %v2780
    %v2814 = vunpack.c.l.b16 %v2781
    %v2815 = vunpack.c.l.b16 %v2782
    %v2816 = vunpack.c.l.b16 %v2783
    %v2817 = vunpack.c.l.b16 %v2784
    %v2818 = vunpack.c.l.b16 %v2785
    %v2819 = vunpack.c.l.b16 %v2786
    %v2820 = vunpack.c.l.b16 %v2787
    %v2821 = vunpack.c.l.b16 %v2788
    %v2822 = vunpack.c.l.b16 %v2789
    %v2823 = vunpack.c.l.b16 %v2790
    %v2824 = vunpack.c.l.b16 %v2791
    %v2825 = vunpack.c.l.b16 %v2792
    %v2826 = vunpack.c.l.b16 %v2793
    %v2827 = vunpack.c.l.b16 %v2794
    %v2828 = vpack.c.b16 %v2813, %v2812
    %v2829 = vpack.c.b16 %v2815, %v2814
    %v2830 = vpack.c.b16 %v2817, %v2816
    %v2831 = vpack.c.b16 %v2819, %v2818
    %v2832 = vpack.c.b16 %v2821, %v2820
    %v2833 = vpack.c.b16 %v2823, %v2822
    %v2834 = vpack.c.b16 %v2825, %v2824
    %v2835 = vpack.c.b16 %v2827, %v2826
    %vm2836 = vcmask 31744
    %v2838 = vsel %vm2836, %v2828, 0
    %v2841 = vsel %vm2836, %v2829, 0
    %v2844 = vsel %vm2836, %v2830, 0
    %v2847 = vsel %vm2836, %v2831, 0
    %v2850 = vsel %vm2836, %v2832, 0
    %v2853 = vsel %vm2836, %v2833, 0
    %v2856 = vsel %vm2836, %v2834, 0
    %v2859 = vsel %vm2836, %v2835, 0
    %vm2861 = vcmask 1041408
    %v2863 = vsel %vm2861, %v2795, 0
    %2865 = vmatprep.subr.bf16.mxu0 0
    %2866 = vmatpush1.bf16.msra.mxu0 %v2863
    %2867 = vmatprep.subr.bf16.mxu0 0
    %2868 = vmatpush1.bf16.msra.mxu0 0
    %2869 = vmatprep.subr.bf16.mxu0 0
    %2870 = vmatpush1.bf16.msra.mxu0 0
    %2871 = vmatprep.subr.bf16.mxu0 0
    %2872 = vmatpush1.bf16.msra.mxu0 0
    %2873 = vmatprep.subr.bf16.mxu0 0
    %2874 = vmatpush1.bf16.msra.mxu0 0
    %2875 = vmatprep.subr.bf16.mxu0 0
    %2876 = vmatpush1.bf16.msra.mxu0 0
    %2877 = vmatprep.subr.bf16.mxu0 0
    %2878 = vmatpush1.bf16.msra.mxu0 0
    %2879 = vmatprep.subr.bf16.mxu0 0
    %2880 = vmatpush1.bf16.msra.mxu0 0
    %2881 = vmatprep.subr.bf16.mxu0 0
    %2882 = vmatpush1.bf16.msra.mxu0 0
    %2883 = vmatprep.subr.bf16.mxu0 0
    %2884 = vmatpush1.bf16.msra.mxu0 0
    %2885 = vmatprep.subr.bf16.mxu0 0
    %2886 = vmatpush1.bf16.msra.mxu0 0
    %2887 = vmatprep.subr.bf16.mxu0 0
    %2888 = vmatpush1.bf16.msra.mxu0 0
    %2889 = vmatprep.subr.bf16.mxu0 0
    %2890 = vmatpush1.bf16.msra.mxu0 0
    %2891 = vmatprep.subr.bf16.mxu0 0
    %2892 = vmatpush1.bf16.msra.mxu0 0
    %2893 = vmatprep.subr.bf16.mxu0 0
    %2894 = vmatpush1.bf16.msra.mxu0 0
    %2895 = vmatprep.subr.bf16.mxu0 0
    %2896 = vmatpush1.bf16.msra.mxu0 0
    %2897 = vmatprep.mubr.bf16.mxu0 0
    %2898 = vmatmul.mubr.bf16.gmra.mrb[0].mxu0 %v2838
    %v2899 = vpop.f32.mrb[0].mxu0
    %v2900 = vadd.f32 0.0, %v2899
    %v2901 = vpop.f32.mrb[0].mxu0
    %v2902 = vpop.f32.mrb[0].mxu0
    %v2903 = vadd.f32 0.0, %v2902
    %v2904 = vpop.f32.mrb[0].mxu0
    %2905 = vmatprep.mubr.bf16.mxu0 0
    %2906 = vmatmul.mubr.bf16.gmra.mrb[0].mxu0 %v2841
    %v2907 = vpop.f32.mrb[0].mxu0
    %v2908 = vadd.f32 0.0, %v2907
    %v2909 = vpop.f32.mrb[0].mxu0
    %v2910 = vpop.f32.mrb[0].mxu0
    %v2911 = vadd.f32 0.0, %v2910
    %v2912 = vpop.f32.mrb[0].mxu0
    %2913 = vmatprep.mubr.bf16.mxu0 0
    %2914 = vmatmul.mubr.bf16.gmra.mrb[0].mxu0 %v2844
    %v2915 = vpop.f32.mrb[0].mxu0
    %v2916 = vadd.f32 0.0, %v2915
    %v2917 = vpop.f32.mrb[0].mxu0
    %v2918 = vpop.f32.mrb[0].mxu0
    %v2919 = vadd.f32 0.0, %v2918
    %v2920 = vpop.f32.mrb[0].mxu0
    %2921 = vmatprep.mubr.bf16.mxu0 0
    %2922 = vmatmul.mubr.bf16.gmra.mrb[0].mxu0 %v2847
    %v2923 = vpop.f32.mrb[0].mxu0
    %v2924 = vadd.f32 0.0, %v2923
    %v2925 = vpop.f32.mrb[0].mxu0
    %v2926 = vpop.f32.mrb[0].mxu0
    %v2927 = vadd.f32 0.0, %v2926
    %v2928 = vpop.f32.mrb[0].mxu0
    %2929 = vmatprep.mubr.bf16.mxu0 0
    %2930 = vmatmul.mubr.bf16.gmra.mrb[0].mxu0 %v2850
    %v2931 = vpop.f32.mrb[0].mxu0
    %v2932 = vadd.f32 0.0, %v2931
    %v2933 = vpop.f32.mrb[0].mxu0
    %v2934 = vpop.f32.mrb[0].mxu0
    %v2935 = vadd.f32 0.0, %v2934
    %v2936 = vpop.f32.mrb[0].mxu0
    %2937 = vmatprep.mubr.bf16.mxu0 0
    %2938 = vmatmul.mubr.bf16.gmra.mrb[0].mxu0 %v2853
    %v2939 = vpop.f32.mrb[0].mxu0
    %v2940 = vadd.f32 0.0, %v2939
    %v2941 = vpop.f32.mrb[0].mxu0
    %v2942 = vpop.f32.mrb[0].mxu0
    %v2943 = vadd.f32 0.0, %v2942
    %v2944 = vpop.f32.mrb[0].mxu0
    %2945 = vmatprep.mubr.bf16.mxu0 0
    %2946 = vmatmul.mubr.bf16.gmra.mrb[0].mxu0 %v2856
    %v2947 = vpop.f32.mrb[0].mxu0
    %v2948 = vadd.f32 0.0, %v2947
    %v2949 = vpop.f32.mrb[0].mxu0
    %v2950 = vpop.f32.mrb[0].mxu0
    %v2951 = vadd.f32 0.0, %v2950
    %v2952 = vpop.f32.mrb[0].mxu0
    %2953 = vmatprep.mubr.bf16.mxu0 0
    %2954 = vmatmul.mubr.bf16.gmra.mrb[0].mxu0 %v2859
    %v2955 = vpop.f32.mrb[0].mxu0
    %v2956 = vadd.f32 0.0, %v2955
    %v2957 = vpop.f32.mrb[0].mxu0
    %v2958 = vpop.f32.mrb[0].mxu0
    %v2959 = vadd.f32 0.0, %v2958
    %v2960 = vpop.f32.mrb[0].mxu0
    %2961 = vdwg.mxu0
    %v2962 = vld [vmem:[%s6] sm:$0x1]
    %v2964 = vlaneseq
    %v2965 = vshrl.u32 %v2964, 7
    %v2966 = vsub.s32 0, %v2965
    %v2967 = vrot.slane %v2962, %v2966
    %v2969 = vmul.f32 %v2900, %v2967
    %v2970 = vmul.f32 %v2903, %v2967
    %v2971 = vmul.f32 %v2908, %v2967
    %v2972 = vmul.f32 %v2911, %v2967
    %v2973 = vmul.f32 %v2916, %v2967
    %v2974 = vmul.f32 %v2919, %v2967
    %v2975 = vmul.f32 %v2924, %v2967
    %v2976 = vmul.f32 %v2927, %v2967
    %v2977 = vmul.f32 %v2932, %v2967
    %v2978 = vmul.f32 %v2935, %v2967
    %v2979 = vmul.f32 %v2940, %v2967
    %v2980 = vmul.f32 %v2943, %v2967
    %v2981 = vmul.f32 %v2948, %v2967
    %v2982 = vmul.f32 %v2951, %v2967
    %v2983 = vmul.f32 %v2956, %v2967
    %v2984 = vmul.f32 %v2959, %v2967
    %v2985 = vld [vmem:[%s7] sm:$0x1]
    %v2987 = vlaneseq
    %v2988 = vshrl.u32 %v2987, 7
    %v2989 = vsub.s32 0, %v2988
    %v2990 = vrot.slane %v2985, %v2989
    %v2992 = vadd.f32 %v2969, %v2990
    %v2993 = vadd.f32 %v2970, %v2990
    %v2994 = vadd.f32 %v2971, %v2990
    %v2995 = vadd.f32 %v2972, %v2990
    %v2996 = vadd.f32 %v2973, %v2990
    %v2997 = vadd.f32 %v2974, %v2990
    %v2998 = vadd.f32 %v2975, %v2990
    %v2999 = vadd.f32 %v2976, %v2990
    %v3000 = vadd.f32 %v2977, %v2990
    %v3001 = vadd.f32 %v2978, %v2990
    %v3002 = vadd.f32 %v2979, %v2990
    %v3003 = vadd.f32 %v2980, %v2990
    %v3004 = vadd.f32 %v2981, %v2990
    %v3005 = vadd.f32 %v2982, %v2990
    %v3006 = vadd.f32 %v2983, %v2990
    %v3007 = vadd.f32 %v2984, %v2990
    %v3008 = vadd.f32 %v2761, %v2992
    %v3009 = vadd.f32 %v2762, %v2993
    %v3010 = vadd.f32 %v2763, %v2994
    %v3011 = vadd.f32 %v2764, %v2995
    %v3012 = vadd.f32 %v2765, %v2996
    %v3013 = vadd.f32 %v2766, %v2997
    %v3014 = vadd.f32 %v2767, %v2998
    %v3015 = vadd.f32 %v2768, %v2999
    %v3016 = vadd.f32 %v2769, %v3000
    %v3017 = vadd.f32 %v2770, %v3001
    %v3018 = vadd.f32 %v2771, %v3002
    %v3019 = vadd.f32 %v2772, %v3003
    %v3020 = vadd.f32 %v2773, %v3004
    %v3021 = vadd.f32 %v2774, %v3005
    %v3022 = vadd.f32 %v2775, %v3006
    %v3023 = vadd.f32 %v2776, %v3007
    %v3024 = vmax.f32 %v3008, 0.0
    %v3025 = vmax.f32 %v3009, 0.0
    %v3026 = vmax.f32 %v3010, 0.0
    %v3027 = vmax.f32 %v3011, 0.0
    %v3028 = vmax.f32 %v3012, 0.0
    %v3029 = vmax.f32 %v3013, 0.0
    %v3030 = vmax.f32 %v3014, 0.0
    %v3031 = vmax.f32 %v3015, 0.0
    %v3032 = vmax.f32 %v3016, 0.0
    %v3033 = vmax.f32 %v3017, 0.0
    %v3034 = vmax.f32 %v3018, 0.0
    %v3035 = vmax.f32 %v3019, 0.0
    %v3036 = vmax.f32 %v3020, 0.0
    %v3037 = vmax.f32 %v3021, 0.0
    %v3038 = vmax.f32 %v3022, 0.0
    %v3039 = vmax.f32 %v3023, 0.0
    %v3040 = vpack.c.bf16 %v3025, %v3024
    %v3041 = vpack.c.bf16 %v3027, %v3026
    %v3042 = vpack.c.bf16 %v3029, %v3028
    %v3043 = vpack.c.bf16 %v3031, %v3030
    %v3044 = vpack.c.bf16 %v3033, %v3032
    %v3045 = vpack.c.bf16 %v3035, %v3034
    %v3046 = vpack.c.bf16 %v3037, %v3036
    %v3047 = vpack.c.bf16 %v3039, %v3038
    %v3056 = vunpack.c.l.b16 %v3040
    %v3057 = vunpack.c.h.b16 %v3040
    %v3058 = vunpack.c.l.b16 %v3041
    %v3059 = vunpack.c.h.b16 %v3041
    %v3060 = vunpack.c.l.b16 %v3042
    %v3061 = vunpack.c.h.b16 %v3042
    %v3062 = vunpack.c.l.b16 %v3043
    %v3063 = vunpack.c.h.b16 %v3043
    %v3064 = vunpack.c.l.b16 %v3044
    %v3065 = vunpack.c.h.b16 %v3044
    %v3066 = vunpack.c.l.b16 %v3045
    %v3067 = vunpack.c.h.b16 %v3045
    %v3068 = vunpack.c.l.b16 %v3046
    %v3069 = vunpack.c.h.b16 %v3046
    %v3070 = vunpack.c.l.b16 %v3047
    %v3071 = vunpack.c.h.b16 %v3047
    %v3072 = vpack.c.b16 %v3056, %v3056
    %v3073 = vpack.c.b16 %v3057, %v3057
    %v3074 = vpack.c.b16 %v3058, %v3058
    %v3075 = vpack.c.b16 %v3059, %v3059
    %v3076 = vpack.c.b16 %v3060, %v3060
    %v3077 = vpack.c.b16 %v3061, %v3061
    %v3078 = vpack.c.b16 %v3062, %v3062
    %v3079 = vpack.c.b16 %v3063, %v3063
    %v3080 = vpack.c.b16 %v3064, %v3064
    %v3081 = vpack.c.b16 %v3065, %v3065
    %v3082 = vpack.c.b16 %v3066, %v3066
    %v3083 = vpack.c.b16 %v3067, %v3067
    %v3084 = vpack.c.b16 %v3068, %v3068
    %v3085 = vpack.c.b16 %v3069, %v3069
    %v3086 = vpack.c.b16 %v3070, %v3070
    %v3087 = vpack.c.b16 %v3071, %v3071
    %3104 = vst [vmem:[%s8] sm:$0xf] %v3072
    %3105 = vst [vmem:[%s8 + $0x4] sm:$0xf] %v3073
    %3106 = vst [vmem:[%s8 + $0x8] sm:$0xf] %v3074
    %3107 = vst [vmem:[%s8 + $0xc] sm:$0xf] %v3075
    %3108 = vst [vmem:[%s8 + $0x10] sm:$0xf] %v3076
    %3109 = vst [vmem:[%s8 + $0x14] sm:$0xf] %v3077
    %3110 = vst [vmem:[%s8 + $0x18] sm:$0xf] %v3078
    %3111 = vst [vmem:[%s8 + $0x1c] sm:$0xf] %v3079
    %3112 = vst [vmem:[%s8 + $0x20] sm:$0xf] %v3080
    %3113 = vst [vmem:[%s8 + $0x24] sm:$0xf] %v3081
    %3114 = vst [vmem:[%s8 + $0x28] sm:$0xf] %v3082
    %3115 = vst [vmem:[%s8 + $0x2c] sm:$0xf] %v3083
    %3116 = vst [vmem:[%s8 + $0x30] sm:$0xf] %v3084
    %3117 = vst [vmem:[%s8 + $0x34] sm:$0xf] %v3085
    %3118 = vst [vmem:[%s8 + $0x38] sm:$0xf] %v3086
    %3119 = vst [vmem:[%s8 + $0x3c] sm:$0xf] %v3087
    // Predicated region
    $region75: #{basic_block_forward.3} parent=1 // pred_check
      _
    $region76: #{basic_block_forward.3} parent=1 // pred_check_branch
      %3121 = sbr.rel (0) target = $region78
    $region77: #{basic_block_forward.3} parent=1 // pred_region
      _
    $region78: #{basic_block_forward.3} parent=1 // pred_fallthru
      _
    // Predicated region
    $region79: #{basic_block_forward.3} parent=1 // pred_check
      _
    $region80: #{basic_block_forward.3} parent=1 // pred_check_branch
      %3123 = sbr.rel (0) target = $region82
    $region81: #{basic_block_forward.3} parent=1 // pred_region
      _
    $region82: #{basic_block_forward.3} parent=1 // pred_fallthru
      _

</llo_original>
